<compile_context>
chip_gen: v7x
topology: tpu7x:2x2x1
jax: 0.10.0
libtpu: 0.0.40
codegen_flags: <defaults>
</compile_context>

<pallas_src>
import numpy as np
import jax
import jax.numpy as jnp
from jax.experimental import pallas as pl
from jax.experimental.pallas import tpu as pltpu

LATENT_DIM = 100
LATENT_PAD = 128            # pad K of the first matmul to a lane-aligned 128
IMG_SHAPE = (1, 28, 28)
IMG_FLAT = int(np.prod(IMG_SHAPE))   # 784
OUT_PAD = 896               # 784 padded up to a multiple of 128 (lane-dense store)
BN_EPS = 0.8                # nn.BatchNorm1d(out_feat, 0.8) -> eps = 0.8
NEG_SLOPE = 0.2             # LeakyReLU(0.2)

# Rows of the packed per-feature vector buffer (16 x 1024 f32):
#   0: b1(128)  1: b2(256)  2: g2(256)  3: be2(256)
#   4: b3(512)  5: g3(512)  6: be3(512)
#   7: b4(1024) 8: g4(1024) 9: be4(1024)
#  10: b5(784, zero-padded to 896)
VEC_ROWS = 16


def _leaky_relu(x):
    return jnp.where(x > 0, x, NEG_SLOPE * x)


def generator_kernel(z_ref, vec_ref,
                     w1_hbm, w2_hbm, w3_hbm, w4_hbm, w5_hbm,
                     out_ref,
                     w1_v, w2_v, w3_v, w4_v, w5_v, dma_sem):
    # Issue ALL weight HBM -> VMEM streams at kernel entry, in the order the
    # compute consumes them (w1 first so the first matmul is barely blocked;
    # the big w4/w5 tail overlaps layers 1-3 and the BatchNorm reductions).
    copies = []
    for i, (src, dst) in enumerate(((w1_hbm, w1_v), (w2_hbm, w2_v),
                                    (w3_hbm, w3_v), (w4_hbm, w4_v),
                                    (w5_hbm, w5_v))):
        cp = pltpu.make_async_copy(src, dst, dma_sem.at[i])
        cp.start()
        copies.append(cp)

    inv_b = jnp.float32(1.0 / z_ref.shape[0])

    def bn_lrelu(h, gamma, beta):
        # Training-mode BatchNorm1d: batch mean + biased batch variance,
        # folded into a single per-feature scale/shift (one reduction pass).
        s1 = jnp.sum(h, axis=0, keepdims=True)
        s2 = jnp.sum(h * h, axis=0, keepdims=True)
        mean = s1 * inv_b
        var = jnp.maximum(s2 * inv_b - mean * mean, 0.0)   # guard cancellation
        scale = gamma * jax.lax.rsqrt(var + BN_EPS)
        shift = beta - mean * scale
        return _leaky_relu(h * scale + shift)

    # Static, lane-aligned views into the single packed vector buffer.
    b1 = vec_ref[0:1, 0:128]
    b2 = vec_ref[1:2, 0:256]
    g2 = vec_ref[2:3, 0:256]
    be2 = vec_ref[3:4, 0:256]
    b3 = vec_ref[4:5, 0:512]
    g3 = vec_ref[5:6, 0:512]
    be3 = vec_ref[6:7, 0:512]
    b4 = vec_ref[7:8, :]
    g4 = vec_ref[8:9, :]
    be4 = vec_ref[9:10, :]
    b5 = vec_ref[10:11, 0:OUT_PAD]

    # Block 1: Linear(128pad -> 128) -> LeakyReLU (no BatchNorm)
    copies[0].wait()
    h = jnp.dot(z_ref[...].astype(jnp.bfloat16), w1_v[...],
                preferred_element_type=jnp.float32) + b1
    h = _leaky_relu(h)

    # Block 2: Linear(128 -> 256) -> BN -> LeakyReLU
    copies[1].wait()
    h = jnp.dot(h.astype(jnp.bfloat16), w2_v[...],
                preferred_element_type=jnp.float32) + b2
    h = bn_lrelu(h, g2, be2)

    # Block 3: Linear(256 -> 512) -> BN -> LeakyReLU
    copies[2].wait()
    h = jnp.dot(h.astype(jnp.bfloat16), w3_v[...],
                preferred_element_type=jnp.float32) + b3
    h = bn_lrelu(h, g3, be3)

    # Block 4: Linear(512 -> 1024) -> BN -> LeakyReLU
    copies[3].wait()
    h = jnp.dot(h.astype(jnp.bfloat16), w4_v[...],
                preferred_element_type=jnp.float32) + b4
    h = bn_lrelu(h, g4, be4)

    # Final: Linear(1024 -> 784, padded to 896) -> Tanh
    copies[4].wait()
    h = jnp.dot(h.astype(jnp.bfloat16), w5_v[...],
                preferred_element_type=jnp.float32) + b5
    out_ref[...] = jnp.tanh(h)


def init_params(key):
    """Deterministic f32 parameters. Linear weights stored (in, out)."""
    dims = [LATENT_DIM, 128, 256, 512, 1024, IMG_FLAT]
    params = {}
    keys = jax.random.split(key, 10)
    ki = 0
    for li in range(5):
        fan_in, fan_out = dims[li], dims[li + 1]
        bound = 1.0 / np.sqrt(fan_in)
        params[f"w{li+1}"] = jax.random.uniform(
            keys[ki], (fan_in, fan_out), jnp.float32, -bound, bound); ki += 1
        params[f"b{li+1}"] = jax.random.uniform(
            keys[ki], (1, fan_out), jnp.float32, -bound, bound); ki += 1
    # BatchNorm affine params (layers 2, 3, 4): gamma=1, beta=0 (torch default)
    for li, n in [(2, 256), (3, 512), (4, 1024)]:
        params[f"g{li}"] = jnp.ones((1, n), jnp.float32)
        params[f"be{li}"] = jnp.zeros((1, n), jnp.float32)
    return params


def prepare_params(params):
    """One-time host prep: pad + cast weights to bf16, pack all 1-D vectors.

    Call ONCE and cache the result next to the params; `generator_forward`
    then streams only the prepped bf16 weights (no per-call recast traffic).
    """
    w1 = (jnp.zeros((LATENT_PAD, 128), jnp.float32)
          .at[:LATENT_DIM, :].set(params["w1"])).astype(jnp.bfloat16)
    w5 = (jnp.zeros((1024, OUT_PAD), jnp.float32)
          .at[:, :IMG_FLAT].set(params["w5"])).astype(jnp.bfloat16)

    vec = jnp.zeros((VEC_ROWS, 1024), jnp.float32)
    rows = [
        (0, params["b1"], 128),
        (1, params["b2"], 256), (2, params["g2"], 256), (3, params["be2"], 256),
        (4, params["b3"], 512), (5, params["g3"], 512), (6, params["be3"], 512),
        (7, params["b4"], 1024), (8, params["g4"], 1024), (9, params["be4"], 1024),
        (10, params["b5"], IMG_FLAT),
    ]
    for r, arr, n in rows:
        vec = vec.at[r, :n].set(arr.reshape(-1))

    prepped = {
        "vec": vec,
        "w1": w1,
        "w2": params["w2"].astype(jnp.bfloat16),
        "w3": params["w3"].astype(jnp.bfloat16),
        "w4": params["w4"].astype(jnp.bfloat16),
        "w5": w5,
    }
    return jax.tree_util.tree_map(jnp.asarray, prepped)


@jax.jit
def generator_forward(z, prepped):
    B = z.shape[0]
    # Only per-call host work: zero-pad the latent to 128 lanes (fused by XLA).
    z_pad = jnp.zeros((B, LATENT_PAD), jnp.float32).at[:, :LATENT_DIM].set(z)

    vmem = pl.BlockSpec(memory_space=pltpu.MemorySpace.VMEM)
    hbm = pl.BlockSpec(memory_space=pl.ANY)   # weights stay in HBM; DMA'd in-kernel

    flat = pl.pallas_call(
        generator_kernel,
        out_shape=jax.ShapeDtypeStruct((B, OUT_PAD), jnp.float32),
        in_specs=[vmem, vmem, hbm, hbm, hbm, hbm, hbm],
        out_specs=vmem,
        scratch_shapes=[
            pltpu.VMEM((LATENT_PAD, 128), jnp.bfloat16),   # w1 landing buffer
            pltpu.VMEM((128, 256), jnp.bfloat16),          # w2
            pltpu.VMEM((256, 512), jnp.bfloat16),          # w3
            pltpu.VMEM((512, 1024), jnp.bfloat16),         # w4
            pltpu.VMEM((1024, OUT_PAD), jnp.bfloat16),     # w5
            pltpu.SemaphoreType.DMA((5,)),
        ],
        # Single grid point, single core: do NOT shard over megacore — each
        # core would re-stream the shared weights on this bandwidth-bound op.
        compiler_params=pltpu.CompilerParams(vmem_limit_bytes=16 << 20),
    )(z_pad, prepped["vec"], prepped["w1"], prepped["w2"], prepped["w3"],
      prepped["w4"], prepped["w5"])

    # Drop lane padding; NCHW output, matching PyTorch img.view(B, *img_shape)
    return flat[:, :IMG_FLAT].reshape(B, *IMG_SHAPE)


def generator_reference(z, params):
    """Plain-JAX reference matched to the kernel's bf16-operand matmuls.

    Note: error vs. a true f32 PyTorch forward is somewhat larger than vs.
    this bf16-operand reference; the output is tanh-bounded so 1e-2 abs is
    representative either way.
    """
    def mm(h, w, b):
        hb = h.astype(jnp.bfloat16).astype(jnp.float32)
        wb = w.astype(jnp.bfloat16).astype(jnp.float32)
        return hb @ wb + b

    h = mm(z, params["w1"], params["b1"])
    h = jnp.where(h > 0, h, NEG_SLOPE * h)
    for li in (2, 3, 4):
        h = mm(h, params[f"w{li}"], params[f"b{li}"])
        mean = jnp.mean(h, axis=0, keepdims=True)
        var = jnp.mean((h - mean) ** 2, axis=0, keepdims=True)
        h = (h - mean) / jnp.sqrt(var + BN_EPS) * params[f"g{li}"] + params[f"be{li}"]
        h = jnp.where(h > 0, h, NEG_SLOPE * h)
    h = mm(h, params["w5"], params["b5"])
    return jnp.tanh(h).reshape(z.shape[0], *IMG_SHAPE)


if __name__ == "__main__":
    key = jax.random.PRNGKey(0)
    pkey, zkey = jax.random.split(key)
    params = init_params(pkey)
    prepped = prepare_params(params)   # one-time: pad + bf16-cast + pack

    B = 8  # batch size (>1 needed for training-mode BatchNorm statistics)
    z = jax.random.normal(zkey, (B, LATENT_DIM), jnp.float32)

    img = jax.block_until_ready(generator_forward(z, prepped))
    assert img.shape == (B, *IMG_SHAPE), img.shape

    ref = jax.block_until_ready(generator_reference(z, params))
    # bf16 weights/operands -> tolerance loosened accordingly (output is tanh-bounded).
    np.testing.assert_allclose(np.asarray(img), np.asarray(ref), atol=1e-2, rtol=1e-2)

    print("KERNEL_OK")
</pallas_src>

<mosaic_0001>
module attributes {stable_mosaic.version = 11 : i64} {
  func.func @generator_kernel(%arg0: memref<8x128xf32, #tpu.memory_space<vmem>>, %arg1: memref<16x1024xf32, #tpu.memory_space<vmem>>, %arg2: memref<128x128xbf16, #tpu.memory_space<any>>, %arg3: memref<128x256xbf16, #tpu.memory_space<any>>, %arg4: memref<256x512xbf16, #tpu.memory_space<any>>, %arg5: memref<512x1024xbf16, #tpu.memory_space<any>>, %arg6: memref<1024x896xbf16, #tpu.memory_space<any>>, %arg7: memref<8x896xf32, #tpu.memory_space<vmem>>, %arg8: memref<128x128xbf16, #tpu.memory_space<vmem>>, %arg9: memref<128x256xbf16, #tpu.memory_space<vmem>>, %arg10: memref<256x512xbf16, #tpu.memory_space<vmem>>, %arg11: memref<512x1024xbf16, #tpu.memory_space<vmem>>, %arg12: memref<1024x896xbf16, #tpu.memory_space<vmem>>, %arg13: memref<5x!tpu.dma_semaphore, #tpu.memory_space<semaphore_mem>>) attributes {dimension_semantics = [], scalar_prefetch = 0 : i64, scratch_operands = 6 : i64, tpu.core_type = #tpu.core_type<tc>} {
    %c0_i32 = arith.constant 0 : i32
    %0 = tpu.memref_slice %arg13[%c0_i32] : memref<5x!tpu.dma_semaphore, #tpu.memory_space<semaphore_mem>> -> memref<1x!tpu.dma_semaphore, #tpu.memory_space<semaphore_mem>>
    %1 = tpu.memref_squeeze %0 : memref<1x!tpu.dma_semaphore, #tpu.memory_space<semaphore_mem>> -> memref<!tpu.dma_semaphore, #tpu.memory_space<semaphore_mem>>
    tpu.enqueue_dma source(%arg2 : memref<128x128xbf16, #tpu.memory_space<any>>) target(%arg8 : memref<128x128xbf16, #tpu.memory_space<vmem>>) target_semaphore(%1 : memref<!tpu.dma_semaphore, #tpu.memory_space<semaphore_mem>>)
    %c1_i32 = arith.constant 1 : i32
    %2 = tpu.memref_slice %arg13[%c1_i32] : memref<5x!tpu.dma_semaphore, #tpu.memory_space<semaphore_mem>> -> memref<1x!tpu.dma_semaphore, #tpu.memory_space<semaphore_mem>>
    %3 = tpu.memref_squeeze %2 : memref<1x!tpu.dma_semaphore, #tpu.memory_space<semaphore_mem>> -> memref<!tpu.dma_semaphore, #tpu.memory_space<semaphore_mem>>
    tpu.enqueue_dma source(%arg3 : memref<128x256xbf16, #tpu.memory_space<any>>) target(%arg9 : memref<128x256xbf16, #tpu.memory_space<vmem>>) target_semaphore(%3 : memref<!tpu.dma_semaphore, #tpu.memory_space<semaphore_mem>>)
    %c2_i32 = arith.constant 2 : i32
    %4 = tpu.memref_slice %arg13[%c2_i32] : memref<5x!tpu.dma_semaphore, #tpu.memory_space<semaphore_mem>> -> memref<1x!tpu.dma_semaphore, #tpu.memory_space<semaphore_mem>>
    %5 = tpu.memref_squeeze %4 : memref<1x!tpu.dma_semaphore, #tpu.memory_space<semaphore_mem>> -> memref<!tpu.dma_semaphore, #tpu.memory_space<semaphore_mem>>
    tpu.enqueue_dma source(%arg4 : memref<256x512xbf16, #tpu.memory_space<any>>) target(%arg10 : memref<256x512xbf16, #tpu.memory_space<vmem>>) target_semaphore(%5 : memref<!tpu.dma_semaphore, #tpu.memory_space<semaphore_mem>>)
    %c3_i32 = arith.constant 3 : i32
    %6 = tpu.memref_slice %arg13[%c3_i32] : memref<5x!tpu.dma_semaphore, #tpu.memory_space<semaphore_mem>> -> memref<1x!tpu.dma_semaphore, #tpu.memory_space<semaphore_mem>>
    %7 = tpu.memref_squeeze %6 : memref<1x!tpu.dma_semaphore, #tpu.memory_space<semaphore_mem>> -> memref<!tpu.dma_semaphore, #tpu.memory_space<semaphore_mem>>
    tpu.enqueue_dma source(%arg5 : memref<512x1024xbf16, #tpu.memory_space<any>>) target(%arg11 : memref<512x1024xbf16, #tpu.memory_space<vmem>>) target_semaphore(%7 : memref<!tpu.dma_semaphore, #tpu.memory_space<semaphore_mem>>)
    %c4_i32 = arith.constant 4 : i32
    %8 = tpu.memref_slice %arg13[%c4_i32] : memref<5x!tpu.dma_semaphore, #tpu.memory_space<semaphore_mem>> -> memref<1x!tpu.dma_semaphore, #tpu.memory_space<semaphore_mem>>
    %9 = tpu.memref_squeeze %8 : memref<1x!tpu.dma_semaphore, #tpu.memory_space<semaphore_mem>> -> memref<!tpu.dma_semaphore, #tpu.memory_space<semaphore_mem>>
    tpu.enqueue_dma source(%arg6 : memref<1024x896xbf16, #tpu.memory_space<any>>) target(%arg12 : memref<1024x896xbf16, #tpu.memory_space<vmem>>) target_semaphore(%9 : memref<!tpu.dma_semaphore, #tpu.memory_space<semaphore_mem>>)
    %c0 = arith.constant 0 : index
    %c0_0 = arith.constant 0 : index
    %10 = vector.load %arg1[%c0, %c0_0] : memref<16x1024xf32, #tpu.memory_space<vmem>>, vector<1x128xf32>
    %c1 = arith.constant 1 : index
    %c0_1 = arith.constant 0 : index
    %11 = vector.load %arg1[%c1, %c0_1] : memref<16x1024xf32, #tpu.memory_space<vmem>>, vector<1x256xf32>
    %c2 = arith.constant 2 : index
    %c0_2 = arith.constant 0 : index
    %12 = vector.load %arg1[%c2, %c0_2] : memref<16x1024xf32, #tpu.memory_space<vmem>>, vector<1x256xf32>
    %c3 = arith.constant 3 : index
    %c0_3 = arith.constant 0 : index
    %13 = vector.load %arg1[%c3, %c0_3] : memref<16x1024xf32, #tpu.memory_space<vmem>>, vector<1x256xf32>
    %c4 = arith.constant 4 : index
    %c0_4 = arith.constant 0 : index
    %14 = vector.load %arg1[%c4, %c0_4] : memref<16x1024xf32, #tpu.memory_space<vmem>>, vector<1x512xf32>
    %c5 = arith.constant 5 : index
    %c0_5 = arith.constant 0 : index
    %15 = vector.load %arg1[%c5, %c0_5] : memref<16x1024xf32, #tpu.memory_space<vmem>>, vector<1x512xf32>
    %c6 = arith.constant 6 : index
    %c0_6 = arith.constant 0 : index
    %16 = vector.load %arg1[%c6, %c0_6] : memref<16x1024xf32, #tpu.memory_space<vmem>>, vector<1x512xf32>
    %c7 = arith.constant 7 : index
    %c0_7 = arith.constant 0 : index
    %17 = vector.load %arg1[%c7, %c0_7] : memref<16x1024xf32, #tpu.memory_space<vmem>>, vector<1x1024xf32>
    %c8 = arith.constant 8 : index
    %c0_8 = arith.constant 0 : index
    %18 = vector.load %arg1[%c8, %c0_8] : memref<16x1024xf32, #tpu.memory_space<vmem>>, vector<1x1024xf32>
    %c9 = arith.constant 9 : index
    %c0_9 = arith.constant 0 : index
    %19 = vector.load %arg1[%c9, %c0_9] : memref<16x1024xf32, #tpu.memory_space<vmem>>, vector<1x1024xf32>
    %c10 = arith.constant 10 : index
    %c0_10 = arith.constant 0 : index
    %20 = vector.load %arg1[%c10, %c0_10] : memref<16x1024xf32, #tpu.memory_space<vmem>>, vector<1x896xf32>
    %c0_i32_11 = arith.constant 0 : i32
    %21 = tpu.memref_slice %arg13[%c0_i32_11] : memref<5x!tpu.dma_semaphore, #tpu.memory_space<semaphore_mem>> -> memref<1x!tpu.dma_semaphore, #tpu.memory_space<semaphore_mem>>
    %22 = tpu.memref_squeeze %21 : memref<1x!tpu.dma_semaphore, #tpu.memory_space<semaphore_mem>> -> memref<!tpu.dma_semaphore, #tpu.memory_space<semaphore_mem>>
    tpu.wait_dma2 semaphore(%22 : memref<!tpu.dma_semaphore, #tpu.memory_space<semaphore_mem>>) src(%arg2 : memref<128x128xbf16, #tpu.memory_space<any>>) dst(%arg8 : memref<128x128xbf16, #tpu.memory_space<vmem>>)
    %c0_12 = arith.constant 0 : index
    %c0_13 = arith.constant 0 : index
    %23 = vector.load %arg0[%c0_12, %c0_13] : memref<8x128xf32, #tpu.memory_space<vmem>>, vector<8x128xf32>
    %24 = arith.truncf %23 : vector<8x128xf32> to vector<8x128xbf16>
    %c0_14 = arith.constant 0 : index
    %c0_15 = arith.constant 0 : index
    %25 = vector.load %arg8[%c0_14, %c0_15] : memref<128x128xbf16, #tpu.memory_space<vmem>>, vector<128x128xbf16>
    %cst = arith.constant dense<0.000000e+00> : vector<8x128xf32>
    %26 = tpu.matmul %24, %25, %cst {dimension_numbers = #tpu.dot_dimension_numbers<[1], [0], [0], [1], [0, 0, 1, 1], [], []>} : vector<8x128xbf16>, vector<128x128xbf16>, vector<8x128xf32> -> vector<8x128xf32>
    %27 = vector.broadcast %10 : vector<1x128xf32> to vector<8x128xf32>
    %28 = arith.addf %26, %27 : vector<8x128xf32>
    %cst_16 = arith.constant 0.000000e+00 : f32
    %29 = vector.broadcast %cst_16 : f32 to vector<8x128xf32>
    %30 = arith.cmpf ogt, %28, %29 : vector<8x128xf32>
    %cst_17 = arith.constant 2.000000e-01 : f32
    %31 = vector.broadcast %cst_17 : f32 to vector<8x128xf32>
    %32 = arith.mulf %31, %28 : vector<8x128xf32>
    %33 = arith.select %30, %28, %32 : vector<8x128xi1>, vector<8x128xf32>
    %c1_i32_18 = arith.constant 1 : i32
    %34 = tpu.memref_slice %arg13[%c1_i32_18] : memref<5x!tpu.dma_semaphore, #tpu.memory_space<semaphore_mem>> -> memref<1x!tpu.dma_semaphore, #tpu.memory_space<semaphore_mem>>
    %35 = tpu.memref_squeeze %34 : memref<1x!tpu.dma_semaphore, #tpu.memory_space<semaphore_mem>> -> memref<!tpu.dma_semaphore, #tpu.memory_space<semaphore_mem>>
    tpu.wait_dma2 semaphore(%35 : memref<!tpu.dma_semaphore, #tpu.memory_space<semaphore_mem>>) src(%arg3 : memref<128x256xbf16, #tpu.memory_space<any>>) dst(%arg9 : memref<128x256xbf16, #tpu.memory_space<vmem>>)
    %36 = arith.truncf %33 : vector<8x128xf32> to vector<8x128xbf16>
    %c0_19 = arith.constant 0 : index
    %c0_20 = arith.constant 0 : index
    %37 = vector.load %arg9[%c0_19, %c0_20] : memref<128x256xbf16, #tpu.memory_space<vmem>>, vector<128x256xbf16>
    %cst_21 = arith.constant dense<0.000000e+00> : vector<8x256xf32>
    %38 = tpu.matmul %36, %37, %cst_21 {dimension_numbers = #tpu.dot_dimension_numbers<[1], [0], [0], [1], [0, 0, 1, 1], [], []>} : vector<8x128xbf16>, vector<128x256xbf16>, vector<8x256xf32> -> vector<8x256xf32>
    %39 = vector.broadcast %11 : vector<1x256xf32> to vector<8x256xf32>
    %40 = arith.addf %38, %39 : vector<8x256xf32>
    %cst_22 = arith.constant dense<0.000000e+00> : vector<256xf32>
    %41 = vector.multi_reduction <add>, %40, %cst_22 [0] : vector<8x256xf32> to vector<256xf32>
    %42 = vector.shape_cast %41 : vector<256xf32> to vector<1x256xf32>
    %43 = arith.mulf %40, %40 : vector<8x256xf32>
    %cst_23 = arith.constant dense<0.000000e+00> : vector<256xf32>
    %44 = vector.multi_reduction <add>, %43, %cst_23 [0] : vector<8x256xf32> to vector<256xf32>
    %45 = vector.shape_cast %44 : vector<256xf32> to vector<1x256xf32>
    %cst_24 = arith.constant 1.250000e-01 : f32
    %46 = vector.broadcast %cst_24 : f32 to vector<1x256xf32>
    %47 = arith.mulf %42, %46 : vector<1x256xf32>
    %cst_25 = arith.constant 1.250000e-01 : f32
    %48 = vector.broadcast %cst_25 : f32 to vector<1x256xf32>
    %49 = arith.mulf %45, %48 : vector<1x256xf32>
    %50 = arith.mulf %47, %47 : vector<1x256xf32>
    %51 = arith.subf %49, %50 : vector<1x256xf32>
    %cst_26 = arith.constant 0.000000e+00 : f32
    %52 = vector.broadcast %cst_26 : f32 to vector<1x256xf32>
    %53 = arith.maximumf %51, %52 : vector<1x256xf32>
    %cst_27 = arith.constant 8.000000e-01 : f32
    %54 = vector.broadcast %cst_27 : f32 to vector<1x256xf32>
    %55 = arith.addf %53, %54 : vector<1x256xf32>
    %56 = math.rsqrt %55 : vector<1x256xf32>
    %57 = arith.mulf %12, %56 : vector<1x256xf32>
    %58 = arith.mulf %47, %57 : vector<1x256xf32>
    %59 = arith.subf %13, %58 : vector<1x256xf32>
    %60 = vector.broadcast %57 : vector<1x256xf32> to vector<8x256xf32>
    %61 = arith.mulf %40, %60 : vector<8x256xf32>
    %62 = vector.broadcast %59 : vector<1x256xf32> to vector<8x256xf32>
    %63 = arith.addf %61, %62 : vector<8x256xf32>
    %cst_28 = arith.constant 0.000000e+00 : f32
    %64 = vector.broadcast %cst_28 : f32 to vector<8x256xf32>
    %65 = arith.cmpf ogt, %63, %64 : vector<8x256xf32>
    %cst_29 = arith.constant 2.000000e-01 : f32
    %66 = vector.broadcast %cst_29 : f32 to vector<8x256xf32>
    %67 = arith.mulf %66, %63 : vector<8x256xf32>
    %68 = arith.select %65, %63, %67 : vector<8x256xi1>, vector<8x256xf32>
    %c2_i32_30 = arith.constant 2 : i32
    %69 = tpu.memref_slice %arg13[%c2_i32_30] : memref<5x!tpu.dma_semaphore, #tpu.memory_space<semaphore_mem>> -> memref<1x!tpu.dma_semaphore, #tpu.memory_space<semaphore_mem>>
    %70 = tpu.memref_squeeze %69 : memref<1x!tpu.dma_semaphore, #tpu.memory_space<semaphore_mem>> -> memref<!tpu.dma_semaphore, #tpu.memory_space<semaphore_mem>>
    tpu.wait_dma2 semaphore(%70 : memref<!tpu.dma_semaphore, #tpu.memory_space<semaphore_mem>>) src(%arg4 : memref<256x512xbf16, #tpu.memory_space<any>>) dst(%arg10 : memref<256x512xbf16, #tpu.memory_space<vmem>>)
    %71 = arith.truncf %68 : vector<8x256xf32> to vector<8x256xbf16>
    %c0_31 = arith.constant 0 : index
    %c0_32 = arith.constant 0 : index
    %72 = vector.load %arg10[%c0_31, %c0_32] : memref<256x512xbf16, #tpu.memory_space<vmem>>, vector<256x512xbf16>
    %cst_33 = arith.constant dense<0.000000e+00> : vector<8x512xf32>
    %73 = tpu.matmul %71, %72, %cst_33 {dimension_numbers = #tpu.dot_dimension_numbers<[1], [0], [0], [1], [0, 0, 1, 1], [], []>} : vector<8x256xbf16>, vector<256x512xbf16>, vector<8x512xf32> -> vector<8x512xf32>
    %74 = vector.broadcast %14 : vector<1x512xf32> to vector<8x512xf32>
    %75 = arith.addf %73, %74 : vector<8x512xf32>
    %cst_34 = arith.constant dense<0.000000e+00> : vector<512xf32>
    %76 = vector.multi_reduction <add>, %75, %cst_34 [0] : vector<8x512xf32> to vector<512xf32>
    %77 = vector.shape_cast %76 : vector<512xf32> to vector<1x512xf32>
    %78 = arith.mulf %75, %75 : vector<8x512xf32>
    %cst_35 = arith.constant dense<0.000000e+00> : vector<512xf32>
    %79 = vector.multi_reduction <add>, %78, %cst_35 [0] : vector<8x512xf32> to vector<512xf32>
    %80 = vector.shape_cast %79 : vector<512xf32> to vector<1x512xf32>
    %cst_36 = arith.constant 1.250000e-01 : f32
    %81 = vector.broadcast %cst_36 : f32 to vector<1x512xf32>
    %82 = arith.mulf %77, %81 : vector<1x512xf32>
    %cst_37 = arith.constant 1.250000e-01 : f32
    %83 = vector.broadcast %cst_37 : f32 to vector<1x512xf32>
    %84 = arith.mulf %80, %83 : vector<1x512xf32>
    %85 = arith.mulf %82, %82 : vector<1x512xf32>
    %86 = arith.subf %84, %85 : vector<1x512xf32>
    %cst_38 = arith.constant 0.000000e+00 : f32
    %87 = vector.broadcast %cst_38 : f32 to vector<1x512xf32>
    %88 = arith.maximumf %86, %87 : vector<1x512xf32>
    %cst_39 = arith.constant 8.000000e-01 : f32
    %89 = vector.broadcast %cst_39 : f32 to vector<1x512xf32>
    %90 = arith.addf %88, %89 : vector<1x512xf32>
    %91 = math.rsqrt %90 : vector<1x512xf32>
    %92 = arith.mulf %15, %91 : vector<1x512xf32>
    %93 = arith.mulf %82, %92 : vector<1x512xf32>
    %94 = arith.subf %16, %93 : vector<1x512xf32>
    %95 = vector.broadcast %92 : vector<1x512xf32> to vector<8x512xf32>
    %96 = arith.mulf %75, %95 : vector<8x512xf32>
    %97 = vector.broadcast %94 : vector<1x512xf32> to vector<8x512xf32>
    %98 = arith.addf %96, %97 : vector<8x512xf32>
    %cst_40 = arith.constant 0.000000e+00 : f32
    %99 = vector.broadcast %cst_40 : f32 to vector<8x512xf32>
    %100 = arith.cmpf ogt, %98, %99 : vector<8x512xf32>
    %cst_41 = arith.constant 2.000000e-01 : f32
    %101 = vector.broadcast %cst_41 : f32 to vector<8x512xf32>
    %102 = arith.mulf %101, %98 : vector<8x512xf32>
    %103 = arith.select %100, %98, %102 : vector<8x512xi1>, vector<8x512xf32>
    %c3_i32_42 = arith.constant 3 : i32
    %104 = tpu.memref_slice %arg13[%c3_i32_42] : memref<5x!tpu.dma_semaphore, #tpu.memory_space<semaphore_mem>> -> memref<1x!tpu.dma_semaphore, #tpu.memory_space<semaphore_mem>>
    %105 = tpu.memref_squeeze %104 : memref<1x!tpu.dma_semaphore, #tpu.memory_space<semaphore_mem>> -> memref<!tpu.dma_semaphore, #tpu.memory_space<semaphore_mem>>
    tpu.wait_dma2 semaphore(%105 : memref<!tpu.dma_semaphore, #tpu.memory_space<semaphore_mem>>) src(%arg5 : memref<512x1024xbf16, #tpu.memory_space<any>>) dst(%arg11 : memref<512x1024xbf16, #tpu.memory_space<vmem>>)
    %106 = arith.truncf %103 : vector<8x512xf32> to vector<8x512xbf16>
    %c0_43 = arith.constant 0 : index
    %c0_44 = arith.constant 0 : index
    %107 = vector.load %arg11[%c0_43, %c0_44] : memref<512x1024xbf16, #tpu.memory_space<vmem>>, vector<512x1024xbf16>
    %cst_45 = arith.constant dense<0.000000e+00> : vector<8x1024xf32>
    %108 = tpu.matmul %106, %107, %cst_45 {dimension_numbers = #tpu.dot_dimension_numbers<[1], [0], [0], [1], [0, 0, 1, 1], [], []>} : vector<8x512xbf16>, vector<512x1024xbf16>, vector<8x1024xf32> -> vector<8x1024xf32>
    %109 = vector.broadcast %17 : vector<1x1024xf32> to vector<8x1024xf32>
    %110 = arith.addf %108, %109 : vector<8x1024xf32>
    %cst_46 = arith.constant dense<0.000000e+00> : vector<1024xf32>
    %111 = vector.multi_reduction <add>, %110, %cst_46 [0] : vector<8x1024xf32> to vector<1024xf32>
    %112 = vector.shape_cast %111 : vector<1024xf32> to vector<1x1024xf32>
    %113 = arith.mulf %110, %110 : vector<8x1024xf32>
    %cst_47 = arith.constant dense<0.000000e+00> : vector<1024xf32>
    %114 = vector.multi_reduction <add>, %113, %cst_47 [0] : vector<8x1024xf32> to vector<1024xf32>
    %115 = vector.shape_cast %114 : vector<1024xf32> to vector<1x1024xf32>
    %cst_48 = arith.constant 1.250000e-01 : f32
    %116 = vector.broadcast %cst_48 : f32 to vector<1x1024xf32>
    %117 = arith.mulf %112, %116 : vector<1x1024xf32>
    %cst_49 = arith.constant 1.250000e-01 : f32
    %118 = vector.broadcast %cst_49 : f32 to vector<1x1024xf32>
    %119 = arith.mulf %115, %118 : vector<1x1024xf32>
    %120 = arith.mulf %117, %117 : vector<1x1024xf32>
    %121 = arith.subf %119, %120 : vector<1x1024xf32>
    %cst_50 = arith.constant 0.000000e+00 : f32
    %122 = vector.broadcast %cst_50 : f32 to vector<1x1024xf32>
    %123 = arith.maximumf %121, %122 : vector<1x1024xf32>
    %cst_51 = arith.constant 8.000000e-01 : f32
    %124 = vector.broadcast %cst_51 : f32 to vector<1x1024xf32>
    %125 = arith.addf %123, %124 : vector<1x1024xf32>
    %126 = math.rsqrt %125 : vector<1x1024xf32>
    %127 = arith.mulf %18, %126 : vector<1x1024xf32>
    %128 = arith.mulf %117, %127 : vector<1x1024xf32>
    %129 = arith.subf %19, %128 : vector<1x1024xf32>
    %130 = vector.broadcast %127 : vector<1x1024xf32> to vector<8x1024xf32>
    %131 = arith.mulf %110, %130 : vector<8x1024xf32>
    %132 = vector.broadcast %129 : vector<1x1024xf32> to vector<8x1024xf32>
    %133 = arith.addf %131, %132 : vector<8x1024xf32>
    %cst_52 = arith.constant 0.000000e+00 : f32
    %134 = vector.broadcast %cst_52 : f32 to vector<8x1024xf32>
    %135 = arith.cmpf ogt, %133, %134 : vector<8x1024xf32>
    %cst_53 = arith.constant 2.000000e-01 : f32
    %136 = vector.broadcast %cst_53 : f32 to vector<8x1024xf32>
    %137 = arith.mulf %136, %133 : vector<8x1024xf32>
    %138 = arith.select %135, %133, %137 : vector<8x1024xi1>, vector<8x1024xf32>
    %c4_i32_54 = arith.constant 4 : i32
    %139 = tpu.memref_slice %arg13[%c4_i32_54] : memref<5x!tpu.dma_semaphore, #tpu.memory_space<semaphore_mem>> -> memref<1x!tpu.dma_semaphore, #tpu.memory_space<semaphore_mem>>
    %140 = tpu.memref_squeeze %139 : memref<1x!tpu.dma_semaphore, #tpu.memory_space<semaphore_mem>> -> memref<!tpu.dma_semaphore, #tpu.memory_space<semaphore_mem>>
    tpu.wait_dma2 semaphore(%140 : memref<!tpu.dma_semaphore, #tpu.memory_space<semaphore_mem>>) src(%arg6 : memref<1024x896xbf16, #tpu.memory_space<any>>) dst(%arg12 : memref<1024x896xbf16, #tpu.memory_space<vmem>>)
    %141 = arith.truncf %138 : vector<8x1024xf32> to vector<8x1024xbf16>
    %c0_55 = arith.constant 0 : index
    %c0_56 = arith.constant 0 : index
    %142 = vector.load %arg12[%c0_55, %c0_56] : memref<1024x896xbf16, #tpu.memory_space<vmem>>, vector<1024x896xbf16>
    %cst_57 = arith.constant dense<0.000000e+00> : vector<8x896xf32>
    %143 = tpu.matmul %141, %142, %cst_57 {dimension_numbers = #tpu.dot_dimension_numbers<[1], [0], [0], [1], [0, 0, 1, 1], [], []>} : vector<8x1024xbf16>, vector<1024x896xbf16>, vector<8x896xf32> -> vector<8x896xf32>
    %144 = vector.broadcast %20 : vector<1x896xf32> to vector<8x896xf32>
    %145 = arith.addf %143, %144 : vector<8x896xf32>
    %146 = math.tanh %145 : vector<8x896xf32>
    %c0_58 = arith.constant 0 : index
    %c0_59 = arith.constant 0 : index
    %147 = vector.load %arg7[%c0_58, %c0_59] : memref<8x896xf32, #tpu.memory_space<vmem>>, vector<8x896xf32>
    tpu.vector_store %arg7[%c0_58, %c0_59], %146 {strides = array<i32>} : memref<8x896xf32, #tpu.memory_space<vmem>>, vector<8x896xf32>,
    return
  }
}

</mosaic_0001>

<llo_original>
// kernel: generator_forward.1
$region0: #{generator_forward.1}
  #allocation0 [shape = 'u32[]', space=smem, size = 0x4, offset = 0x4, fixed_abs, tag = 'smem constant byte address 0x4 - core index']
  #allocation1 [shape = 'u32[144,128]{1,0:T(1,128)}', space=vmem, size = 0x12000, scoped, tag = 'internal scratch']
  #allocation2 [shape = 'bf16[128,128]{1,0:T(16,128)(2,1)}', space=vmem, size = 0x8000, scoped, tag = 'scratch operand']
  #allocation3 [shape = 'bf16[128,256]{1,0:T(16,128)(2,1)}', space=vmem, size = 0x10000, scoped, tag = 'scratch operand']
  #allocation4 [shape = 'bf16[256,512]{1,0:T(16,128)(2,1)}', space=vmem, size = 0x40000, scoped, tag = 'scratch operand']
  #allocation5 [shape = 'bf16[512,1024]{1,0:T(16,128)(2,1)}', space=vmem, size = 0x100000, scoped, tag = 'scratch operand']
  #allocation6 [shape = 'bf16[1024,896]{1,0:T(16,128)(2,1)}', space=vmem, size = 0x1c0000, scoped, tag = 'scratch operand']
  #allocation7 [shape = 's32[5]{0}', space=sflag, size = 0x14, scoped, tag = 'scratch operand']
  #allocation10 [shape = 's32[]', space=sflag, size = 0x4, offset = 0, fixed_abs, tag = 'sflag constant byte address 0x0 - dummy sync flag']
  #allocation11 [shape = 's32[]', space=sflag, size = 0x4, offset = 0, fixed_abs, tag = 'sflag constant byte address 0x0 - dummy sync flag']
  #allocation12 [shape = 'u32[]', space=smem, size = 0x4, offset = 0x44, fixed_abs, tag = 'smem constant byte address 0x44 - assertion arg 0']
  #allocation13 [shape = 'u32[]', space=smem, size = 0x4, offset = 0x48, fixed_abs, tag = 'smem constant byte address 0x48 - assertion arg 1']
  #allocation14 [shape = 's32[]', space=sflag, size = 0x4, offset = 0, fixed_abs, tag = 'sflag constant byte address 0x0 - dummy sync flag']
  #allocation16 [shape = 's32[]', space=sflag, size = 0x4, offset = 0, fixed_abs, tag = 'sflag constant byte address 0x0 - dummy sync flag']
  #allocation18 [shape = 's32[]', space=sflag, size = 0x4, offset = 0, fixed_abs, tag = 'sflag constant byte address 0x0 - dummy sync flag']
  #allocation20 [shape = 's32[]', space=sflag, size = 0x4, offset = 0, fixed_abs, tag = 'sflag constant byte address 0x0 - dummy sync flag']
  %s0 = inlined_call_operand.vmem [shape: f32[8,128], index: 0, kind: input, shape index: {}]
  %s1 = inlined_call_operand.hbm [shape: f32[16,1024], index: 1, kind: input, shape index: {}]
  %s2 = inlined_call_operand.hbm [shape: bf16[128,128], index: 2, kind: input, shape index: {}]
  %s3 = inlined_call_operand.hbm [shape: bf16[128,256], index: 3, kind: input, shape index: {}]
  %s4 = inlined_call_operand.hbm [shape: bf16[256,512], index: 4, kind: input, shape index: {}]
  %s5 = inlined_call_operand.hbm [shape: bf16[512,1024], index: 5, kind: input, shape index: {}]
  %s6 = inlined_call_operand.hbm [shape: bf16[1024,896], index: 6, kind: input, shape index: {}]
  %s7 = inlined_call_operand.vmem [shape: f32[8,896], index: 7, kind: output, shape index: {}]
  %s8 = sld [smem:[#allocation0]]
  $region26: #{generator_forward.1} parent=0
    _
  %s10 = ssub.s32 1, %s8
  %s11 = scalar_select 0, %s10, %s8
  $region1: #{generator_forward.1} parent=0
    #allocation8 [shape = 'u8[65536]{0}', space=vmem, size = 0x10000, scoped, tag = 'input window, operand 1, single buffered']
    #allocation9 [shape = 's32[1]{0}', space=sflag, size = 0x4, scoped, tag = 'scoped memory for generator_forward.1']
    #allocation15 [shape = 'u32[9]{0}', space=smem, size = 0x24, scoped, tag = 'DMA stride descriptor']
    #allocation17 [shape = 'u32[9]{0}', space=smem, size = 0x24, scoped, tag = 'DMA stride descriptor']
    #allocation19 [shape = 'u32[9]{0}', space=smem, size = 0x24, scoped, tag = 'DMA stride descriptor']
    #allocation21 [shape = 'u32[9]{0}', space=smem, size = 0x24, scoped, tag = 'DMA stride descriptor']
    %12 = vsyncpa [#allocation9], 0
    // Predicated region
    $region2: #{generator_forward.1} parent=1 // pred_check
      _
    $region3: #{generator_forward.1} parent=1 // pred_check_branch
      %14 = sbr.rel (0) target = $region5
    $region4: #{generator_forward.1} parent=1 // pred_region
      _
    $region5: #{generator_forward.1} parent=1 // pred_fallthru
      _
    // Predicated region
    $region6: #{generator_forward.1} parent=1 // pred_check
      _
    $region7: #{generator_forward.1} parent=1 // pred_check_branch
      %16 = sbr.rel (0) target = $region9
    $region8: #{generator_forward.1} parent=1 // pred_region
      %s18 = ssub.s32 2048, 2048
      %19 = vsyncadd [#allocation9], %s18
      %s20 = sshll.u32 [#allocation8], 4
      %s21 = int_to_ptr.vmem [resolvable:$true] %s20
      %26 = dma.hbm_to_vmem [thread:$0]  %s1, 2048, %s21, [#allocation9], 1024, 1024, 64
    $region9: #{generator_forward.1} parent=1 // pred_fallthru
      _
    // Predicated region
    $region10: #{generator_forward.1} parent=1 // pred_check
      _
    $region11: #{generator_forward.1} parent=1 // pred_check_branch
      %28 = sbr.rel (0) target = $region13
    $region12: #{generator_forward.1} parent=1 // pred_region
      %29 = dma.done [#allocation9], 2048
    $region13: #{generator_forward.1} parent=1 // pred_fallthru
      _
    // Predicated region
    $region14: #{generator_forward.1} parent=1 // pred_check
      _
    $region15: #{generator_forward.1} parent=1 // pred_check_branch
      %32 = sbr.rel target = $region17
    $region16: #{generator_forward.1} parent=1 // pred_region
      %33 = sst [smem:[#allocation12]] [#allocation11]
      %34 = sst [smem:[#allocation13]] [#allocation10]
    $region17: #{generator_forward.1} parent=1 // pred_fallthru
      _
    %36 = shalt.err (0)
    %s38 = sshll.u32 [#allocation2], 4
    %s39 = int_to_ptr.vmem [resolvable:$true] %s38
    %41 = dma.hbm_to_vmem [thread:$0]  %s2, 1024, %s39, [#allocation7]
    %s42 = scalar_lea.sflag [#allocation7], 1
    %s44 = sshll.u32 1, 14
    %s45 = sxor.u32 4294967295, %s44
    %s47 = sld [smem:[#allocation0]]
    %s48 = sadd.s32 2, %s47
    %s50 = sshll.u32 7, 26
    %s51 = sxor.u32 4294967295, %s50
    %s52 = sand.u32 0, %s51
    %s53 = sshll.u32 %s48, 26
    %s54 = sor.u32 %s52, %s53
    %s55 = sshll.u32 [#allocation3], 4
    %s56 = int_to_ptr.vmem [resolvable:$true] %s55
    %59 = sst [smem:[#allocation15]] 256
    %s60 = scalar_lea.smem [#allocation15], 1
    %61 = sst [smem:[%s60]] 256
    %s62 = scalar_lea.smem [#allocation15], 2
    %63 = sst [smem:[%s62]] 2
    %s64 = scalar_lea.smem [#allocation15], 3
    %65 = sst [smem:[%s64]] 64
    %s66 = scalar_lea.smem [#allocation15], 4
    %67 = sst [smem:[%s66]] 128
    %s68 = scalar_lea.smem [#allocation15], 5
    %69 = sst [smem:[%s68]] 2
    %s70 = scalar_lea.smem [#allocation15], 6
    %71 = sst [smem:[%s70]] 128
    %s72 = scalar_lea.smem [#allocation15], 7
    %73 = sst [smem:[%s72]] 64
    %s74 = scalar_lea.smem [#allocation15], 8
    %75 = sst [smem:[%s74]] 4
    %77 = dma.general %s3, 2048, %s56, %s42, [#allocation14], [#allocation15], %s54, 0
    %s78 = scalar_lea.sflag [#allocation7], 2
    %s80 = sshll.u32 1, 14
    %s81 = sxor.u32 4294967295, %s80
    %s83 = sadd.s32 2, %s47
    %s85 = sshll.u32 7, 26
    %s86 = sxor.u32 4294967295, %s85
    %s87 = sand.u32 0, %s86
    %s88 = sshll.u32 %s83, 26
    %s89 = sor.u32 %s87, %s88
    %s90 = sshll.u32 [#allocation4], 4
    %s91 = int_to_ptr.vmem [resolvable:$true] %s90
    %94 = sst [smem:[#allocation17]] 512
    %s95 = scalar_lea.smem [#allocation17], 1
    %96 = sst [smem:[%s95]] 512
    %s97 = scalar_lea.smem [#allocation17], 2
    %98 = sst [smem:[%s97]] 4
    %s99 = scalar_lea.smem [#allocation17], 3
    %100 = sst [smem:[%s99]] 64
    %s101 = scalar_lea.smem [#allocation17], 4
    %102 = sst [smem:[%s101]] 128
    %s103 = scalar_lea.smem [#allocation17], 5
    %104 = sst [smem:[%s103]] 2
    %s105 = scalar_lea.smem [#allocation17], 6
    %106 = sst [smem:[%s105]] 256
    %s107 = scalar_lea.smem [#allocation17], 7
    %108 = sst [smem:[%s107]] 64
    %s109 = scalar_lea.smem [#allocation17], 8
    %110 = sst [smem:[%s109]] 4
    %112 = dma.general %s4, 8192, %s91, %s78, [#allocation16], [#allocation17], %s89, 0
    %s113 = scalar_lea.sflag [#allocation7], 3
    %s115 = sshll.u32 1, 14
    %s116 = sxor.u32 4294967295, %s115
    %s118 = sadd.s32 2, %s47
    %s120 = sshll.u32 7, 26
    %s121 = sxor.u32 4294967295, %s120
    %s122 = sand.u32 0, %s121
    %s123 = sshll.u32 %s118, 26
    %s124 = sor.u32 %s122, %s123
    %s125 = sshll.u32 [#allocation5], 4
    %s126 = int_to_ptr.vmem [resolvable:$true] %s125
    %129 = sst [smem:[#allocation19]] 1024
    %s130 = scalar_lea.smem [#allocation19], 1
    %131 = sst [smem:[%s130]] 1024
    %s132 = scalar_lea.smem [#allocation19], 2
    %133 = sst [smem:[%s132]] 8
    %s134 = scalar_lea.smem [#allocation19], 3
    %135 = sst [smem:[%s134]] 64
    %s136 = scalar_lea.smem [#allocation19], 4
    %137 = sst [smem:[%s136]] 128
    %s138 = scalar_lea.smem [#allocation19], 5
    %139 = sst [smem:[%s138]] 2
    %s140 = scalar_lea.smem [#allocation19], 6
    %141 = sst [smem:[%s140]] 512
    %s142 = scalar_lea.smem [#allocation19], 7
    %143 = sst [smem:[%s142]] 64
    %s144 = scalar_lea.smem [#allocation19], 8
    %145 = sst [smem:[%s144]] 4
    %147 = dma.general %s5, 32768, %s126, %s113, [#allocation18], [#allocation19], %s124, 0
    %s148 = scalar_lea.sflag [#allocation7], 4
    %s150 = sshll.u32 1, 14
    %s151 = sxor.u32 4294967295, %s150
    %s153 = sadd.s32 2, %s47
    %s155 = sshll.u32 7, 26
    %s156 = sxor.u32 4294967295, %s155
    %s157 = sand.u32 0, %s156
    %s158 = sshll.u32 %s153, 26
    %s159 = sor.u32 %s157, %s158
    %s160 = sshll.u32 [#allocation6], 4
    %s161 = int_to_ptr.vmem [resolvable:$true] %s160
    %164 = sst [smem:[#allocation21]] 896
    %s165 = scalar_lea.smem [#allocation21], 1
    %166 = sst [smem:[%s165]] 896
    %s167 = scalar_lea.smem [#allocation21], 2
    %168 = sst [smem:[%s167]] 7
    %s169 = scalar_lea.smem [#allocation21], 3
    %170 = sst [smem:[%s169]] 64
    %s171 = scalar_lea.smem [#allocation21], 4
    %172 = sst [smem:[%s171]] 128
    %s173 = scalar_lea.smem [#allocation21], 5
    %174 = sst [smem:[%s173]] 2
    %s175 = scalar_lea.smem [#allocation21], 6
    %176 = sst [smem:[%s175]] 448
    %s177 = scalar_lea.smem [#allocation21], 7
    %178 = sst [smem:[%s177]] 64
    %s179 = scalar_lea.smem [#allocation21], 8
    %180 = sst [smem:[%s179]] 4
    %182 = dma.general %s6, 57344, %s161, %s148, [#allocation20], [#allocation21], %s159, 0
    %v183 = vld [vmem:[#allocation8] ss:$0 sm:$0xff]
    %s184 = scalar_lea.vmem [#allocation8], 1
    %v185 = vld [vmem:[%s184] ss:$8 sm:$0x3]
    %s186 = scalar_lea.vmem [#allocation8], 2
    %v187 = vld [vmem:[%s186] ss:$8 sm:$0x3]
    %s188 = scalar_lea.vmem [#allocation8], 3
    %v189 = vld [vmem:[%s188] ss:$8 sm:$0x3]
    %s190 = scalar_lea.vmem [#allocation8], 4
    %v191 = vld [vmem:[%s190] ss:$8 sm:$0xf]
    %s192 = scalar_lea.vmem [#allocation8], 5
    %v193 = vld [vmem:[%s192] ss:$8 sm:$0xf]
    %s194 = scalar_lea.vmem [#allocation8], 6
    %v195 = vld [vmem:[%s194] ss:$8 sm:$0xf]
    %s196 = scalar_lea.vmem [#allocation8], 7
    %v197 = vld [vmem:[%s196] ss:$8 sm:$0xf]
    %v198 = vld [vmem:[%s196] ss:$8 sm:$0xf0]
    %v199 = vor.u32 %v197, %v198
    %s200 = scalar_lea.vmem [#allocation8], 64
    %v201 = vld [vmem:[%s200] ss:$8 sm:$0xf]
    %v202 = vld [vmem:[%s200] ss:$8 sm:$0xf0]
    %v203 = vor.u32 %v201, %v202
    %s204 = scalar_lea.vmem [#allocation8], 65
    %v205 = vld [vmem:[%s204] ss:$8 sm:$0xf]
    %v206 = vld [vmem:[%s204] ss:$8 sm:$0xf0]
    %v207 = vor.u32 %v205, %v206
    %s208 = scalar_lea.vmem [#allocation8], 66
    %v209 = vld [vmem:[%s208] ss:$8 sm:$0xf]
    %v210 = vld [vmem:[%s208] ss:$8 sm:$0xf0]
    %v211 = vor.u32 %v209, %v210
    %s212 = smul.u32 4, 16
    %s213 = smul.u32 %s212, 1
    %s214 = sshll.u32 %s213, 4
    %215 = dma.done [#allocation7], %s214
    %v216 = vld [vmem:[%s0] sm:$0xff]
    %v217 = vpack.c.bf16 %v216, %v216
    %v218 = vld [vmem:[#allocation2] sm:$0xff]
    %v219 = vld [vmem:[#allocation2 + $0x8] sm:$0xff]
    %v220 = vld [vmem:[#allocation2 + $0x10] sm:$0xff]
    %v221 = vld [vmem:[#allocation2 + $0x18] sm:$0xff]
    %v222 = vld [vmem:[#allocation2 + $0x20] sm:$0xff]
    %v223 = vld [vmem:[#allocation2 + $0x28] sm:$0xff]
    %v224 = vld [vmem:[#allocation2 + $0x30] sm:$0xff]
    %v225 = vld [vmem:[#allocation2 + $0x38] sm:$0xff]
    %226 = vmatprep.subr.bf16.mxu0 0
    %227 = vmatpush1.bf16.msra.mxu0 %v218
    %228 = vmatprep.subr.bf16.mxu0 0
    %229 = vmatpush1.bf16.msra.mxu0 %v219
    %230 = vmatprep.subr.bf16.mxu0 0
    %231 = vmatpush1.bf16.msra.mxu0 %v220
    %232 = vmatprep.subr.bf16.mxu0 0
    %233 = vmatpush1.bf16.msra.mxu0 %v221
    %234 = vmatprep.subr.bf16.mxu0 0
    %235 = vmatpush1.bf16.msra.mxu0 %v222
    %236 = vmatprep.subr.bf16.mxu0 0
    %237 = vmatpush1.bf16.msra.mxu0 %v223
    %238 = vmatprep.subr.bf16.mxu0 0
    %239 = vmatpush1.bf16.msra.mxu0 %v224
    %240 = vmatprep.subr.bf16.mxu0 0
    %241 = vmatpush1.bf16.msra.mxu0 %v225
    %242 = vmatprep.subr.bf16.mxu0 0
    %243 = vmatpush1.bf16.msra.mxu0 0
    %244 = vmatprep.subr.bf16.mxu0 0
    %245 = vmatpush1.bf16.msra.mxu0 0
    %246 = vmatprep.subr.bf16.mxu0 0
    %247 = vmatpush1.bf16.msra.mxu0 0
    %248 = vmatprep.subr.bf16.mxu0 0
    %249 = vmatpush1.bf16.msra.mxu0 0
    %250 = vmatprep.subr.bf16.mxu0 0
    %251 = vmatpush1.bf16.msra.mxu0 0
    %252 = vmatprep.subr.bf16.mxu0 0
    %253 = vmatpush1.bf16.msra.mxu0 0
    %254 = vmatprep.subr.bf16.mxu0 0
    %255 = vmatpush1.bf16.msra.mxu0 0
    %256 = vmatprep.subr.bf16.mxu0 0
    %257 = vmatpush1.bf16.msra.mxu0 0
    %258 = vmatprep.mubr.bf16.mxu0 0
    %259 = vmatmul.mubr.bf16.gmra.mrb[0].mxu0 %v217
    %v260 = vpop.f32.mrb[0].mxu0
    %v261 = vadd.f32 %v183, %v260
    %v262 = vpop.f32.mrb[0].mxu0
    %v263 = vpop.f32.mrb[0].mxu0
    %v264 = vpop.f32.mrb[0].mxu0
    %265 = vdwg.mxu0
    %vm266 = vcmp.gt.f32.partialorder %v261, 0.0
    %v267 = vmul.f32 %v261, 0.2
    %v268 = vsel %vm266, %v261, %v267
    %s269 = smul.u32 %s212, 2
    %s270 = sshll.u32 %s269, 4
    %271 = dma.done %s42, %s270
    %v272 = vpack.c.bf16 %v268, %v268
    %v273 = vld [vmem:[#allocation3] sm:$0xff]
    %v274 = vld [vmem:[#allocation3 + $0x8] sm:$0xff]
    %v275 = vld [vmem:[#allocation3 + $0x10] sm:$0xff]
    %v276 = vld [vmem:[#allocation3 + $0x18] sm:$0xff]
    %v277 = vld [vmem:[#allocation3 + $0x20] sm:$0xff]
    %v278 = vld [vmem:[#allocation3 + $0x28] sm:$0xff]
    %v279 = vld [vmem:[#allocation3 + $0x30] sm:$0xff]
    %v280 = vld [vmem:[#allocation3 + $0x38] sm:$0xff]
    %v281 = vld [vmem:[#allocation3 + $0x40] sm:$0xff]
    %v282 = vld [vmem:[#allocation3 + $0x48] sm:$0xff]
    %v283 = vld [vmem:[#allocation3 + $0x50] sm:$0xff]
    %v284 = vld [vmem:[#allocation3 + $0x58] sm:$0xff]
    %v285 = vld [vmem:[#allocation3 + $0x60] sm:$0xff]
    %v286 = vld [vmem:[#allocation3 + $0x68] sm:$0xff]
    %v287 = vld [vmem:[#allocation3 + $0x70] sm:$0xff]
    %v288 = vld [vmem:[#allocation3 + $0x78] sm:$0xff]
    %v290 = vlaneseq
    %v291 = vshrl.u32 %v290, 7
    %v292 = vsub.s32 0, %v291
    %v293 = vrot.slane %v185, %v292
    %v294 = vlaneseq
    %v295 = vshrl.u32 %v294, 7
    %v296 = vsub.s32 1, %v295
    %v297 = vrot.slane %v185, %v296
    %300 = vmatprep.subr.bf16.mxu0 %v274
    %301 = vmatpush1.bf16.msra.mxu0 %v273
    %302 = vmatprep.subr.bf16.mxu0 %v276
    %303 = vmatpush1.bf16.msra.mxu0 %v275
    %304 = vmatprep.subr.bf16.mxu0 %v278
    %305 = vmatpush1.bf16.msra.mxu0 %v277
    %306 = vmatprep.subr.bf16.mxu0 %v280
    %307 = vmatpush1.bf16.msra.mxu0 %v279
    %308 = vmatprep.subr.bf16.mxu0 %v282
    %309 = vmatpush1.bf16.msra.mxu0 %v281
    %310 = vmatprep.subr.bf16.mxu0 %v284
    %311 = vmatpush1.bf16.msra.mxu0 %v283
    %312 = vmatprep.subr.bf16.mxu0 %v286
    %313 = vmatpush1.bf16.msra.mxu0 %v285
    %314 = vmatprep.subr.bf16.mxu0 %v288
    %315 = vmatpush1.bf16.msra.mxu0 %v287
    %316 = vmatprep.subr.bf16.mxu0 0
    %317 = vmatpush1.bf16.msra.mxu0 0
    %318 = vmatprep.subr.bf16.mxu0 0
    %319 = vmatpush1.bf16.msra.mxu0 0
    %320 = vmatprep.subr.bf16.mxu0 0
    %321 = vmatpush1.bf16.msra.mxu0 0
    %322 = vmatprep.subr.bf16.mxu0 0
    %323 = vmatpush1.bf16.msra.mxu0 0
    %324 = vmatprep.subr.bf16.mxu0 0
    %325 = vmatpush1.bf16.msra.mxu0 0
    %326 = vmatprep.subr.bf16.mxu0 0
    %327 = vmatpush1.bf16.msra.mxu0 0
    %328 = vmatprep.subr.bf16.mxu0 0
    %329 = vmatpush1.bf16.msra.mxu0 0
    %330 = vmatprep.subr.bf16.mxu0 0
    %331 = vmatpush1.bf16.msra.mxu0 0
    %332 = vmatprep.mubr.bf16.mxu0 0
    %333 = vmatmul.mubr.bf16.gmra.mrb[0].mxu0 %v272
    %v334 = vpop.f32.mrb[0].mxu0
    %v335 = vadd.f32 %v293, %v334
    %v336 = vpop.f32.mrb[0].mxu0
    %v337 = vadd.f32 %v297, %v336
    %v338 = vpop.f32.mrb[0].mxu0
    %v339 = vpop.f32.mrb[0].mxu0
    %340 = vdwg.mxu0
    %v341 = vrot.slane %v335, 4
    %v342 = vadd.f32 %v335, %v341
    %v343 = vrot.slane %v342, 2
    %v344 = vadd.f32 %v342, %v343
    %v345 = vrot.slane %v344, 1
    %v346 = vadd.f32 %v344, %v345
    %v347 = vrot.slane %v337, 4
    %v348 = vadd.f32 %v337, %v347
    %v349 = vrot.slane %v348, 2
    %v350 = vadd.f32 %v348, %v349
    %v351 = vrot.slane %v350, 1
    %v352 = vadd.f32 %v350, %v351
    %v353 = vmul.f32 %v335, %v335
    %v354 = vmul.f32 %v337, %v337
    %v355 = vrot.slane %v353, 4
    %v356 = vadd.f32 %v353, %v355
    %v357 = vrot.slane %v356, 2
    %v358 = vadd.f32 %v356, %v357
    %v359 = vrot.slane %v358, 1
    %v360 = vadd.f32 %v358, %v359
    %v361 = vrot.slane %v354, 4
    %v362 = vadd.f32 %v354, %v361
    %v363 = vrot.slane %v362, 2
    %v364 = vadd.f32 %v362, %v363
    %v365 = vrot.slane %v364, 1
    %v366 = vadd.f32 %v364, %v365
    %v367 = vmul.f32 %v346, 0.125
    %v368 = vmul.f32 %v352, 0.125
    %v369 = vmul.f32 %v360, 0.125
    %v370 = vmul.f32 %v366, 0.125
    %v371 = vmul.f32 %v367, %v367
    %v372 = vmul.f32 %v368, %v368
    %v373 = vsub.f32 %v369, %v371
    %v374 = vsub.f32 %v370, %v372
    %v375 = vmax.f32 %v373, 0.0
    %v376 = vmax.f32 %v374, 0.0
    %v377 = vadd.f32 %v375, 0.8
    %v378 = vadd.f32 %v376, 0.8
    %v379 = vrsqrt.pop %v377
    %v380 = vrsqrt.pop %v378
    %v383 = vcombine.low %v379, %v380
    %v385 = vunpack.c.l.s4 1966171168
    %v386 = vunpack.c.0.s8 %v385
    %v387 = vlaneseq
    %v388 = vshrl.u32 %v387, 7
    %v389 = vsub.s32 %v386, %v388
    %v390 = vrot.slane %v383, %v389
    %v392 = vunpack.c.l.s4 1966171168
    %v393 = vunpack.c.0.s8 %v392
    %v394 = vlaneseq
    %v395 = vshrl.u32 %v394, 7
    %v396 = vsub.s32 %v393, %v395
    %v397 = vrot.slane %v390, %v396
    %v399 = vmul.f32 %v187, %v397
    %v401 = vlaneseq
    %v402 = vshrl.u32 %v401, 7
    %v403 = vsub.s32 0, %v402
    %v404 = vrot.slane %v399, %v403
    %v405 = vlaneseq
    %v406 = vshrl.u32 %v405, 7
    %v407 = vsub.s32 1, %v406
    %v408 = vrot.slane %v399, %v407
    %v411 = vmul.f32 %v367, %v404
    %v412 = vmul.f32 %v368, %v408
    %v415 = vcombine.low %v411, %v412
    %v417 = vunpack.c.l.s4 1966171168
    %v418 = vunpack.c.0.s8 %v417
    %v419 = vlaneseq
    %v420 = vshrl.u32 %v419, 7
    %v421 = vsub.s32 %v418, %v420
    %v422 = vrot.slane %v415, %v421
    %v424 = vunpack.c.l.s4 1966171168
    %v425 = vunpack.c.0.s8 %v424
    %v426 = vlaneseq
    %v427 = vshrl.u32 %v426, 7
    %v428 = vsub.s32 %v425, %v427
    %v429 = vrot.slane %v422, %v428
    %v431 = vsub.f32 %v189, %v429
    %v432 = vmul.f32 %v335, %v404
    %v433 = vmul.f32 %v337, %v408
    %v435 = vlaneseq
    %v436 = vshrl.u32 %v435, 7
    %v437 = vsub.s32 0, %v436
    %v438 = vrot.slane %v431, %v437
    %v439 = vlaneseq
    %v440 = vshrl.u32 %v439, 7
    %v441 = vsub.s32 1, %v440
    %v442 = vrot.slane %v431, %v441
    %v445 = vadd.f32 %v432, %v438
    %v446 = vadd.f32 %v433, %v442
    %vm447 = vcmp.gt.f32.partialorder %v445, 0.0
    %vm448 = vcmp.gt.f32.partialorder %v446, 0.0
    %v449 = vmul.f32 %v445, 0.2
    %v450 = vmul.f32 %v446, 0.2
    %v451 = vsel %vm447, %v445, %v449
    %v452 = vsel %vm448, %v446, %v450
    %s453 = smul.u32 4, 32
    %s454 = smul.u32 %s453, 4
    %s455 = sshll.u32 %s454, 4
    %456 = dma.done %s78, %s455
    %v457 = vpack.c.bf16 %v451, %v451
    %v458 = vpack.c.bf16 %v452, %v452
    %v459 = vld [vmem:[#allocation4] sm:$0xff]
    %v460 = vld [vmem:[#allocation4 + $0x8] sm:$0xff]
    %v461 = vld [vmem:[#allocation4 + $0x10] sm:$0xff]
    %v462 = vld [vmem:[#allocation4 + $0x18] sm:$0xff]
    %v463 = vld [vmem:[#allocation4 + $0x20] sm:$0xff]
    %v464 = vld [vmem:[#allocation4 + $0x28] sm:$0xff]
    %v465 = vld [vmem:[#allocation4 + $0x30] sm:$0xff]
    %v466 = vld [vmem:[#allocation4 + $0x38] sm:$0xff]
    %v467 = vld [vmem:[#allocation4 + $0x40] sm:$0xff]
    %v468 = vld [vmem:[#allocation4 + $0x48] sm:$0xff]
    %v469 = vld [vmem:[#allocation4 + $0x50] sm:$0xff]
    %v470 = vld [vmem:[#allocation4 + $0x58] sm:$0xff]
    %v471 = vld [vmem:[#allocation4 + $0x60] sm:$0xff]
    %v472 = vld [vmem:[#allocation4 + $0x68] sm:$0xff]
    %v473 = vld [vmem:[#allocation4 + $0x70] sm:$0xff]
    %v474 = vld [vmem:[#allocation4 + $0x78] sm:$0xff]
    %v475 = vld [vmem:[#allocation4 + $0x80] sm:$0xff]
    %v476 = vld [vmem:[#allocation4 + $0x88] sm:$0xff]
    %v477 = vld [vmem:[#allocation4 + $0x90] sm:$0xff]
    %v478 = vld [vmem:[#allocation4 + $0x98] sm:$0xff]
    %v479 = vld [vmem:[#allocation4 + $0xa0] sm:$0xff]
    %v480 = vld [vmem:[#allocation4 + $0xa8] sm:$0xff]
    %v481 = vld [vmem:[#allocation4 + $0xb0] sm:$0xff]
    %v482 = vld [vmem:[#allocation4 + $0xb8] sm:$0xff]
    %v483 = vld [vmem:[#allocation4 + $0xc0] sm:$0xff]
    %v484 = vld [vmem:[#allocation4 + $0xc8] sm:$0xff]
    %v485 = vld [vmem:[#allocation4 + $0xd0] sm:$0xff]
    %v486 = vld [vmem:[#allocation4 + $0xd8] sm:$0xff]
    %v487 = vld [vmem:[#allocation4 + $0xe0] sm:$0xff]
    %v488 = vld [vmem:[#allocation4 + $0xe8] sm:$0xff]
    %v489 = vld [vmem:[#allocation4 + $0xf0] sm:$0xff]
    %v490 = vld [vmem:[#allocation4 + $0xf8] sm:$0xff]
    %v491 = vld [vmem:[#allocation4 + $0x100] sm:$0xff]
    %v492 = vld [vmem:[#allocation4 + $0x108] sm:$0xff]
    %v493 = vld [vmem:[#allocation4 + $0x110] sm:$0xff]
    %v494 = vld [vmem:[#allocation4 + $0x118] sm:$0xff]
    %v495 = vld [vmem:[#allocation4 + $0x120] sm:$0xff]
    %v496 = vld [vmem:[#allocation4 + $0x128] sm:$0xff]
    %v497 = vld [vmem:[#allocation4 + $0x130] sm:$0xff]
    %v498 = vld [vmem:[#allocation4 + $0x138] sm:$0xff]
    %v499 = vld [vmem:[#allocation4 + $0x140] sm:$0xff]
    %v500 = vld [vmem:[#allocation4 + $0x148] sm:$0xff]
    %v501 = vld [vmem:[#allocation4 + $0x150] sm:$0xff]
    %v502 = vld [vmem:[#allocation4 + $0x158] sm:$0xff]
    %v503 = vld [vmem:[#allocation4 + $0x160] sm:$0xff]
    %v504 = vld [vmem:[#allocation4 + $0x168] sm:$0xff]
    %v505 = vld [vmem:[#allocation4 + $0x170] sm:$0xff]
    %v506 = vld [vmem:[#allocation4 + $0x178] sm:$0xff]
    %v507 = vld [vmem:[#allocation4 + $0x180] sm:$0xff]
    %v508 = vld [vmem:[#allocation4 + $0x188] sm:$0xff]
    %v509 = vld [vmem:[#allocation4 + $0x190] sm:$0xff]
    %v510 = vld [vmem:[#allocation4 + $0x198] sm:$0xff]
    %v511 = vld [vmem:[#allocation4 + $0x1a0] sm:$0xff]
    %v512 = vld [vmem:[#allocation4 + $0x1a8] sm:$0xff]
    %v513 = vld [vmem:[#allocation4 + $0x1b0] sm:$0xff]
    %v514 = vld [vmem:[#allocation4 + $0x1b8] sm:$0xff]
    %v515 = vld [vmem:[#allocation4 + $0x1c0] sm:$0xff]
    %v516 = vld [vmem:[#allocation4 + $0x1c8] sm:$0xff]
    %v517 = vld [vmem:[#allocation4 + $0x1d0] sm:$0xff]
    %v518 = vld [vmem:[#allocation4 + $0x1d8] sm:$0xff]
    %v519 = vld [vmem:[#allocation4 + $0x1e0] sm:$0xff]
    %v520 = vld [vmem:[#allocation4 + $0x1e8] sm:$0xff]
    %v521 = vld [vmem:[#allocation4 + $0x1f0] sm:$0xff]
    %v522 = vld [vmem:[#allocation4 + $0x1f8] sm:$0xff]
    %v524 = vlaneseq
    %v525 = vshrl.u32 %v524, 7
    %v526 = vsub.s32 0, %v525
    %v527 = vrot.slane %v191, %v526
    %v528 = vlaneseq
    %v529 = vshrl.u32 %v528, 7
    %v530 = vsub.s32 1, %v529
    %v531 = vrot.slane %v191, %v530
    %v532 = vlaneseq
    %v533 = vshrl.u32 %v532, 7
    %v534 = vsub.s32 2, %v533
    %v535 = vrot.slane %v191, %v534
    %v536 = vlaneseq
    %v537 = vshrl.u32 %v536, 7
    %v538 = vsub.s32 3, %v537
    %v539 = vrot.slane %v191, %v538
    %544 = vmatprep.subr.bf16.mxu0 %v460
    %545 = vmatpush1.bf16.msra.mxu0 %v459
    %546 = vmatprep.subr.bf16.mxu0 %v464
    %547 = vmatpush1.bf16.msra.mxu0 %v463
    %548 = vmatprep.subr.bf16.mxu0 %v468
    %549 = vmatpush1.bf16.msra.mxu0 %v467
    %550 = vmatprep.subr.bf16.mxu0 %v472
    %551 = vmatpush1.bf16.msra.mxu0 %v471
    %552 = vmatprep.subr.bf16.mxu0 %v476
    %553 = vmatpush1.bf16.msra.mxu0 %v475
    %554 = vmatprep.subr.bf16.mxu0 %v480
    %555 = vmatpush1.bf16.msra.mxu0 %v479
    %556 = vmatprep.subr.bf16.mxu0 %v484
    %557 = vmatpush1.bf16.msra.mxu0 %v483
    %558 = vmatprep.subr.bf16.mxu0 %v488
    %559 = vmatpush1.bf16.msra.mxu0 %v487
    %560 = vmatprep.subr.bf16.mxu0 %v492
    %561 = vmatpush1.bf16.msra.mxu0 %v491
    %562 = vmatprep.subr.bf16.mxu0 %v496
    %563 = vmatpush1.bf16.msra.mxu0 %v495
    %564 = vmatprep.subr.bf16.mxu0 %v500
    %565 = vmatpush1.bf16.msra.mxu0 %v499
    %566 = vmatprep.subr.bf16.mxu0 %v504
    %567 = vmatpush1.bf16.msra.mxu0 %v503
    %568 = vmatprep.subr.bf16.mxu0 %v508
    %569 = vmatpush1.bf16.msra.mxu0 %v507
    %570 = vmatprep.subr.bf16.mxu0 %v512
    %571 = vmatpush1.bf16.msra.mxu0 %v511
    %572 = vmatprep.subr.bf16.mxu0 %v516
    %573 = vmatpush1.bf16.msra.mxu0 %v515
    %574 = vmatprep.subr.bf16.mxu0 %v520
    %575 = vmatpush1.bf16.msra.mxu0 %v519
    %576 = vmatprep.mubr.bf16.mxu0 %v458
    %577 = vmatmul.mubr.bf16.gmra.mrb[0].mxu0 %v457
    %v578 = vpop.f32.mrb[0].mxu0
    %v579 = vadd.f32 %v527, %v578
    %v580 = vpop.f32.mrb[0].mxu0
    %v581 = vadd.f32 %v531, %v580
    %v582 = vpop.f32.mrb[0].mxu0
    %v583 = vpop.f32.mrb[0].mxu0
    %584 = vdwg.mxu0
    %585 = vmatprep.subr.bf16.mxu0 %v462
    %586 = vmatpush1.bf16.msra.mxu0 %v461
    %587 = vmatprep.subr.bf16.mxu0 %v466
    %588 = vmatpush1.bf16.msra.mxu0 %v465
    %589 = vmatprep.subr.bf16.mxu0 %v470
    %590 = vmatpush1.bf16.msra.mxu0 %v469
    %591 = vmatprep.subr.bf16.mxu0 %v474
    %592 = vmatpush1.bf16.msra.mxu0 %v473
    %593 = vmatprep.subr.bf16.mxu0 %v478
    %594 = vmatpush1.bf16.msra.mxu0 %v477
    %595 = vmatprep.subr.bf16.mxu0 %v482
    %596 = vmatpush1.bf16.msra.mxu0 %v481
    %597 = vmatprep.subr.bf16.mxu0 %v486
    %598 = vmatpush1.bf16.msra.mxu0 %v485
    %599 = vmatprep.subr.bf16.mxu0 %v490
    %600 = vmatpush1.bf16.msra.mxu0 %v489
    %601 = vmatprep.subr.bf16.mxu0 %v494
    %602 = vmatpush1.bf16.msra.mxu0 %v493
    %603 = vmatprep.subr.bf16.mxu0 %v498
    %604 = vmatpush1.bf16.msra.mxu0 %v497
    %605 = vmatprep.subr.bf16.mxu0 %v502
    %606 = vmatpush1.bf16.msra.mxu0 %v501
    %607 = vmatprep.subr.bf16.mxu0 %v506
    %608 = vmatpush1.bf16.msra.mxu0 %v505
    %609 = vmatprep.subr.bf16.mxu0 %v510
    %610 = vmatpush1.bf16.msra.mxu0 %v509
    %611 = vmatprep.subr.bf16.mxu0 %v514
    %612 = vmatpush1.bf16.msra.mxu0 %v513
    %613 = vmatprep.subr.bf16.mxu0 %v518
    %614 = vmatpush1.bf16.msra.mxu0 %v517
    %615 = vmatprep.subr.bf16.mxu0 %v522
    %616 = vmatpush1.bf16.msra.mxu0 %v521
    %617 = vmatprep.mubr.bf16.mxu0 %v458
    %618 = vmatmul.mubr.bf16.gmra.mrb[0].mxu0 %v457
    %v619 = vpop.f32.mrb[0].mxu0
    %v620 = vadd.f32 %v535, %v619
    %v621 = vpop.f32.mrb[0].mxu0
    %v622 = vadd.f32 %v539, %v621
    %v623 = vpop.f32.mrb[0].mxu0
    %v624 = vpop.f32.mrb[0].mxu0
    %625 = vdwg.mxu0
    %v626 = vrot.slane %v579, 4
    %v627 = vadd.f32 %v579, %v626
    %v628 = vrot.slane %v627, 2
    %v629 = vadd.f32 %v627, %v628
    %v630 = vrot.slane %v629, 1
    %v631 = vadd.f32 %v629, %v630
    %v632 = vrot.slane %v581, 4
    %v633 = vadd.f32 %v581, %v632
    %v634 = vrot.slane %v633, 2
    %v635 = vadd.f32 %v633, %v634
    %v636 = vrot.slane %v635, 1
    %v637 = vadd.f32 %v635, %v636
    %v638 = vrot.slane %v620, 4
    %v639 = vadd.f32 %v620, %v638
    %v640 = vrot.slane %v639, 2
    %v641 = vadd.f32 %v639, %v640
    %v642 = vrot.slane %v641, 1
    %v643 = vadd.f32 %v641, %v642
    %v644 = vrot.slane %v622, 4
    %v645 = vadd.f32 %v622, %v644
    %v646 = vrot.slane %v645, 2
    %v647 = vadd.f32 %v645, %v646
    %v648 = vrot.slane %v647, 1
    %v649 = vadd.f32 %v647, %v648
    %v650 = vmul.f32 %v579, %v579
    %v651 = vmul.f32 %v581, %v581
    %v652 = vmul.f32 %v620, %v620
    %v653 = vmul.f32 %v622, %v622
    %v654 = vrot.slane %v650, 4
    %v655 = vadd.f32 %v650, %v654
    %v656 = vrot.slane %v655, 2
    %v657 = vadd.f32 %v655, %v656
    %v658 = vrot.slane %v657, 1
    %v659 = vadd.f32 %v657, %v658
    %v660 = vrot.slane %v651, 4
    %v661 = vadd.f32 %v651, %v660
    %v662 = vrot.slane %v661, 2
    %v663 = vadd.f32 %v661, %v662
    %v664 = vrot.slane %v663, 1
    %v665 = vadd.f32 %v663, %v664
    %v666 = vrot.slane %v652, 4
    %v667 = vadd.f32 %v652, %v666
    %v668 = vrot.slane %v667, 2
    %v669 = vadd.f32 %v667, %v668
    %v670 = vrot.slane %v669, 1
    %v671 = vadd.f32 %v669, %v670
    %v672 = vrot.slane %v653, 4
    %v673 = vadd.f32 %v653, %v672
    %v674 = vrot.slane %v673, 2
    %v675 = vadd.f32 %v673, %v674
    %v676 = vrot.slane %v675, 1
    %v677 = vadd.f32 %v675, %v676
    %v678 = vmul.f32 %v631, 0.125
    %v679 = vmul.f32 %v637, 0.125
    %v680 = vmul.f32 %v643, 0.125
    %v681 = vmul.f32 %v649, 0.125
    %v682 = vmul.f32 %v659, 0.125
    %v683 = vmul.f32 %v665, 0.125
    %v684 = vmul.f32 %v671, 0.125
    %v685 = vmul.f32 %v677, 0.125
    %v686 = vmul.f32 %v678, %v678
    %v687 = vmul.f32 %v679, %v679
    %v688 = vmul.f32 %v680, %v680
    %v689 = vmul.f32 %v681, %v681
    %v690 = vsub.f32 %v682, %v686
    %v691 = vsub.f32 %v683, %v687
    %v692 = vsub.f32 %v684, %v688
    %v693 = vsub.f32 %v685, %v689
    %v694 = vmax.f32 %v690, 0.0
    %v695 = vmax.f32 %v691, 0.0
    %v696 = vmax.f32 %v692, 0.0
    %v697 = vmax.f32 %v693, 0.0
    %v698 = vadd.f32 %v694, 0.8
    %v699 = vadd.f32 %v695, 0.8
    %v700 = vadd.f32 %v696, 0.8
    %v701 = vadd.f32 %v697, 0.8
    %v702 = vrsqrt.pop %v698
    %v703 = vrsqrt.pop %v699
    %v704 = vrsqrt.pop %v700
    %v705 = vrsqrt.pop %v701
    %v710 = vcombine.low %v702, %v703
    %v711 = vcombine.low %v704, %v705
    %v713 = vunpack.c.l.s4 1966171168
    %v714 = vunpack.c.0.s8 %v713
    %v715 = vlaneseq
    %v716 = vshrl.u32 %v715, 7
    %v717 = vsub.s32 %v714, %v716
    %v718 = vrot.slane %v710, %v717
    %v720 = vunpack.c.l.s4 1966171168
    %v721 = vunpack.c.0.s8 %v720
    %v722 = vlaneseq
    %v723 = vshrl.u32 %v722, 7
    %v724 = vsub.s32 %v721, %v723
    %v725 = vrot.slane %v711, %v724
    %v726 = vcombine.low %v718, %v725
    %v728 = vunpack.c.l.s4 1966171168
    %v729 = vunpack.c.0.s8 %v728
    %v730 = vlaneseq
    %v731 = vshrl.u32 %v730, 7
    %v732 = vsub.s32 %v729, %v731
    %v733 = vrot.slane %v726, %v732
    %v735 = vmul.f32 %v193, %v733
    %v737 = vlaneseq
    %v738 = vshrl.u32 %v737, 7
    %v739 = vsub.s32 0, %v738
    %v740 = vrot.slane %v735, %v739
    %v741 = vlaneseq
    %v742 = vshrl.u32 %v741, 7
    %v743 = vsub.s32 1, %v742
    %v744 = vrot.slane %v735, %v743
    %v745 = vlaneseq
    %v746 = vshrl.u32 %v745, 7
    %v747 = vsub.s32 2, %v746
    %v748 = vrot.slane %v735, %v747
    %v749 = vlaneseq
    %v750 = vshrl.u32 %v749, 7
    %v751 = vsub.s32 3, %v750
    %v752 = vrot.slane %v735, %v751
    %v757 = vmul.f32 %v678, %v740
    %v758 = vmul.f32 %v679, %v744
    %v759 = vmul.f32 %v680, %v748
    %v760 = vmul.f32 %v681, %v752
    %v765 = vcombine.low %v757, %v758
    %v766 = vcombine.low %v759, %v760
    %v768 = vunpack.c.l.s4 1966171168
    %v769 = vunpack.c.0.s8 %v768
    %v770 = vlaneseq
    %v771 = vshrl.u32 %v770, 7
    %v772 = vsub.s32 %v769, %v771
    %v773 = vrot.slane %v765, %v772
    %v775 = vunpack.c.l.s4 1966171168
    %v776 = vunpack.c.0.s8 %v775
    %v777 = vlaneseq
    %v778 = vshrl.u32 %v777, 7
    %v779 = vsub.s32 %v776, %v778
    %v780 = vrot.slane %v766, %v779
    %v781 = vcombine.low %v773, %v780
    %v783 = vunpack.c.l.s4 1966171168
    %v784 = vunpack.c.0.s8 %v783
    %v785 = vlaneseq
    %v786 = vshrl.u32 %v785, 7
    %v787 = vsub.s32 %v784, %v786
    %v788 = vrot.slane %v781, %v787
    %v790 = vsub.f32 %v195, %v788
    %v791 = vmul.f32 %v579, %v740
    %v792 = vmul.f32 %v581, %v744
    %v793 = vmul.f32 %v620, %v748
    %v794 = vmul.f32 %v622, %v752
    %v796 = vlaneseq
    %v797 = vshrl.u32 %v796, 7
    %v798 = vsub.s32 0, %v797
    %v799 = vrot.slane %v790, %v798
    %v800 = vlaneseq
    %v801 = vshrl.u32 %v800, 7
    %v802 = vsub.s32 1, %v801
    %v803 = vrot.slane %v790, %v802
    %v804 = vlaneseq
    %v805 = vshrl.u32 %v804, 7
    %v806 = vsub.s32 2, %v805
    %v807 = vrot.slane %v790, %v806
    %v808 = vlaneseq
    %v809 = vshrl.u32 %v808, 7
    %v810 = vsub.s32 3, %v809
    %v811 = vrot.slane %v790, %v810
    %v816 = vadd.f32 %v791, %v799
    %v817 = vadd.f32 %v792, %v803
    %v818 = vadd.f32 %v793, %v807
    %v819 = vadd.f32 %v794, %v811
    %vm820 = vcmp.gt.f32.partialorder %v816, 0.0
    %vm821 = vcmp.gt.f32.partialorder %v817, 0.0
    %vm822 = vcmp.gt.f32.partialorder %v818, 0.0
    %vm823 = vcmp.gt.f32.partialorder %v819, 0.0
    %v824 = vmul.f32 %v816, 0.2
    %v825 = vmul.f32 %v817, 0.2
    %v826 = vmul.f32 %v818, 0.2
    %v827 = vmul.f32 %v819, 0.2
    %v828 = vsel %vm820, %v816, %v824
    %v829 = vsel %vm821, %v817, %v825
    %v830 = vsel %vm822, %v818, %v826
    %v831 = vsel %vm823, %v819, %v827
    %s832 = smul.u32 4, 64
    %s833 = smul.u32 %s832, 8
    %s834 = sshll.u32 %s833, 4
    %835 = dma.done %s113, %s834
    %v836 = vpack.c.bf16 %v828, %v828
    %v837 = vpack.c.bf16 %v829, %v829
    %v838 = vpack.c.bf16 %v830, %v830
    %v839 = vpack.c.bf16 %v831, %v831
    %v840 = vld [vmem:[#allocation5] sm:$0xff]
    %v841 = vld [vmem:[#allocation5 + $0x8] sm:$0xff]
    %v842 = vld [vmem:[#allocation5 + $0x10] sm:$0xff]
    %v843 = vld [vmem:[#allocation5 + $0x18] sm:$0xff]
    %v844 = vld [vmem:[#allocation5 + $0x20] sm:$0xff]
    %v845 = vld [vmem:[#allocation5 + $0x28] sm:$0xff]
    %v846 = vld [vmem:[#allocation5 + $0x30] sm:$0xff]
    %v847 = vld [vmem:[#allocation5 + $0x38] sm:$0xff]
    %v848 = vld [vmem:[#allocation5 + $0x40] sm:$0xff]
    %v849 = vld [vmem:[#allocation5 + $0x48] sm:$0xff]
    %v850 = vld [vmem:[#allocation5 + $0x50] sm:$0xff]
    %v851 = vld [vmem:[#allocation5 + $0x58] sm:$0xff]
    %v852 = vld [vmem:[#allocation5 + $0x60] sm:$0xff]
    %v853 = vld [vmem:[#allocation5 + $0x68] sm:$0xff]
    %v854 = vld [vmem:[#allocation5 + $0x70] sm:$0xff]
    %v855 = vld [vmem:[#allocation5 + $0x78] sm:$0xff]
    %v856 = vld [vmem:[#allocation5 + $0x80] sm:$0xff]
    %v857 = vld [vmem:[#allocation5 + $0x88] sm:$0xff]
    %v858 = vld [vmem:[#allocation5 + $0x90] sm:$0xff]
    %v859 = vld [vmem:[#allocation5 + $0x98] sm:$0xff]
    %v860 = vld [vmem:[#allocation5 + $0xa0] sm:$0xff]
    %v861 = vld [vmem:[#allocation5 + $0xa8] sm:$0xff]
    %v862 = vld [vmem:[#allocation5 + $0xb0] sm:$0xff]
    %v863 = vld [vmem:[#allocation5 + $0xb8] sm:$0xff]
    %v864 = vld [vmem:[#allocation5 + $0xc0] sm:$0xff]
    %v865 = vld [vmem:[#allocation5 + $0xc8] sm:$0xff]
    %v866 = vld [vmem:[#allocation5 + $0xd0] sm:$0xff]
    %v867 = vld [vmem:[#allocation5 + $0xd8] sm:$0xff]
    %v868 = vld [vmem:[#allocation5 + $0xe0] sm:$0xff]
    %v869 = vld [vmem:[#allocation5 + $0xe8] sm:$0xff]
    %v870 = vld [vmem:[#allocation5 + $0xf0] sm:$0xff]
    %v871 = vld [vmem:[#allocation5 + $0xf8] sm:$0xff]
    %v872 = vld [vmem:[#allocation5 + $0x100] sm:$0xff]
    %v873 = vld [vmem:[#allocation5 + $0x108] sm:$0xff]
    %v874 = vld [vmem:[#allocation5 + $0x110] sm:$0xff]
    %v875 = vld [vmem:[#allocation5 + $0x118] sm:$0xff]
    %v876 = vld [vmem:[#allocation5 + $0x120] sm:$0xff]
    %v877 = vld [vmem:[#allocation5 + $0x128] sm:$0xff]
    %v878 = vld [vmem:[#allocation5 + $0x130] sm:$0xff]
    %v879 = vld [vmem:[#allocation5 + $0x138] sm:$0xff]
    %v880 = vld [vmem:[#allocation5 + $0x140] sm:$0xff]
    %v881 = vld [vmem:[#allocation5 + $0x148] sm:$0xff]
    %v882 = vld [vmem:[#allocation5 + $0x150] sm:$0xff]
    %v883 = vld [vmem:[#allocation5 + $0x158] sm:$0xff]
    %v884 = vld [vmem:[#allocation5 + $0x160] sm:$0xff]
    %v885 = vld [vmem:[#allocation5 + $0x168] sm:$0xff]
    %v886 = vld [vmem:[#allocation5 + $0x170] sm:$0xff]
    %v887 = vld [vmem:[#allocation5 + $0x178] sm:$0xff]
    %v888 = vld [vmem:[#allocation5 + $0x180] sm:$0xff]
    %v889 = vld [vmem:[#allocation5 + $0x188] sm:$0xff]
    %v890 = vld [vmem:[#allocation5 + $0x190] sm:$0xff]
    %v891 = vld [vmem:[#allocation5 + $0x198] sm:$0xff]
    %v892 = vld [vmem:[#allocation5 + $0x1a0] sm:$0xff]
    %v893 = vld [vmem:[#allocation5 + $0x1a8] sm:$0xff]
    %v894 = vld [vmem:[#allocation5 + $0x1b0] sm:$0xff]
    %v895 = vld [vmem:[#allocation5 + $0x1b8] sm:$0xff]
    %v896 = vld [vmem:[#allocation5 + $0x1c0] sm:$0xff]
    %v897 = vld [vmem:[#allocation5 + $0x1c8] sm:$0xff]
    %v898 = vld [vmem:[#allocation5 + $0x1d0] sm:$0xff]
    %v899 = vld [vmem:[#allocation5 + $0x1d8] sm:$0xff]
    %v900 = vld [vmem:[#allocation5 + $0x1e0] sm:$0xff]
    %v901 = vld [vmem:[#allocation5 + $0x1e8] sm:$0xff]
    %v902 = vld [vmem:[#allocation5 + $0x1f0] sm:$0xff]
    %v903 = vld [vmem:[#allocation5 + $0x1f8] sm:$0xff]
    %v904 = vld [vmem:[#allocation5 + $0x200] sm:$0xff]
    %v905 = vld [vmem:[#allocation5 + $0x208] sm:$0xff]
    %v906 = vld [vmem:[#allocation5 + $0x210] sm:$0xff]
    %v907 = vld [vmem:[#allocation5 + $0x218] sm:$0xff]
    %v908 = vld [vmem:[#allocation5 + $0x220] sm:$0xff]
    %v909 = vld [vmem:[#allocation5 + $0x228] sm:$0xff]
    %v910 = vld [vmem:[#allocation5 + $0x230] sm:$0xff]
    %v911 = vld [vmem:[#allocation5 + $0x238] sm:$0xff]
    %v912 = vld [vmem:[#allocation5 + $0x240] sm:$0xff]
    %v913 = vld [vmem:[#allocation5 + $0x248] sm:$0xff]
    %v914 = vld [vmem:[#allocation5 + $0x250] sm:$0xff]
    %v915 = vld [vmem:[#allocation5 + $0x258] sm:$0xff]
    %v916 = vld [vmem:[#allocation5 + $0x260] sm:$0xff]
    %v917 = vld [vmem:[#allocation5 + $0x268] sm:$0xff]
    %v918 = vld [vmem:[#allocation5 + $0x270] sm:$0xff]
    %v919 = vld [vmem:[#allocation5 + $0x278] sm:$0xff]
    %v920 = vld [vmem:[#allocation5 + $0x280] sm:$0xff]
    %v921 = vld [vmem:[#allocation5 + $0x288] sm:$0xff]
    %v922 = vld [vmem:[#allocation5 + $0x290] sm:$0xff]
    %v923 = vld [vmem:[#allocation5 + $0x298] sm:$0xff]
    %v924 = vld [vmem:[#allocation5 + $0x2a0] sm:$0xff]
    %v925 = vld [vmem:[#allocation5 + $0x2a8] sm:$0xff]
    %v926 = vld [vmem:[#allocation5 + $0x2b0] sm:$0xff]
    %v927 = vld [vmem:[#allocation5 + $0x2b8] sm:$0xff]
    %v928 = vld [vmem:[#allocation5 + $0x2c0] sm:$0xff]
    %v929 = vld [vmem:[#allocation5 + $0x2c8] sm:$0xff]
    %v930 = vld [vmem:[#allocation5 + $0x2d0] sm:$0xff]
    %v931 = vld [vmem:[#allocation5 + $0x2d8] sm:$0xff]
    %v932 = vld [vmem:[#allocation5 + $0x2e0] sm:$0xff]
    %v933 = vld [vmem:[#allocation5 + $0x2e8] sm:$0xff]
    %v934 = vld [vmem:[#allocation5 + $0x2f0] sm:$0xff]
    %v935 = vld [vmem:[#allocation5 + $0x2f8] sm:$0xff]
    %v936 = vld [vmem:[#allocation5 + $0x300] sm:$0xff]
    %v937 = vld [vmem:[#allocation5 + $0x308] sm:$0xff]
    %v938 = vld [vmem:[#allocation5 + $0x310] sm:$0xff]
    %v939 = vld [vmem:[#allocation5 + $0x318] sm:$0xff]
    %v940 = vld [vmem:[#allocation5 + $0x320] sm:$0xff]
    %v941 = vld [vmem:[#allocation5 + $0x328] sm:$0xff]
    %v942 = vld [vmem:[#allocation5 + $0x330] sm:$0xff]
    %v943 = vld [vmem:[#allocation5 + $0x338] sm:$0xff]
    %v944 = vld [vmem:[#allocation5 + $0x340] sm:$0xff]
    %v945 = vld [vmem:[#allocation5 + $0x348] sm:$0xff]
    %v946 = vld [vmem:[#allocation5 + $0x350] sm:$0xff]
    %v947 = vld [vmem:[#allocation5 + $0x358] sm:$0xff]
    %v948 = vld [vmem:[#allocation5 + $0x360] sm:$0xff]
    %v949 = vld [vmem:[#allocation5 + $0x368] sm:$0xff]
    %v950 = vld [vmem:[#allocation5 + $0x370] sm:$0xff]
    %v951 = vld [vmem:[#allocation5 + $0x378] sm:$0xff]
    %v952 = vld [vmem:[#allocation5 + $0x380] sm:$0xff]
    %v953 = vld [vmem:[#allocation5 + $0x388] sm:$0xff]
    %v954 = vld [vmem:[#allocation5 + $0x390] sm:$0xff]
    %v955 = vld [vmem:[#allocation5 + $0x398] sm:$0xff]
    %v956 = vld [vmem:[#allocation5 + $0x3a0] sm:$0xff]
    %v957 = vld [vmem:[#allocation5 + $0x3a8] sm:$0xff]
    %v958 = vld [vmem:[#allocation5 + $0x3b0] sm:$0xff]
    %v959 = vld [vmem:[#allocation5 + $0x3b8] sm:$0xff]
    %v960 = vld [vmem:[#allocation5 + $0x3c0] sm:$0xff]
    %v961 = vld [vmem:[#allocation5 + $0x3c8] sm:$0xff]
    %v962 = vld [vmem:[#allocation5 + $0x3d0] sm:$0xff]
    %v963 = vld [vmem:[#allocation5 + $0x3d8] sm:$0xff]
    %v964 = vld [vmem:[#allocation5 + $0x3e0] sm:$0xff]
    %v965 = vld [vmem:[#allocation5 + $0x3e8] sm:$0xff]
    %v966 = vld [vmem:[#allocation5 + $0x3f0] sm:$0xff]
    %v967 = vld [vmem:[#allocation5 + $0x3f8] sm:$0xff]
    %v968 = vld [vmem:[#allocation5 + $0x400] sm:$0xff]
    %v969 = vld [vmem:[#allocation5 + $0x408] sm:$0xff]
    %v970 = vld [vmem:[#allocation5 + $0x410] sm:$0xff]
    %v971 = vld [vmem:[#allocation5 + $0x418] sm:$0xff]
    %v972 = vld [vmem:[#allocation5 + $0x420] sm:$0xff]
    %v973 = vld [vmem:[#allocation5 + $0x428] sm:$0xff]
    %v974 = vld [vmem:[#allocation5 + $0x430] sm:$0xff]
    %v975 = vld [vmem:[#allocation5 + $0x438] sm:$0xff]
    %v976 = vld [vmem:[#allocation5 + $0x440] sm:$0xff]
    %v977 = vld [vmem:[#allocation5 + $0x448] sm:$0xff]
    %v978 = vld [vmem:[#allocation5 + $0x450] sm:$0xff]
    %v979 = vld [vmem:[#allocation5 + $0x458] sm:$0xff]
    %v980 = vld [vmem:[#allocation5 + $0x460] sm:$0xff]
    %v981 = vld [vmem:[#allocation5 + $0x468] sm:$0xff]
    %v982 = vld [vmem:[#allocation5 + $0x470] sm:$0xff]
    %v983 = vld [vmem:[#allocation5 + $0x478] sm:$0xff]
    %v984 = vld [vmem:[#allocation5 + $0x480] sm:$0xff]
    %v985 = vld [vmem:[#allocation5 + $0x488] sm:$0xff]
    %v986 = vld [vmem:[#allocation5 + $0x490] sm:$0xff]
    %v987 = vld [vmem:[#allocation5 + $0x498] sm:$0xff]
    %v988 = vld [vmem:[#allocation5 + $0x4a0] sm:$0xff]
    %v989 = vld [vmem:[#allocation5 + $0x4a8] sm:$0xff]
    %v990 = vld [vmem:[#allocation5 + $0x4b0] sm:$0xff]
    %v991 = vld [vmem:[#allocation5 + $0x4b8] sm:$0xff]
    %v992 = vld [vmem:[#allocation5 + $0x4c0] sm:$0xff]
    %v993 = vld [vmem:[#allocation5 + $0x4c8] sm:$0xff]
    %v994 = vld [vmem:[#allocation5 + $0x4d0] sm:$0xff]
    %v995 = vld [vmem:[#allocation5 + $0x4d8] sm:$0xff]
    %v996 = vld [vmem:[#allocation5 + $0x4e0] sm:$0xff]
    %v997 = vld [vmem:[#allocation5 + $0x4e8] sm:$0xff]
    %v998 = vld [vmem:[#allocation5 + $0x4f0] sm:$0xff]
    %v999 = vld [vmem:[#allocation5 + $0x4f8] sm:$0xff]
    %v1000 = vld [vmem:[#allocation5 + $0x500] sm:$0xff]
    %v1001 = vld [vmem:[#allocation5 + $0x508] sm:$0xff]
    %v1002 = vld [vmem:[#allocation5 + $0x510] sm:$0xff]
    %v1003 = vld [vmem:[#allocation5 + $0x518] sm:$0xff]
    %v1004 = vld [vmem:[#allocation5 + $0x520] sm:$0xff]
    %v1005 = vld [vmem:[#allocation5 + $0x528] sm:$0xff]
    %v1006 = vld [vmem:[#allocation5 + $0x530] sm:$0xff]
    %v1007 = vld [vmem:[#allocation5 + $0x538] sm:$0xff]
    %v1008 = vld [vmem:[#allocation5 + $0x540] sm:$0xff]
    %v1009 = vld [vmem:[#allocation5 + $0x548] sm:$0xff]
    %v1010 = vld [vmem:[#allocation5 + $0x550] sm:$0xff]
    %v1011 = vld [vmem:[#allocation5 + $0x558] sm:$0xff]
    %v1012 = vld [vmem:[#allocation5 + $0x560] sm:$0xff]
    %v1013 = vld [vmem:[#allocation5 + $0x568] sm:$0xff]
    %v1014 = vld [vmem:[#allocation5 + $0x570] sm:$0xff]
    %v1015 = vld [vmem:[#allocation5 + $0x578] sm:$0xff]
    %v1016 = vld [vmem:[#allocation5 + $0x580] sm:$0xff]
    %v1017 = vld [vmem:[#allocation5 + $0x588] sm:$0xff]
    %v1018 = vld [vmem:[#allocation5 + $0x590] sm:$0xff]
    %v1019 = vld [vmem:[#allocation5 + $0x598] sm:$0xff]
    %v1020 = vld [vmem:[#allocation5 + $0x5a0] sm:$0xff]
    %v1021 = vld [vmem:[#allocation5 + $0x5a8] sm:$0xff]
    %v1022 = vld [vmem:[#allocation5 + $0x5b0] sm:$0xff]
    %v1023 = vld [vmem:[#allocation5 + $0x5b8] sm:$0xff]
    %v1024 = vld [vmem:[#allocation5 + $0x5c0] sm:$0xff]
    %v1025 = vld [vmem:[#allocation5 + $0x5c8] sm:$0xff]
    %v1026 = vld [vmem:[#allocation5 + $0x5d0] sm:$0xff]
    %v1027 = vld [vmem:[#allocation5 + $0x5d8] sm:$0xff]
    %v1028 = vld [vmem:[#allocation5 + $0x5e0] sm:$0xff]
    %v1029 = vld [vmem:[#allocation5 + $0x5e8] sm:$0xff]
    %v1030 = vld [vmem:[#allocation5 + $0x5f0] sm:$0xff]
    %v1031 = vld [vmem:[#allocation5 + $0x5f8] sm:$0xff]
    %v1032 = vld [vmem:[#allocation5 + $0x600] sm:$0xff]
    %v1033 = vld [vmem:[#allocation5 + $0x608] sm:$0xff]
    %v1034 = vld [vmem:[#allocation5 + $0x610] sm:$0xff]
    %v1035 = vld [vmem:[#allocation5 + $0x618] sm:$0xff]
    %v1036 = vld [vmem:[#allocation5 + $0x620] sm:$0xff]
    %v1037 = vld [vmem:[#allocation5 + $0x628] sm:$0xff]
    %v1038 = vld [vmem:[#allocation5 + $0x630] sm:$0xff]
    %v1039 = vld [vmem:[#allocation5 + $0x638] sm:$0xff]
    %v1040 = vld [vmem:[#allocation5 + $0x640] sm:$0xff]
    %v1041 = vld [vmem:[#allocation5 + $0x648] sm:$0xff]
    %v1042 = vld [vmem:[#allocation5 + $0x650] sm:$0xff]
    %v1043 = vld [vmem:[#allocation5 + $0x658] sm:$0xff]
    %v1044 = vld [vmem:[#allocation5 + $0x660] sm:$0xff]
    %v1045 = vld [vmem:[#allocation5 + $0x668] sm:$0xff]
    %v1046 = vld [vmem:[#allocation5 + $0x670] sm:$0xff]
    %v1047 = vld [vmem:[#allocation5 + $0x678] sm:$0xff]
    %v1048 = vld [vmem:[#allocation5 + $0x680] sm:$0xff]
    %v1049 = vld [vmem:[#allocation5 + $0x688] sm:$0xff]
    %v1050 = vld [vmem:[#allocation5 + $0x690] sm:$0xff]
    %v1051 = vld [vmem:[#allocation5 + $0x698] sm:$0xff]
    %v1052 = vld [vmem:[#allocation5 + $0x6a0] sm:$0xff]
    %v1053 = vld [vmem:[#allocation5 + $0x6a8] sm:$0xff]
    %v1054 = vld [vmem:[#allocation5 + $0x6b0] sm:$0xff]
    %v1055 = vld [vmem:[#allocation5 + $0x6b8] sm:$0xff]
    %v1056 = vld [vmem:[#allocation5 + $0x6c0] sm:$0xff]
    %v1057 = vld [vmem:[#allocation5 + $0x6c8] sm:$0xff]
    %v1058 = vld [vmem:[#allocation5 + $0x6d0] sm:$0xff]
    %v1059 = vld [vmem:[#allocation5 + $0x6d8] sm:$0xff]
    %v1060 = vld [vmem:[#allocation5 + $0x6e0] sm:$0xff]
    %v1061 = vld [vmem:[#allocation5 + $0x6e8] sm:$0xff]
    %v1062 = vld [vmem:[#allocation5 + $0x6f0] sm:$0xff]
    %v1063 = vld [vmem:[#allocation5 + $0x6f8] sm:$0xff]
    %v1064 = vld [vmem:[#allocation5 + $0x700] sm:$0xff]
    %v1065 = vld [vmem:[#allocation5 + $0x708] sm:$0xff]
    %v1066 = vld [vmem:[#allocation5 + $0x710] sm:$0xff]
    %v1067 = vld [vmem:[#allocation5 + $0x718] sm:$0xff]
    %v1068 = vld [vmem:[#allocation5 + $0x720] sm:$0xff]
    %v1069 = vld [vmem:[#allocation5 + $0x728] sm:$0xff]
    %v1070 = vld [vmem:[#allocation5 + $0x730] sm:$0xff]
    %v1071 = vld [vmem:[#allocation5 + $0x738] sm:$0xff]
    %v1072 = vld [vmem:[#allocation5 + $0x740] sm:$0xff]
    %v1073 = vld [vmem:[#allocation5 + $0x748] sm:$0xff]
    %v1074 = vld [vmem:[#allocation5 + $0x750] sm:$0xff]
    %v1075 = vld [vmem:[#allocation5 + $0x758] sm:$0xff]
    %v1076 = vld [vmem:[#allocation5 + $0x760] sm:$0xff]
    %v1077 = vld [vmem:[#allocation5 + $0x768] sm:$0xff]
    %v1078 = vld [vmem:[#allocation5 + $0x770] sm:$0xff]
    %v1079 = vld [vmem:[#allocation5 + $0x778] sm:$0xff]
    %v1080 = vld [vmem:[#allocation5 + $0x780] sm:$0xff]
    %v1081 = vld [vmem:[#allocation5 + $0x788] sm:$0xff]
    %v1082 = vld [vmem:[#allocation5 + $0x790] sm:$0xff]
    %v1083 = vld [vmem:[#allocation5 + $0x798] sm:$0xff]
    %v1084 = vld [vmem:[#allocation5 + $0x7a0] sm:$0xff]
    %v1085 = vld [vmem:[#allocation5 + $0x7a8] sm:$0xff]
    %v1086 = vld [vmem:[#allocation5 + $0x7b0] sm:$0xff]
    %v1087 = vld [vmem:[#allocation5 + $0x7b8] sm:$0xff]
    %v1088 = vld [vmem:[#allocation5 + $0x7c0] sm:$0xff]
    %v1089 = vld [vmem:[#allocation5 + $0x7c8] sm:$0xff]
    %v1090 = vld [vmem:[#allocation5 + $0x7d0] sm:$0xff]
    %v1091 = vld [vmem:[#allocation5 + $0x7d8] sm:$0xff]
    %v1092 = vld [vmem:[#allocation5 + $0x7e0] sm:$0xff]
    %v1093 = vld [vmem:[#allocation5 + $0x7e8] sm:$0xff]
    %v1094 = vld [vmem:[#allocation5 + $0x7f0] sm:$0xff]
    %v1095 = vld [vmem:[#allocation5 + $0x7f8] sm:$0xff]
    %v1097 = vlaneseq
    %v1098 = vshrl.u32 %v1097, 7
    %v1099 = vsub.s32 0, %v1098
    %v1100 = vrot.slane %v199, %v1099
    %v1101 = vlaneseq
    %v1102 = vshrl.u32 %v1101, 7
    %v1103 = vsub.s32 1, %v1102
    %v1104 = vrot.slane %v199, %v1103
    %v1105 = vlaneseq
    %v1106 = vshrl.u32 %v1105, 7
    %v1107 = vsub.s32 2, %v1106
    %v1108 = vrot.slane %v199, %v1107
    %v1109 = vlaneseq
    %v1110 = vshrl.u32 %v1109, 7
    %v1111 = vsub.s32 3, %v1110
    %v1112 = vrot.slane %v199, %v1111
    %v1113 = vlaneseq
    %v1114 = vshrl.u32 %v1113, 7
    %v1115 = vsub.s32 4, %v1114
    %v1116 = vrot.slane %v199, %v1115
    %v1117 = vlaneseq
    %v1118 = vshrl.u32 %v1117, 7
    %v1119 = vsub.s32 5, %v1118
    %v1120 = vrot.slane %v199, %v1119
    %v1121 = vlaneseq
    %v1122 = vshrl.u32 %v1121, 7
    %v1123 = vsub.s32 6, %v1122
    %v1124 = vrot.slane %v199, %v1123
    %v1125 = vlaneseq
    %v1126 = vshrl.u32 %v1125, 7
    %v1127 = vsub.s32 7, %v1126
    %v1128 = vrot.slane %v199, %v1127
    %1137 = vmatprep.subr.bf16.mxu0 %v841
    %1138 = vmatpush1.bf16.msra.mxu0 %v840
    %1139 = vmatprep.subr.bf16.mxu0 %v849
    %1140 = vmatpush1.bf16.msra.mxu0 %v848
    %1141 = vmatprep.subr.bf16.mxu0 %v857
    %1142 = vmatpush1.bf16.msra.mxu0 %v856
    %1143 = vmatprep.subr.bf16.mxu0 %v865
    %1144 = vmatpush1.bf16.msra.mxu0 %v864
    %1145 = vmatprep.subr.bf16.mxu0 %v873
    %1146 = vmatpush1.bf16.msra.mxu0 %v872
    %1147 = vmatprep.subr.bf16.mxu0 %v881
    %1148 = vmatpush1.bf16.msra.mxu0 %v880
    %1149 = vmatprep.subr.bf16.mxu0 %v889
    %1150 = vmatpush1.bf16.msra.mxu0 %v888
    %1151 = vmatprep.subr.bf16.mxu0 %v897
    %1152 = vmatpush1.bf16.msra.mxu0 %v896
    %1153 = vmatprep.subr.bf16.mxu0 %v905
    %1154 = vmatpush1.bf16.msra.mxu0 %v904
    %1155 = vmatprep.subr.bf16.mxu0 %v913
    %1156 = vmatpush1.bf16.msra.mxu0 %v912
    %1157 = vmatprep.subr.bf16.mxu0 %v921
    %1158 = vmatpush1.bf16.msra.mxu0 %v920
    %1159 = vmatprep.subr.bf16.mxu0 %v929
    %1160 = vmatpush1.bf16.msra.mxu0 %v928
    %1161 = vmatprep.subr.bf16.mxu0 %v937
    %1162 = vmatpush1.bf16.msra.mxu0 %v936
    %1163 = vmatprep.subr.bf16.mxu0 %v945
    %1164 = vmatpush1.bf16.msra.mxu0 %v944
    %1165 = vmatprep.subr.bf16.mxu0 %v953
    %1166 = vmatpush1.bf16.msra.mxu0 %v952
    %1167 = vmatprep.subr.bf16.mxu0 %v961
    %1168 = vmatpush1.bf16.msra.mxu0 %v960
    %1169 = vmatprep.mubr.bf16.mxu0 %v837
    %1170 = vmatmul.mubr.bf16.gmra.mrb[0].mxu0 %v836
    %v1171 = vpop.f32.mrb[0].mxu0
    %v1172 = vadd.f32 %v1100, %v1171
    %v1173 = vpop.f32.mrb[0].mxu0
    %v1174 = vadd.f32 %v1104, %v1173
    %v1175 = vpop.f32.mrb[0].mxu0
    %v1176 = vpop.f32.mrb[0].mxu0
    %1177 = vdwg.mxu0
    %1178 = vmatprep.subr.bf16.mxu0 %v969
    %1179 = vmatpush1.bf16.msra.mxu0 %v968
    %1180 = vmatprep.subr.bf16.mxu0 %v977
    %1181 = vmatpush1.bf16.msra.mxu0 %v976
    %1182 = vmatprep.subr.bf16.mxu0 %v985
    %1183 = vmatpush1.bf16.msra.mxu0 %v984
    %1184 = vmatprep.subr.bf16.mxu0 %v993
    %1185 = vmatpush1.bf16.msra.mxu0 %v992
    %1186 = vmatprep.subr.bf16.mxu0 %v1001
    %1187 = vmatpush1.bf16.msra.mxu0 %v1000
    %1188 = vmatprep.subr.bf16.mxu0 %v1009
    %1189 = vmatpush1.bf16.msra.mxu0 %v1008
    %1190 = vmatprep.subr.bf16.mxu0 %v1017
    %1191 = vmatpush1.bf16.msra.mxu0 %v1016
    %1192 = vmatprep.subr.bf16.mxu0 %v1025
    %1193 = vmatpush1.bf16.msra.mxu0 %v1024
    %1194 = vmatprep.subr.bf16.mxu0 %v1033
    %1195 = vmatpush1.bf16.msra.mxu0 %v1032
    %1196 = vmatprep.subr.bf16.mxu0 %v1041
    %1197 = vmatpush1.bf16.msra.mxu0 %v1040
    %1198 = vmatprep.subr.bf16.mxu0 %v1049
    %1199 = vmatpush1.bf16.msra.mxu0 %v1048
    %1200 = vmatprep.subr.bf16.mxu0 %v1057
    %1201 = vmatpush1.bf16.msra.mxu0 %v1056
    %1202 = vmatprep.subr.bf16.mxu0 %v1065
    %1203 = vmatpush1.bf16.msra.mxu0 %v1064
    %1204 = vmatprep.subr.bf16.mxu0 %v1073
    %1205 = vmatpush1.bf16.msra.mxu0 %v1072
    %1206 = vmatprep.subr.bf16.mxu0 %v1081
    %1207 = vmatpush1.bf16.msra.mxu0 %v1080
    %1208 = vmatprep.subr.bf16.mxu0 %v1089
    %1209 = vmatpush1.bf16.msra.mxu0 %v1088
    %1210 = vmatprep.mubr.bf16.mxu0 %v839
    %1211 = vmatmul.mubr.bf16.gmra.mrb[0].mxu0 %v838
    %v1212 = vpop.f32.mrb[0].mxu0
    %v1213 = vadd.f32 %v1172, %v1212
    %v1214 = vpop.f32.mrb[0].mxu0
    %v1215 = vadd.f32 %v1174, %v1214
    %v1216 = vpop.f32.mrb[0].mxu0
    %v1217 = vpop.f32.mrb[0].mxu0
    %1218 = vdwg.mxu0
    %1219 = vmatprep.subr.bf16.mxu0 %v843
    %1220 = vmatpush1.bf16.msra.mxu0 %v842
    %1221 = vmatprep.subr.bf16.mxu0 %v851
    %1222 = vmatpush1.bf16.msra.mxu0 %v850
    %1223 = vmatprep.subr.bf16.mxu0 %v859
    %1224 = vmatpush1.bf16.msra.mxu0 %v858
    %1225 = vmatprep.subr.bf16.mxu0 %v867
    %1226 = vmatpush1.bf16.msra.mxu0 %v866
    %1227 = vmatprep.subr.bf16.mxu0 %v875
    %1228 = vmatpush1.bf16.msra.mxu0 %v874
    %1229 = vmatprep.subr.bf16.mxu0 %v883
    %1230 = vmatpush1.bf16.msra.mxu0 %v882
    %1231 = vmatprep.subr.bf16.mxu0 %v891
    %1232 = vmatpush1.bf16.msra.mxu0 %v890
    %1233 = vmatprep.subr.bf16.mxu0 %v899
    %1234 = vmatpush1.bf16.msra.mxu0 %v898
    %1235 = vmatprep.subr.bf16.mxu0 %v907
    %1236 = vmatpush1.bf16.msra.mxu0 %v906
    %1237 = vmatprep.subr.bf16.mxu0 %v915
    %1238 = vmatpush1.bf16.msra.mxu0 %v914
    %1239 = vmatprep.subr.bf16.mxu0 %v923
    %1240 = vmatpush1.bf16.msra.mxu0 %v922
    %1241 = vmatprep.subr.bf16.mxu0 %v931
    %1242 = vmatpush1.bf16.msra.mxu0 %v930
    %1243 = vmatprep.subr.bf16.mxu0 %v939
    %1244 = vmatpush1.bf16.msra.mxu0 %v938
    %1245 = vmatprep.subr.bf16.mxu0 %v947
    %1246 = vmatpush1.bf16.msra.mxu0 %v946
    %1247 = vmatprep.subr.bf16.mxu0 %v955
    %1248 = vmatpush1.bf16.msra.mxu0 %v954
    %1249 = vmatprep.subr.bf16.mxu0 %v963
    %1250 = vmatpush1.bf16.msra.mxu0 %v962
    %1251 = vmatprep.mubr.bf16.mxu0 %v837
    %1252 = vmatmul.mubr.bf16.gmra.mrb[0].mxu0 %v836
    %v1253 = vpop.f32.mrb[0].mxu0
    %v1254 = vadd.f32 %v1108, %v1253
    %v1255 = vpop.f32.mrb[0].mxu0
    %v1256 = vadd.f32 %v1112, %v1255
    %v1257 = vpop.f32.mrb[0].mxu0
    %v1258 = vpop.f32.mrb[0].mxu0
    %1259 = vdwg.mxu0
    %1260 = vmatprep.subr.bf16.mxu0 %v971
    %1261 = vmatpush1.bf16.msra.mxu0 %v970
    %1262 = vmatprep.subr.bf16.mxu0 %v979
    %1263 = vmatpush1.bf16.msra.mxu0 %v978
    %1264 = vmatprep.subr.bf16.mxu0 %v987
    %1265 = vmatpush1.bf16.msra.mxu0 %v986
    %1266 = vmatprep.subr.bf16.mxu0 %v995
    %1267 = vmatpush1.bf16.msra.mxu0 %v994
    %1268 = vmatprep.subr.bf16.mxu0 %v1003
    %1269 = vmatpush1.bf16.msra.mxu0 %v1002
    %1270 = vmatprep.subr.bf16.mxu0 %v1011
    %1271 = vmatpush1.bf16.msra.mxu0 %v1010
    %1272 = vmatprep.subr.bf16.mxu0 %v1019
    %1273 = vmatpush1.bf16.msra.mxu0 %v1018
    %1274 = vmatprep.subr.bf16.mxu0 %v1027
    %1275 = vmatpush1.bf16.msra.mxu0 %v1026
    %1276 = vmatprep.subr.bf16.mxu0 %v1035
    %1277 = vmatpush1.bf16.msra.mxu0 %v1034
    %1278 = vmatprep.subr.bf16.mxu0 %v1043
    %1279 = vmatpush1.bf16.msra.mxu0 %v1042
    %1280 = vmatprep.subr.bf16.mxu0 %v1051
    %1281 = vmatpush1.bf16.msra.mxu0 %v1050
    %1282 = vmatprep.subr.bf16.mxu0 %v1059
    %1283 = vmatpush1.bf16.msra.mxu0 %v1058
    %1284 = vmatprep.subr.bf16.mxu0 %v1067
    %1285 = vmatpush1.bf16.msra.mxu0 %v1066
    %1286 = vmatprep.subr.bf16.mxu0 %v1075
    %1287 = vmatpush1.bf16.msra.mxu0 %v1074
    %1288 = vmatprep.subr.bf16.mxu0 %v1083
    %1289 = vmatpush1.bf16.msra.mxu0 %v1082
    %1290 = vmatprep.subr.bf16.mxu0 %v1091
    %1291 = vmatpush1.bf16.msra.mxu0 %v1090
    %1292 = vmatprep.mubr.bf16.mxu0 %v839
    %1293 = vmatmul.mubr.bf16.gmra.mrb[0].mxu0 %v838
    %v1294 = vpop.f32.mrb[0].mxu0
    %v1295 = vadd.f32 %v1254, %v1294
    %v1296 = vpop.f32.mrb[0].mxu0
    %v1297 = vadd.f32 %v1256, %v1296
    %v1298 = vpop.f32.mrb[0].mxu0
    %v1299 = vpop.f32.mrb[0].mxu0
    %1300 = vdwg.mxu0
    %1301 = vmatprep.subr.bf16.mxu0 %v845
    %1302 = vmatpush1.bf16.msra.mxu0 %v844
    %1303 = vmatprep.subr.bf16.mxu0 %v853
    %1304 = vmatpush1.bf16.msra.mxu0 %v852
    %1305 = vmatprep.subr.bf16.mxu0 %v861
    %1306 = vmatpush1.bf16.msra.mxu0 %v860
    %1307 = vmatprep.subr.bf16.mxu0 %v869
    %1308 = vmatpush1.bf16.msra.mxu0 %v868
    %1309 = vmatprep.subr.bf16.mxu0 %v877
    %1310 = vmatpush1.bf16.msra.mxu0 %v876
    %1311 = vmatprep.subr.bf16.mxu0 %v885
    %1312 = vmatpush1.bf16.msra.mxu0 %v884
    %1313 = vmatprep.subr.bf16.mxu0 %v893
    %1314 = vmatpush1.bf16.msra.mxu0 %v892
    %1315 = vmatprep.subr.bf16.mxu0 %v901
    %1316 = vmatpush1.bf16.msra.mxu0 %v900
    %1317 = vmatprep.subr.bf16.mxu0 %v909
    %1318 = vmatpush1.bf16.msra.mxu0 %v908
    %1319 = vmatprep.subr.bf16.mxu0 %v917
    %1320 = vmatpush1.bf16.msra.mxu0 %v916
    %1321 = vmatprep.subr.bf16.mxu0 %v925
    %1322 = vmatpush1.bf16.msra.mxu0 %v924
    %1323 = vmatprep.subr.bf16.mxu0 %v933
    %1324 = vmatpush1.bf16.msra.mxu0 %v932
    %1325 = vmatprep.subr.bf16.mxu0 %v941
    %1326 = vmatpush1.bf16.msra.mxu0 %v940
    %1327 = vmatprep.subr.bf16.mxu0 %v949
    %1328 = vmatpush1.bf16.msra.mxu0 %v948
    %1329 = vmatprep.subr.bf16.mxu0 %v957
    %1330 = vmatpush1.bf16.msra.mxu0 %v956
    %1331 = vmatprep.subr.bf16.mxu0 %v965
    %1332 = vmatpush1.bf16.msra.mxu0 %v964
    %1333 = vmatprep.mubr.bf16.mxu0 %v837
    %1334 = vmatmul.mubr.bf16.gmra.mrb[0].mxu0 %v836
    %v1335 = vpop.f32.mrb[0].mxu0
    %v1336 = vadd.f32 %v1116, %v1335
    %v1337 = vpop.f32.mrb[0].mxu0
    %v1338 = vadd.f32 %v1120, %v1337
    %v1339 = vpop.f32.mrb[0].mxu0
    %v1340 = vpop.f32.mrb[0].mxu0
    %1341 = vdwg.mxu0
    %1342 = vmatprep.subr.bf16.mxu0 %v973
    %1343 = vmatpush1.bf16.msra.mxu0 %v972
    %1344 = vmatprep.subr.bf16.mxu0 %v981
    %1345 = vmatpush1.bf16.msra.mxu0 %v980
    %1346 = vmatprep.subr.bf16.mxu0 %v989
    %1347 = vmatpush1.bf16.msra.mxu0 %v988
    %1348 = vmatprep.subr.bf16.mxu0 %v997
    %1349 = vmatpush1.bf16.msra.mxu0 %v996
    %1350 = vmatprep.subr.bf16.mxu0 %v1005
    %1351 = vmatpush1.bf16.msra.mxu0 %v1004
    %1352 = vmatprep.subr.bf16.mxu0 %v1013
    %1353 = vmatpush1.bf16.msra.mxu0 %v1012
    %1354 = vmatprep.subr.bf16.mxu0 %v1021
    %1355 = vmatpush1.bf16.msra.mxu0 %v1020
    %1356 = vmatprep.subr.bf16.mxu0 %v1029
    %1357 = vmatpush1.bf16.msra.mxu0 %v1028
    %1358 = vmatprep.subr.bf16.mxu0 %v1037
    %1359 = vmatpush1.bf16.msra.mxu0 %v1036
    %1360 = vmatprep.subr.bf16.mxu0 %v1045
    %1361 = vmatpush1.bf16.msra.mxu0 %v1044
    %1362 = vmatprep.subr.bf16.mxu0 %v1053
    %1363 = vmatpush1.bf16.msra.mxu0 %v1052
    %1364 = vmatprep.subr.bf16.mxu0 %v1061
    %1365 = vmatpush1.bf16.msra.mxu0 %v1060
    %1366 = vmatprep.subr.bf16.mxu0 %v1069
    %1367 = vmatpush1.bf16.msra.mxu0 %v1068
    %1368 = vmatprep.subr.bf16.mxu0 %v1077
    %1369 = vmatpush1.bf16.msra.mxu0 %v1076
    %1370 = vmatprep.subr.bf16.mxu0 %v1085
    %1371 = vmatpush1.bf16.msra.mxu0 %v1084
    %1372 = vmatprep.subr.bf16.mxu0 %v1093
    %1373 = vmatpush1.bf16.msra.mxu0 %v1092
    %1374 = vmatprep.mubr.bf16.mxu0 %v839
    %1375 = vmatmul.mubr.bf16.gmra.mrb[0].mxu0 %v838
    %v1376 = vpop.f32.mrb[0].mxu0
    %v1377 = vadd.f32 %v1336, %v1376
    %v1378 = vpop.f32.mrb[0].mxu0
    %v1379 = vadd.f32 %v1338, %v1378
    %v1380 = vpop.f32.mrb[0].mxu0
    %v1381 = vpop.f32.mrb[0].mxu0
    %1382 = vdwg.mxu0
    %1383 = vmatprep.subr.bf16.mxu0 %v847
    %1384 = vmatpush1.bf16.msra.mxu0 %v846
    %1385 = vmatprep.subr.bf16.mxu0 %v855
    %1386 = vmatpush1.bf16.msra.mxu0 %v854
    %1387 = vmatprep.subr.bf16.mxu0 %v863
    %1388 = vmatpush1.bf16.msra.mxu0 %v862
    %1389 = vmatprep.subr.bf16.mxu0 %v871
    %1390 = vmatpush1.bf16.msra.mxu0 %v870
    %1391 = vmatprep.subr.bf16.mxu0 %v879
    %1392 = vmatpush1.bf16.msra.mxu0 %v878
    %1393 = vmatprep.subr.bf16.mxu0 %v887
    %1394 = vmatpush1.bf16.msra.mxu0 %v886
    %1395 = vmatprep.subr.bf16.mxu0 %v895
    %1396 = vmatpush1.bf16.msra.mxu0 %v894
    %1397 = vmatprep.subr.bf16.mxu0 %v903
    %1398 = vmatpush1.bf16.msra.mxu0 %v902
    %1399 = vmatprep.subr.bf16.mxu0 %v911
    %1400 = vmatpush1.bf16.msra.mxu0 %v910
    %1401 = vmatprep.subr.bf16.mxu0 %v919
    %1402 = vmatpush1.bf16.msra.mxu0 %v918
    %1403 = vmatprep.subr.bf16.mxu0 %v927
    %1404 = vmatpush1.bf16.msra.mxu0 %v926
    %1405 = vmatprep.subr.bf16.mxu0 %v935
    %1406 = vmatpush1.bf16.msra.mxu0 %v934
    %1407 = vmatprep.subr.bf16.mxu0 %v943
    %1408 = vmatpush1.bf16.msra.mxu0 %v942
    %1409 = vmatprep.subr.bf16.mxu0 %v951
    %1410 = vmatpush1.bf16.msra.mxu0 %v950
    %1411 = vmatprep.subr.bf16.mxu0 %v959
    %1412 = vmatpush1.bf16.msra.mxu0 %v958
    %1413 = vmatprep.subr.bf16.mxu0 %v967
    %1414 = vmatpush1.bf16.msra.mxu0 %v966
    %1415 = vmatprep.mubr.bf16.mxu0 %v837
    %1416 = vmatmul.mubr.bf16.gmra.mrb[0].mxu0 %v836
    %v1417 = vpop.f32.mrb[0].mxu0
    %v1418 = vadd.f32 %v1124, %v1417
    %v1419 = vpop.f32.mrb[0].mxu0
    %v1420 = vadd.f32 %v1128, %v1419
    %v1421 = vpop.f32.mrb[0].mxu0
    %v1422 = vpop.f32.mrb[0].mxu0
    %1423 = vdwg.mxu0
    %1424 = vmatprep.subr.bf16.mxu0 %v975
    %1425 = vmatpush1.bf16.msra.mxu0 %v974
    %1426 = vmatprep.subr.bf16.mxu0 %v983
    %1427 = vmatpush1.bf16.msra.mxu0 %v982
    %1428 = vmatprep.subr.bf16.mxu0 %v991
    %1429 = vmatpush1.bf16.msra.mxu0 %v990
    %1430 = vmatprep.subr.bf16.mxu0 %v999
    %1431 = vmatpush1.bf16.msra.mxu0 %v998
    %1432 = vmatprep.subr.bf16.mxu0 %v1007
    %1433 = vmatpush1.bf16.msra.mxu0 %v1006
    %1434 = vmatprep.subr.bf16.mxu0 %v1015
    %1435 = vmatpush1.bf16.msra.mxu0 %v1014
    %1436 = vmatprep.subr.bf16.mxu0 %v1023
    %1437 = vmatpush1.bf16.msra.mxu0 %v1022
    %1438 = vmatprep.subr.bf16.mxu0 %v1031
    %1439 = vmatpush1.bf16.msra.mxu0 %v1030
    %1440 = vmatprep.subr.bf16.mxu0 %v1039
    %1441 = vmatpush1.bf16.msra.mxu0 %v1038
    %1442 = vmatprep.subr.bf16.mxu0 %v1047
    %1443 = vmatpush1.bf16.msra.mxu0 %v1046
    %1444 = vmatprep.subr.bf16.mxu0 %v1055
    %1445 = vmatpush1.bf16.msra.mxu0 %v1054
    %1446 = vmatprep.subr.bf16.mxu0 %v1063
    %1447 = vmatpush1.bf16.msra.mxu0 %v1062
    %1448 = vmatprep.subr.bf16.mxu0 %v1071
    %1449 = vmatpush1.bf16.msra.mxu0 %v1070
    %1450 = vmatprep.subr.bf16.mxu0 %v1079
    %1451 = vmatpush1.bf16.msra.mxu0 %v1078
    %1452 = vmatprep.subr.bf16.mxu0 %v1087
    %1453 = vmatpush1.bf16.msra.mxu0 %v1086
    %1454 = vmatprep.subr.bf16.mxu0 %v1095
    %1455 = vmatpush1.bf16.msra.mxu0 %v1094
    %1456 = vmatprep.mubr.bf16.mxu0 %v839
    %1457 = vmatmul.mubr.bf16.gmra.mrb[0].mxu0 %v838
    %v1458 = vpop.f32.mrb[0].mxu0
    %v1459 = vadd.f32 %v1418, %v1458
    %v1460 = vpop.f32.mrb[0].mxu0
    %v1461 = vadd.f32 %v1420, %v1460
    %v1462 = vpop.f32.mrb[0].mxu0
    %v1463 = vpop.f32.mrb[0].mxu0
    %1464 = vdwg.mxu0
    %v1465 = vrot.slane %v1213, 4
    %v1466 = vadd.f32 %v1213, %v1465
    %v1467 = vrot.slane %v1466, 2
    %v1468 = vadd.f32 %v1466, %v1467
    %v1469 = vrot.slane %v1468, 1
    %v1470 = vadd.f32 %v1468, %v1469
    %v1471 = vrot.slane %v1215, 4
    %v1472 = vadd.f32 %v1215, %v1471
    %v1473 = vrot.slane %v1472, 2
    %v1474 = vadd.f32 %v1472, %v1473
    %v1475 = vrot.slane %v1474, 1
    %v1476 = vadd.f32 %v1474, %v1475
    %v1477 = vrot.slane %v1295, 4
    %v1478 = vadd.f32 %v1295, %v1477
    %v1479 = vrot.slane %v1478, 2
    %v1480 = vadd.f32 %v1478, %v1479
    %v1481 = vrot.slane %v1480, 1
    %v1482 = vadd.f32 %v1480, %v1481
    %v1483 = vrot.slane %v1297, 4
    %v1484 = vadd.f32 %v1297, %v1483
    %v1485 = vrot.slane %v1484, 2
    %v1486 = vadd.f32 %v1484, %v1485
    %v1487 = vrot.slane %v1486, 1
    %v1488 = vadd.f32 %v1486, %v1487
    %v1489 = vrot.slane %v1377, 4
    %v1490 = vadd.f32 %v1377, %v1489
    %v1491 = vrot.slane %v1490, 2
    %v1492 = vadd.f32 %v1490, %v1491
    %v1493 = vrot.slane %v1492, 1
    %v1494 = vadd.f32 %v1492, %v1493
    %v1495 = vrot.slane %v1379, 4
    %v1496 = vadd.f32 %v1379, %v1495
    %v1497 = vrot.slane %v1496, 2
    %v1498 = vadd.f32 %v1496, %v1497
    %v1499 = vrot.slane %v1498, 1
    %v1500 = vadd.f32 %v1498, %v1499
    %v1501 = vrot.slane %v1459, 4
    %v1502 = vadd.f32 %v1459, %v1501
    %v1503 = vrot.slane %v1502, 2
    %v1504 = vadd.f32 %v1502, %v1503
    %v1505 = vrot.slane %v1504, 1
    %v1506 = vadd.f32 %v1504, %v1505
    %v1507 = vrot.slane %v1461, 4
    %v1508 = vadd.f32 %v1461, %v1507
    %v1509 = vrot.slane %v1508, 2
    %v1510 = vadd.f32 %v1508, %v1509
    %v1511 = vrot.slane %v1510, 1
    %v1512 = vadd.f32 %v1510, %v1511
    %v1513 = vmul.f32 %v1213, %v1213
    %v1514 = vmul.f32 %v1215, %v1215
    %v1515 = vmul.f32 %v1295, %v1295
    %v1516 = vmul.f32 %v1297, %v1297
    %v1517 = vmul.f32 %v1377, %v1377
    %v1518 = vmul.f32 %v1379, %v1379
    %v1519 = vmul.f32 %v1459, %v1459
    %v1520 = vmul.f32 %v1461, %v1461
    %v1521 = vrot.slane %v1513, 4
    %v1522 = vadd.f32 %v1513, %v1521
    %v1523 = vrot.slane %v1522, 2
    %v1524 = vadd.f32 %v1522, %v1523
    %v1525 = vrot.slane %v1524, 1
    %v1526 = vadd.f32 %v1524, %v1525
    %v1527 = vrot.slane %v1514, 4
    %v1528 = vadd.f32 %v1514, %v1527
    %v1529 = vrot.slane %v1528, 2
    %v1530 = vadd.f32 %v1528, %v1529
    %v1531 = vrot.slane %v1530, 1
    %v1532 = vadd.f32 %v1530, %v1531
    %v1533 = vrot.slane %v1515, 4
    %v1534 = vadd.f32 %v1515, %v1533
    %v1535 = vrot.slane %v1534, 2
    %v1536 = vadd.f32 %v1534, %v1535
    %v1537 = vrot.slane %v1536, 1
    %v1538 = vadd.f32 %v1536, %v1537
    %v1539 = vrot.slane %v1516, 4
    %v1540 = vadd.f32 %v1516, %v1539
    %v1541 = vrot.slane %v1540, 2
    %v1542 = vadd.f32 %v1540, %v1541
    %v1543 = vrot.slane %v1542, 1
    %v1544 = vadd.f32 %v1542, %v1543
    %v1545 = vrot.slane %v1517, 4
    %v1546 = vadd.f32 %v1517, %v1545
    %v1547 = vrot.slane %v1546, 2
    %v1548 = vadd.f32 %v1546, %v1547
    %v1549 = vrot.slane %v1548, 1
    %v1550 = vadd.f32 %v1548, %v1549
    %v1551 = vrot.slane %v1518, 4
    %v1552 = vadd.f32 %v1518, %v1551
    %v1553 = vrot.slane %v1552, 2
    %v1554 = vadd.f32 %v1552, %v1553
    %v1555 = vrot.slane %v1554, 1
    %v1556 = vadd.f32 %v1554, %v1555
    %v1557 = vrot.slane %v1519, 4
    %v1558 = vadd.f32 %v1519, %v1557
    %v1559 = vrot.slane %v1558, 2
    %v1560 = vadd.f32 %v1558, %v1559
    %v1561 = vrot.slane %v1560, 1
    %v1562 = vadd.f32 %v1560, %v1561
    %v1563 = vrot.slane %v1520, 4
    %v1564 = vadd.f32 %v1520, %v1563
    %v1565 = vrot.slane %v1564, 2
    %v1566 = vadd.f32 %v1564, %v1565
    %v1567 = vrot.slane %v1566, 1
    %v1568 = vadd.f32 %v1566, %v1567
    %v1569 = vmul.f32 %v1470, 0.125
    %v1570 = vmul.f32 %v1476, 0.125
    %v1571 = vmul.f32 %v1482, 0.125
    %v1572 = vmul.f32 %v1488, 0.125
    %v1573 = vmul.f32 %v1494, 0.125
    %v1574 = vmul.f32 %v1500, 0.125
    %v1575 = vmul.f32 %v1506, 0.125
    %v1576 = vmul.f32 %v1512, 0.125
    %v1577 = vmul.f32 %v1526, 0.125
    %v1578 = vmul.f32 %v1532, 0.125
    %v1579 = vmul.f32 %v1538, 0.125
    %v1580 = vmul.f32 %v1544, 0.125
    %v1581 = vmul.f32 %v1550, 0.125
    %v1582 = vmul.f32 %v1556, 0.125
    %v1583 = vmul.f32 %v1562, 0.125
    %v1584 = vmul.f32 %v1568, 0.125
    %v1585 = vmul.f32 %v1569, %v1569
    %v1586 = vmul.f32 %v1570, %v1570
    %v1587 = vmul.f32 %v1571, %v1571
    %v1588 = vmul.f32 %v1572, %v1572
    %v1589 = vmul.f32 %v1573, %v1573
    %v1590 = vmul.f32 %v1574, %v1574
    %v1591 = vmul.f32 %v1575, %v1575
    %v1592 = vmul.f32 %v1576, %v1576
    %v1593 = vsub.f32 %v1577, %v1585
    %v1594 = vsub.f32 %v1578, %v1586
    %v1595 = vsub.f32 %v1579, %v1587
    %v1596 = vsub.f32 %v1580, %v1588
    %v1597 = vsub.f32 %v1581, %v1589
    %v1598 = vsub.f32 %v1582, %v1590
    %v1599 = vsub.f32 %v1583, %v1591
    %v1600 = vsub.f32 %v1584, %v1592
    %v1601 = vmax.f32 %v1593, 0.0
    %v1602 = vmax.f32 %v1594, 0.0
    %v1603 = vmax.f32 %v1595, 0.0
    %v1604 = vmax.f32 %v1596, 0.0
    %v1605 = vmax.f32 %v1597, 0.0
    %v1606 = vmax.f32 %v1598, 0.0
    %v1607 = vmax.f32 %v1599, 0.0
    %v1608 = vmax.f32 %v1600, 0.0
    %v1609 = vadd.f32 %v1601, 0.8
    %v1610 = vadd.f32 %v1602, 0.8
    %v1611 = vadd.f32 %v1603, 0.8
    %v1612 = vadd.f32 %v1604, 0.8
    %v1613 = vadd.f32 %v1605, 0.8
    %v1614 = vadd.f32 %v1606, 0.8
    %v1615 = vadd.f32 %v1607, 0.8
    %v1616 = vadd.f32 %v1608, 0.8
    %v1617 = vrsqrt.pop %v1609
    %v1618 = vrsqrt.pop %v1610
    %v1619 = vrsqrt.pop %v1611
    %v1620 = vrsqrt.pop %v1612
    %v1621 = vrsqrt.pop %v1613
    %v1622 = vrsqrt.pop %v1614
    %v1623 = vrsqrt.pop %v1615
    %v1624 = vrsqrt.pop %v1616
    %v1633 = vcombine.low %v1617, %v1618
    %v1634 = vcombine.low %v1619, %v1620
    %v1635 = vcombine.low %v1621, %v1622
    %v1636 = vcombine.low %v1623, %v1624
    %v1638 = vunpack.c.l.s4 1966171168
    %v1639 = vunpack.c.0.s8 %v1638
    %v1640 = vlaneseq
    %v1641 = vshrl.u32 %v1640, 7
    %v1642 = vsub.s32 %v1639, %v1641
    %v1643 = vrot.slane %v1633, %v1642
    %v1645 = vunpack.c.l.s4 1966171168
    %v1646 = vunpack.c.0.s8 %v1645
    %v1647 = vlaneseq
    %v1648 = vshrl.u32 %v1647, 7
    %v1649 = vsub.s32 %v1646, %v1648
    %v1650 = vrot.slane %v1634, %v1649
    %v1652 = vunpack.c.l.s4 1966171168
    %v1653 = vunpack.c.0.s8 %v1652
    %v1654 = vlaneseq
    %v1655 = vshrl.u32 %v1654, 7
    %v1656 = vsub.s32 %v1653, %v1655
    %v1657 = vrot.slane %v1635, %v1656
    %v1659 = vunpack.c.l.s4 1966171168
    %v1660 = vunpack.c.0.s8 %v1659
    %v1661 = vlaneseq
    %v1662 = vshrl.u32 %v1661, 7
    %v1663 = vsub.s32 %v1660, %v1662
    %v1664 = vrot.slane %v1636, %v1663
    %v1665 = vcombine.low %v1643, %v1650
    %v1666 = vcombine.low %v1657, %v1664
    %v1668 = vunpack.c.l.s4 1966171168
    %v1669 = vunpack.c.0.s8 %v1668
    %v1670 = vlaneseq
    %v1671 = vshrl.u32 %v1670, 7
    %v1672 = vsub.s32 %v1669, %v1671
    %v1673 = vrot.slane %v1665, %v1672
    %v1675 = vunpack.c.l.s4 1966171168
    %v1676 = vunpack.c.0.s8 %v1675
    %v1677 = vlaneseq
    %v1678 = vshrl.u32 %v1677, 7
    %v1679 = vsub.s32 %v1676, %v1678
    %v1680 = vrot.slane %v1666, %v1679
    %v1681 = vcombine.low %v1673, %v1680
    %v1683 = vmul.f32 %v203, %v1681
    %v1685 = vlaneseq
    %v1686 = vshrl.u32 %v1685, 7
    %v1687 = vsub.s32 0, %v1686
    %v1688 = vrot.slane %v1683, %v1687
    %v1689 = vlaneseq
    %v1690 = vshrl.u32 %v1689, 7
    %v1691 = vsub.s32 1, %v1690
    %v1692 = vrot.slane %v1683, %v1691
    %v1693 = vlaneseq
    %v1694 = vshrl.u32 %v1693, 7
    %v1695 = vsub.s32 2, %v1694
    %v1696 = vrot.slane %v1683, %v1695
    %v1697 = vlaneseq
    %v1698 = vshrl.u32 %v1697, 7
    %v1699 = vsub.s32 3, %v1698
    %v1700 = vrot.slane %v1683, %v1699
    %v1701 = vlaneseq
    %v1702 = vshrl.u32 %v1701, 7
    %v1703 = vsub.s32 4, %v1702
    %v1704 = vrot.slane %v1683, %v1703
    %v1705 = vlaneseq
    %v1706 = vshrl.u32 %v1705, 7
    %v1707 = vsub.s32 5, %v1706
    %v1708 = vrot.slane %v1683, %v1707
    %v1709 = vlaneseq
    %v1710 = vshrl.u32 %v1709, 7
    %v1711 = vsub.s32 6, %v1710
    %v1712 = vrot.slane %v1683, %v1711
    %v1713 = vlaneseq
    %v1714 = vshrl.u32 %v1713, 7
    %v1715 = vsub.s32 7, %v1714
    %v1716 = vrot.slane %v1683, %v1715
    %v1725 = vmul.f32 %v1569, %v1688
    %v1726 = vmul.f32 %v1570, %v1692
    %v1727 = vmul.f32 %v1571, %v1696
    %v1728 = vmul.f32 %v1572, %v1700
    %v1729 = vmul.f32 %v1573, %v1704
    %v1730 = vmul.f32 %v1574, %v1708
    %v1731 = vmul.f32 %v1575, %v1712
    %v1732 = vmul.f32 %v1576, %v1716
    %v1741 = vcombine.low %v1725, %v1726
    %v1742 = vcombine.low %v1727, %v1728
    %v1743 = vcombine.low %v1729, %v1730
    %v1744 = vcombine.low %v1731, %v1732
    %v1746 = vunpack.c.l.s4 1966171168
    %v1747 = vunpack.c.0.s8 %v1746
    %v1748 = vlaneseq
    %v1749 = vshrl.u32 %v1748, 7
    %v1750 = vsub.s32 %v1747, %v1749
    %v1751 = vrot.slane %v1741, %v1750
    %v1753 = vunpack.c.l.s4 1966171168
    %v1754 = vunpack.c.0.s8 %v1753
    %v1755 = vlaneseq
    %v1756 = vshrl.u32 %v1755, 7
    %v1757 = vsub.s32 %v1754, %v1756
    %v1758 = vrot.slane %v1742, %v1757
    %v1760 = vunpack.c.l.s4 1966171168
    %v1761 = vunpack.c.0.s8 %v1760
    %v1762 = vlaneseq
    %v1763 = vshrl.u32 %v1762, 7
    %v1764 = vsub.s32 %v1761, %v1763
    %v1765 = vrot.slane %v1743, %v1764
    %v1767 = vunpack.c.l.s4 1966171168
    %v1768 = vunpack.c.0.s8 %v1767
    %v1769 = vlaneseq
    %v1770 = vshrl.u32 %v1769, 7
    %v1771 = vsub.s32 %v1768, %v1770
    %v1772 = vrot.slane %v1744, %v1771
    %v1773 = vcombine.low %v1751, %v1758
    %v1774 = vcombine.low %v1765, %v1772
    %v1776 = vunpack.c.l.s4 1966171168
    %v1777 = vunpack.c.0.s8 %v1776
    %v1778 = vlaneseq
    %v1779 = vshrl.u32 %v1778, 7
    %v1780 = vsub.s32 %v1777, %v1779
    %v1781 = vrot.slane %v1773, %v1780
    %v1783 = vunpack.c.l.s4 1966171168
    %v1784 = vunpack.c.0.s8 %v1783
    %v1785 = vlaneseq
    %v1786 = vshrl.u32 %v1785, 7
    %v1787 = vsub.s32 %v1784, %v1786
    %v1788 = vrot.slane %v1774, %v1787
    %v1789 = vcombine.low %v1781, %v1788
    %v1791 = vsub.f32 %v207, %v1789
    %v1792 = vmul.f32 %v1213, %v1688
    %v1793 = vmul.f32 %v1215, %v1692
    %v1794 = vmul.f32 %v1295, %v1696
    %v1795 = vmul.f32 %v1297, %v1700
    %v1796 = vmul.f32 %v1377, %v1704
    %v1797 = vmul.f32 %v1379, %v1708
    %v1798 = vmul.f32 %v1459, %v1712
    %v1799 = vmul.f32 %v1461, %v1716
    %v1801 = vlaneseq
    %v1802 = vshrl.u32 %v1801, 7
    %v1803 = vsub.s32 0, %v1802
    %v1804 = vrot.slane %v1791, %v1803
    %v1805 = vlaneseq
    %v1806 = vshrl.u32 %v1805, 7
    %v1807 = vsub.s32 1, %v1806
    %v1808 = vrot.slane %v1791, %v1807
    %v1809 = vlaneseq
    %v1810 = vshrl.u32 %v1809, 7
    %v1811 = vsub.s32 2, %v1810
    %v1812 = vrot.slane %v1791, %v1811
    %v1813 = vlaneseq
    %v1814 = vshrl.u32 %v1813, 7
    %v1815 = vsub.s32 3, %v1814
    %v1816 = vrot.slane %v1791, %v1815
    %v1817 = vlaneseq
    %v1818 = vshrl.u32 %v1817, 7
    %v1819 = vsub.s32 4, %v1818
    %v1820 = vrot.slane %v1791, %v1819
    %v1821 = vlaneseq
    %v1822 = vshrl.u32 %v1821, 7
    %v1823 = vsub.s32 5, %v1822
    %v1824 = vrot.slane %v1791, %v1823
    %v1825 = vlaneseq
    %v1826 = vshrl.u32 %v1825, 7
    %v1827 = vsub.s32 6, %v1826
    %v1828 = vrot.slane %v1791, %v1827
    %v1829 = vlaneseq
    %v1830 = vshrl.u32 %v1829, 7
    %v1831 = vsub.s32 7, %v1830
    %v1832 = vrot.slane %v1791, %v1831
    %v1841 = vadd.f32 %v1792, %v1804
    %v1842 = vadd.f32 %v1793, %v1808
    %v1843 = vadd.f32 %v1794, %v1812
    %v1844 = vadd.f32 %v1795, %v1816
    %v1845 = vadd.f32 %v1796, %v1820
    %v1846 = vadd.f32 %v1797, %v1824
    %v1847 = vadd.f32 %v1798, %v1828
    %v1848 = vadd.f32 %v1799, %v1832
    %vm1849 = vcmp.gt.f32.partialorder %v1841, 0.0
    %vm1850 = vcmp.gt.f32.partialorder %v1842, 0.0
    %vm1851 = vcmp.gt.f32.partialorder %v1843, 0.0
    %vm1852 = vcmp.gt.f32.partialorder %v1844, 0.0
    %vm1853 = vcmp.gt.f32.partialorder %v1845, 0.0
    %vm1854 = vcmp.gt.f32.partialorder %v1846, 0.0
    %vm1855 = vcmp.gt.f32.partialorder %v1847, 0.0
    %vm1856 = vcmp.gt.f32.partialorder %v1848, 0.0
    %v1857 = vmul.f32 %v1841, 0.2
    %v1858 = vmul.f32 %v1842, 0.2
    %v1859 = vmul.f32 %v1843, 0.2
    %v1860 = vmul.f32 %v1844, 0.2
    %v1861 = vmul.f32 %v1845, 0.2
    %v1862 = vmul.f32 %v1846, 0.2
    %v1863 = vmul.f32 %v1847, 0.2
    %v1864 = vmul.f32 %v1848, 0.2
    %v1865 = vsel %vm1849, %v1841, %v1857
    %v1866 = vsel %vm1850, %v1842, %v1858
    %v1867 = vsel %vm1851, %v1843, %v1859
    %v1868 = vsel %vm1852, %v1844, %v1860
    %v1869 = vsel %vm1853, %v1845, %v1861
    %v1870 = vsel %vm1854, %v1846, %v1862
    %v1871 = vsel %vm1855, %v1847, %v1863
    %v1872 = vsel %vm1856, %v1848, %v1864
    %s1873 = smul.u32 4, 128
    %s1874 = smul.u32 %s1873, 7
    %s1875 = sshll.u32 %s1874, 4
    %1876 = dma.done %s148, %s1875
    %v1877 = vpack.c.bf16 %v1865, %v1865
    %v1878 = vpack.c.bf16 %v1866, %v1866
    %v1879 = vpack.c.bf16 %v1867, %v1867
    %v1880 = vpack.c.bf16 %v1868, %v1868
    %v1881 = vpack.c.bf16 %v1869, %v1869
    %v1882 = vpack.c.bf16 %v1870, %v1870
    %v1883 = vpack.c.bf16 %v1871, %v1871
    %v1884 = vpack.c.bf16 %v1872, %v1872
    %v1885 = vld [vmem:[#allocation6] sm:$0xff]
    %v1886 = vld [vmem:[#allocation6 + $0x8] sm:$0xff]
    %v1887 = vld [vmem:[#allocation6 + $0x10] sm:$0xff]
    %v1888 = vld [vmem:[#allocation6 + $0x18] sm:$0xff]
    %v1889 = vld [vmem:[#allocation6 + $0x20] sm:$0xff]
    %v1890 = vld [vmem:[#allocation6 + $0x28] sm:$0xff]
    %v1891 = vld [vmem:[#allocation6 + $0x30] sm:$0xff]
    %v1892 = vld [vmem:[#allocation6 + $0x38] sm:$0xff]
    %v1893 = vld [vmem:[#allocation6 + $0x40] sm:$0xff]
    %v1894 = vld [vmem:[#allocation6 + $0x48] sm:$0xff]
    %v1895 = vld [vmem:[#allocation6 + $0x50] sm:$0xff]
    %v1896 = vld [vmem:[#allocation6 + $0x58] sm:$0xff]
    %v1897 = vld [vmem:[#allocation6 + $0x60] sm:$0xff]
    %v1898 = vld [vmem:[#allocation6 + $0x68] sm:$0xff]
    %v1899 = vld [vmem:[#allocation6 + $0x70] sm:$0xff]
    %v1900 = vld [vmem:[#allocation6 + $0x78] sm:$0xff]
    %v1901 = vld [vmem:[#allocation6 + $0x80] sm:$0xff]
    %v1902 = vld [vmem:[#allocation6 + $0x88] sm:$0xff]
    %v1903 = vld [vmem:[#allocation6 + $0x90] sm:$0xff]
    %v1904 = vld [vmem:[#allocation6 + $0x98] sm:$0xff]
    %v1905 = vld [vmem:[#allocation6 + $0xa0] sm:$0xff]
    %v1906 = vld [vmem:[#allocation6 + $0xa8] sm:$0xff]
    %v1907 = vld [vmem:[#allocation6 + $0xb0] sm:$0xff]
    %v1908 = vld [vmem:[#allocation6 + $0xb8] sm:$0xff]
    %v1909 = vld [vmem:[#allocation6 + $0xc0] sm:$0xff]
    %v1910 = vld [vmem:[#allocation6 + $0xc8] sm:$0xff]
    %v1911 = vld [vmem:[#allocation6 + $0xd0] sm:$0xff]
    %v1912 = vld [vmem:[#allocation6 + $0xd8] sm:$0xff]
    %v1913 = vld [vmem:[#allocation6 + $0xe0] sm:$0xff]
    %v1914 = vld [vmem:[#allocation6 + $0xe8] sm:$0xff]
    %v1915 = vld [vmem:[#allocation6 + $0xf0] sm:$0xff]
    %v1916 = vld [vmem:[#allocation6 + $0xf8] sm:$0xff]
    %v1917 = vld [vmem:[#allocation6 + $0x100] sm:$0xff]
    %v1918 = vld [vmem:[#allocation6 + $0x108] sm:$0xff]
    %v1919 = vld [vmem:[#allocation6 + $0x110] sm:$0xff]
    %v1920 = vld [vmem:[#allocation6 + $0x118] sm:$0xff]
    %v1921 = vld [vmem:[#allocation6 + $0x120] sm:$0xff]
    %v1922 = vld [vmem:[#allocation6 + $0x128] sm:$0xff]
    %v1923 = vld [vmem:[#allocation6 + $0x130] sm:$0xff]
    %v1924 = vld [vmem:[#allocation6 + $0x138] sm:$0xff]
    %v1925 = vld [vmem:[#allocation6 + $0x140] sm:$0xff]
    %v1926 = vld [vmem:[#allocation6 + $0x148] sm:$0xff]
    %v1927 = vld [vmem:[#allocation6 + $0x150] sm:$0xff]
    %v1928 = vld [vmem:[#allocation6 + $0x158] sm:$0xff]
    %v1929 = vld [vmem:[#allocation6 + $0x160] sm:$0xff]
    %v1930 = vld [vmem:[#allocation6 + $0x168] sm:$0xff]
    %v1931 = vld [vmem:[#allocation6 + $0x170] sm:$0xff]
    %v1932 = vld [vmem:[#allocation6 + $0x178] sm:$0xff]
    %v1933 = vld [vmem:[#allocation6 + $0x180] sm:$0xff]
    %v1934 = vld [vmem:[#allocation6 + $0x188] sm:$0xff]
    %v1935 = vld [vmem:[#allocation6 + $0x190] sm:$0xff]
    %v1936 = vld [vmem:[#allocation6 + $0x198] sm:$0xff]
    %v1937 = vld [vmem:[#allocation6 + $0x1a0] sm:$0xff]
    %v1938 = vld [vmem:[#allocation6 + $0x1a8] sm:$0xff]
    %v1939 = vld [vmem:[#allocation6 + $0x1b0] sm:$0xff]
    %v1940 = vld [vmem:[#allocation6 + $0x1b8] sm:$0xff]
    %v1941 = vld [vmem:[#allocation6 + $0x1c0] sm:$0xff]
    %v1942 = vld [vmem:[#allocation6 + $0x1c8] sm:$0xff]
    %v1943 = vld [vmem:[#allocation6 + $0x1d0] sm:$0xff]
    %v1944 = vld [vmem:[#allocation6 + $0x1d8] sm:$0xff]
    %v1945 = vld [vmem:[#allocation6 + $0x1e0] sm:$0xff]
    %v1946 = vld [vmem:[#allocation6 + $0x1e8] sm:$0xff]
    %v1947 = vld [vmem:[#allocation6 + $0x1f0] sm:$0xff]
    %v1948 = vld [vmem:[#allocation6 + $0x1f8] sm:$0xff]
    %v1949 = vld [vmem:[#allocation6 + $0x200] sm:$0xff]
    %v1950 = vld [vmem:[#allocation6 + $0x208] sm:$0xff]
    %v1951 = vld [vmem:[#allocation6 + $0x210] sm:$0xff]
    %v1952 = vld [vmem:[#allocation6 + $0x218] sm:$0xff]
    %v1953 = vld [vmem:[#allocation6 + $0x220] sm:$0xff]
    %v1954 = vld [vmem:[#allocation6 + $0x228] sm:$0xff]
    %v1955 = vld [vmem:[#allocation6 + $0x230] sm:$0xff]
    %v1956 = vld [vmem:[#allocation6 + $0x238] sm:$0xff]
    %v1957 = vld [vmem:[#allocation6 + $0x240] sm:$0xff]
    %v1958 = vld [vmem:[#allocation6 + $0x248] sm:$0xff]
    %v1959 = vld [vmem:[#allocation6 + $0x250] sm:$0xff]
    %v1960 = vld [vmem:[#allocation6 + $0x258] sm:$0xff]
    %v1961 = vld [vmem:[#allocation6 + $0x260] sm:$0xff]
    %v1962 = vld [vmem:[#allocation6 + $0x268] sm:$0xff]
    %v1963 = vld [vmem:[#allocation6 + $0x270] sm:$0xff]
    %v1964 = vld [vmem:[#allocation6 + $0x278] sm:$0xff]
    %v1965 = vld [vmem:[#allocation6 + $0x280] sm:$0xff]
    %v1966 = vld [vmem:[#allocation6 + $0x288] sm:$0xff]
    %v1967 = vld [vmem:[#allocation6 + $0x290] sm:$0xff]
    %v1968 = vld [vmem:[#allocation6 + $0x298] sm:$0xff]
    %v1969 = vld [vmem:[#allocation6 + $0x2a0] sm:$0xff]
    %v1970 = vld [vmem:[#allocation6 + $0x2a8] sm:$0xff]
    %v1971 = vld [vmem:[#allocation6 + $0x2b0] sm:$0xff]
    %v1972 = vld [vmem:[#allocation6 + $0x2b8] sm:$0xff]
    %v1973 = vld [vmem:[#allocation6 + $0x2c0] sm:$0xff]
    %v1974 = vld [vmem:[#allocation6 + $0x2c8] sm:$0xff]
    %v1975 = vld [vmem:[#allocation6 + $0x2d0] sm:$0xff]
    %v1976 = vld [vmem:[#allocation6 + $0x2d8] sm:$0xff]
    %v1977 = vld [vmem:[#allocation6 + $0x2e0] sm:$0xff]
    %v1978 = vld [vmem:[#allocation6 + $0x2e8] sm:$0xff]
    %v1979 = vld [vmem:[#allocation6 + $0x2f0] sm:$0xff]
    %v1980 = vld [vmem:[#allocation6 + $0x2f8] sm:$0xff]
    %v1981 = vld [vmem:[#allocation6 + $0x300] sm:$0xff]
    %v1982 = vld [vmem:[#allocation6 + $0x308] sm:$0xff]
    %v1983 = vld [vmem:[#allocation6 + $0x310] sm:$0xff]
    %v1984 = vld [vmem:[#allocation6 + $0x318] sm:$0xff]
    %v1985 = vld [vmem:[#allocation6 + $0x320] sm:$0xff]
    %v1986 = vld [vmem:[#allocation6 + $0x328] sm:$0xff]
    %v1987 = vld [vmem:[#allocation6 + $0x330] sm:$0xff]
    %v1988 = vld [vmem:[#allocation6 + $0x338] sm:$0xff]
    %v1989 = vld [vmem:[#allocation6 + $0x340] sm:$0xff]
    %v1990 = vld [vmem:[#allocation6 + $0x348] sm:$0xff]
    %v1991 = vld [vmem:[#allocation6 + $0x350] sm:$0xff]
    %v1992 = vld [vmem:[#allocation6 + $0x358] sm:$0xff]
    %v1993 = vld [vmem:[#allocation6 + $0x360] sm:$0xff]
    %v1994 = vld [vmem:[#allocation6 + $0x368] sm:$0xff]
    %v1995 = vld [vmem:[#allocation6 + $0x370] sm:$0xff]
    %v1996 = vld [vmem:[#allocation6 + $0x378] sm:$0xff]
    %v1997 = vld [vmem:[#allocation6 + $0x380] sm:$0xff]
    %v1998 = vld [vmem:[#allocation6 + $0x388] sm:$0xff]
    %v1999 = vld [vmem:[#allocation6 + $0x390] sm:$0xff]
    %v2000 = vld [vmem:[#allocation6 + $0x398] sm:$0xff]
    %v2001 = vld [vmem:[#allocation6 + $0x3a0] sm:$0xff]
    %v2002 = vld [vmem:[#allocation6 + $0x3a8] sm:$0xff]
    %v2003 = vld [vmem:[#allocation6 + $0x3b0] sm:$0xff]
    %v2004 = vld [vmem:[#allocation6 + $0x3b8] sm:$0xff]
    %v2005 = vld [vmem:[#allocation6 + $0x3c0] sm:$0xff]
    %v2006 = vld [vmem:[#allocation6 + $0x3c8] sm:$0xff]
    %v2007 = vld [vmem:[#allocation6 + $0x3d0] sm:$0xff]
    %v2008 = vld [vmem:[#allocation6 + $0x3d8] sm:$0xff]
    %v2009 = vld [vmem:[#allocation6 + $0x3e0] sm:$0xff]
    %v2010 = vld [vmem:[#allocation6 + $0x3e8] sm:$0xff]
    %v2011 = vld [vmem:[#allocation6 + $0x3f0] sm:$0xff]
    %v2012 = vld [vmem:[#allocation6 + $0x3f8] sm:$0xff]
    %v2013 = vld [vmem:[#allocation6 + $0x400] sm:$0xff]
    %v2014 = vld [vmem:[#allocation6 + $0x408] sm:$0xff]
    %v2015 = vld [vmem:[#allocation6 + $0x410] sm:$0xff]
    %v2016 = vld [vmem:[#allocation6 + $0x418] sm:$0xff]
    %v2017 = vld [vmem:[#allocation6 + $0x420] sm:$0xff]
    %v2018 = vld [vmem:[#allocation6 + $0x428] sm:$0xff]
    %v2019 = vld [vmem:[#allocation6 + $0x430] sm:$0xff]
    %v2020 = vld [vmem:[#allocation6 + $0x438] sm:$0xff]
    %v2021 = vld [vmem:[#allocation6 + $0x440] sm:$0xff]
    %v2022 = vld [vmem:[#allocation6 + $0x448] sm:$0xff]
    %v2023 = vld [vmem:[#allocation6 + $0x450] sm:$0xff]
    %v2024 = vld [vmem:[#allocation6 + $0x458] sm:$0xff]
    %v2025 = vld [vmem:[#allocation6 + $0x460] sm:$0xff]
    %v2026 = vld [vmem:[#allocation6 + $0x468] sm:$0xff]
    %v2027 = vld [vmem:[#allocation6 + $0x470] sm:$0xff]
    %v2028 = vld [vmem:[#allocation6 + $0x478] sm:$0xff]
    %v2029 = vld [vmem:[#allocation6 + $0x480] sm:$0xff]
    %v2030 = vld [vmem:[#allocation6 + $0x488] sm:$0xff]
    %v2031 = vld [vmem:[#allocation6 + $0x490] sm:$0xff]
    %v2032 = vld [vmem:[#allocation6 + $0x498] sm:$0xff]
    %v2033 = vld [vmem:[#allocation6 + $0x4a0] sm:$0xff]
    %v2034 = vld [vmem:[#allocation6 + $0x4a8] sm:$0xff]
    %v2035 = vld [vmem:[#allocation6 + $0x4b0] sm:$0xff]
    %v2036 = vld [vmem:[#allocation6 + $0x4b8] sm:$0xff]
    %v2037 = vld [vmem:[#allocation6 + $0x4c0] sm:$0xff]
    %v2038 = vld [vmem:[#allocation6 + $0x4c8] sm:$0xff]
    %v2039 = vld [vmem:[#allocation6 + $0x4d0] sm:$0xff]
    %v2040 = vld [vmem:[#allocation6 + $0x4d8] sm:$0xff]
    %v2041 = vld [vmem:[#allocation6 + $0x4e0] sm:$0xff]
    %v2042 = vld [vmem:[#allocation6 + $0x4e8] sm:$0xff]
    %v2043 = vld [vmem:[#allocation6 + $0x4f0] sm:$0xff]
    %v2044 = vld [vmem:[#allocation6 + $0x4f8] sm:$0xff]
    %v2045 = vld [vmem:[#allocation6 + $0x500] sm:$0xff]
    %v2046 = vld [vmem:[#allocation6 + $0x508] sm:$0xff]
    %v2047 = vld [vmem:[#allocation6 + $0x510] sm:$0xff]
    %v2048 = vld [vmem:[#allocation6 + $0x518] sm:$0xff]
    %v2049 = vld [vmem:[#allocation6 + $0x520] sm:$0xff]
    %v2050 = vld [vmem:[#allocation6 + $0x528] sm:$0xff]
    %v2051 = vld [vmem:[#allocation6 + $0x530] sm:$0xff]
    %v2052 = vld [vmem:[#allocation6 + $0x538] sm:$0xff]
    %v2053 = vld [vmem:[#allocation6 + $0x540] sm:$0xff]
    %v2054 = vld [vmem:[#allocation6 + $0x548] sm:$0xff]
    %v2055 = vld [vmem:[#allocation6 + $0x550] sm:$0xff]
    %v2056 = vld [vmem:[#allocation6 + $0x558] sm:$0xff]
    %v2057 = vld [vmem:[#allocation6 + $0x560] sm:$0xff]
    %v2058 = vld [vmem:[#allocation6 + $0x568] sm:$0xff]
    %v2059 = vld [vmem:[#allocation6 + $0x570] sm:$0xff]
    %v2060 = vld [vmem:[#allocation6 + $0x578] sm:$0xff]
    %v2061 = vld [vmem:[#allocation6 + $0x580] sm:$0xff]
    %v2062 = vld [vmem:[#allocation6 + $0x588] sm:$0xff]
    %v2063 = vld [vmem:[#allocation6 + $0x590] sm:$0xff]
    %v2064 = vld [vmem:[#allocation6 + $0x598] sm:$0xff]
    %v2065 = vld [vmem:[#allocation6 + $0x5a0] sm:$0xff]
    %v2066 = vld [vmem:[#allocation6 + $0x5a8] sm:$0xff]
    %v2067 = vld [vmem:[#allocation6 + $0x5b0] sm:$0xff]
    %v2068 = vld [vmem:[#allocation6 + $0x5b8] sm:$0xff]
    %v2069 = vld [vmem:[#allocation6 + $0x5c0] sm:$0xff]
    %v2070 = vld [vmem:[#allocation6 + $0x5c8] sm:$0xff]
    %v2071 = vld [vmem:[#allocation6 + $0x5d0] sm:$0xff]
    %v2072 = vld [vmem:[#allocation6 + $0x5d8] sm:$0xff]
    %v2073 = vld [vmem:[#allocation6 + $0x5e0] sm:$0xff]
    %v2074 = vld [vmem:[#allocation6 + $0x5e8] sm:$0xff]
    %v2075 = vld [vmem:[#allocation6 + $0x5f0] sm:$0xff]
    %v2076 = vld [vmem:[#allocation6 + $0x5f8] sm:$0xff]
    %v2077 = vld [vmem:[#allocation6 + $0x600] sm:$0xff]
    %v2078 = vld [vmem:[#allocation6 + $0x608] sm:$0xff]
    %v2079 = vld [vmem:[#allocation6 + $0x610] sm:$0xff]
    %v2080 = vld [vmem:[#allocation6 + $0x618] sm:$0xff]
    %v2081 = vld [vmem:[#allocation6 + $0x620] sm:$0xff]
    %v2082 = vld [vmem:[#allocation6 + $0x628] sm:$0xff]
    %v2083 = vld [vmem:[#allocation6 + $0x630] sm:$0xff]
    %v2084 = vld [vmem:[#allocation6 + $0x638] sm:$0xff]
    %v2085 = vld [vmem:[#allocation6 + $0x640] sm:$0xff]
    %v2086 = vld [vmem:[#allocation6 + $0x648] sm:$0xff]
    %v2087 = vld [vmem:[#allocation6 + $0x650] sm:$0xff]
    %v2088 = vld [vmem:[#allocation6 + $0x658] sm:$0xff]
    %v2089 = vld [vmem:[#allocation6 + $0x660] sm:$0xff]
    %v2090 = vld [vmem:[#allocation6 + $0x668] sm:$0xff]
    %v2091 = vld [vmem:[#allocation6 + $0x670] sm:$0xff]
    %v2092 = vld [vmem:[#allocation6 + $0x678] sm:$0xff]
    %v2093 = vld [vmem:[#allocation6 + $0x680] sm:$0xff]
    %v2094 = vld [vmem:[#allocation6 + $0x688] sm:$0xff]
    %v2095 = vld [vmem:[#allocation6 + $0x690] sm:$0xff]
    %v2096 = vld [vmem:[#allocation6 + $0x698] sm:$0xff]
    %v2097 = vld [vmem:[#allocation6 + $0x6a0] sm:$0xff]
    %v2098 = vld [vmem:[#allocation6 + $0x6a8] sm:$0xff]
    %v2099 = vld [vmem:[#allocation6 + $0x6b0] sm:$0xff]
    %v2100 = vld [vmem:[#allocation6 + $0x6b8] sm:$0xff]
    %v2101 = vld [vmem:[#allocation6 + $0x6c0] sm:$0xff]
    %v2102 = vld [vmem:[#allocation6 + $0x6c8] sm:$0xff]
    %v2103 = vld [vmem:[#allocation6 + $0x6d0] sm:$0xff]
    %v2104 = vld [vmem:[#allocation6 + $0x6d8] sm:$0xff]
    %v2105 = vld [vmem:[#allocation6 + $0x6e0] sm:$0xff]
    %v2106 = vld [vmem:[#allocation6 + $0x6e8] sm:$0xff]
    %v2107 = vld [vmem:[#allocation6 + $0x6f0] sm:$0xff]
    %v2108 = vld [vmem:[#allocation6 + $0x6f8] sm:$0xff]
    %v2109 = vld [vmem:[#allocation6 + $0x700] sm:$0xff]
    %v2110 = vld [vmem:[#allocation6 + $0x708] sm:$0xff]
    %v2111 = vld [vmem:[#allocation6 + $0x710] sm:$0xff]
    %v2112 = vld [vmem:[#allocation6 + $0x718] sm:$0xff]
    %v2113 = vld [vmem:[#allocation6 + $0x720] sm:$0xff]
    %v2114 = vld [vmem:[#allocation6 + $0x728] sm:$0xff]
    %v2115 = vld [vmem:[#allocation6 + $0x730] sm:$0xff]
    %v2116 = vld [vmem:[#allocation6 + $0x738] sm:$0xff]
    %v2117 = vld [vmem:[#allocation6 + $0x740] sm:$0xff]
    %v2118 = vld [vmem:[#allocation6 + $0x748] sm:$0xff]
    %v2119 = vld [vmem:[#allocation6 + $0x750] sm:$0xff]
    %v2120 = vld [vmem:[#allocation6 + $0x758] sm:$0xff]
    %v2121 = vld [vmem:[#allocation6 + $0x760] sm:$0xff]
    %v2122 = vld [vmem:[#allocation6 + $0x768] sm:$0xff]
    %v2123 = vld [vmem:[#allocation6 + $0x770] sm:$0xff]
    %v2124 = vld [vmem:[#allocation6 + $0x778] sm:$0xff]
    %v2125 = vld [vmem:[#allocation6 + $0x780] sm:$0xff]
    %v2126 = vld [vmem:[#allocation6 + $0x788] sm:$0xff]
    %v2127 = vld [vmem:[#allocation6 + $0x790] sm:$0xff]
    %v2128 = vld [vmem:[#allocation6 + $0x798] sm:$0xff]
    %v2129 = vld [vmem:[#allocation6 + $0x7a0] sm:$0xff]
    %v2130 = vld [vmem:[#allocation6 + $0x7a8] sm:$0xff]
    %v2131 = vld [vmem:[#allocation6 + $0x7b0] sm:$0xff]
    %v2132 = vld [vmem:[#allocation6 + $0x7b8] sm:$0xff]
    %v2133 = vld [vmem:[#allocation6 + $0x7c0] sm:$0xff]
    %v2134 = vld [vmem:[#allocation6 + $0x7c8] sm:$0xff]
    %v2135 = vld [vmem:[#allocation6 + $0x7d0] sm:$0xff]
    %v2136 = vld [vmem:[#allocation6 + $0x7d8] sm:$0xff]
    %v2137 = vld [vmem:[#allocation6 + $0x7e0] sm:$0xff]
    %v2138 = vld [vmem:[#allocation6 + $0x7e8] sm:$0xff]
    %v2139 = vld [vmem:[#allocation6 + $0x7f0] sm:$0xff]
    %v2140 = vld [vmem:[#allocation6 + $0x7f8] sm:$0xff]
    %v2141 = vld [vmem:[#allocation6 + $0x800] sm:$0xff]
    %v2142 = vld [vmem:[#allocation6 + $0x808] sm:$0xff]
    %v2143 = vld [vmem:[#allocation6 + $0x810] sm:$0xff]
    %v2144 = vld [vmem:[#allocation6 + $0x818] sm:$0xff]
    %v2145 = vld [vmem:[#allocation6 + $0x820] sm:$0xff]
    %v2146 = vld [vmem:[#allocation6 + $0x828] sm:$0xff]
    %v2147 = vld [vmem:[#allocation6 + $0x830] sm:$0xff]
    %v2148 = vld [vmem:[#allocation6 + $0x838] sm:$0xff]
    %v2149 = vld [vmem:[#allocation6 + $0x840] sm:$0xff]
    %v2150 = vld [vmem:[#allocation6 + $0x848] sm:$0xff]
    %v2151 = vld [vmem:[#allocation6 + $0x850] sm:$0xff]
    %v2152 = vld [vmem:[#allocation6 + $0x858] sm:$0xff]
    %v2153 = vld [vmem:[#allocation6 + $0x860] sm:$0xff]
    %v2154 = vld [vmem:[#allocation6 + $0x868] sm:$0xff]
    %v2155 = vld [vmem:[#allocation6 + $0x870] sm:$0xff]
    %v2156 = vld [vmem:[#allocation6 + $0x878] sm:$0xff]
    %v2157 = vld [vmem:[#allocation6 + $0x880] sm:$0xff]
    %v2158 = vld [vmem:[#allocation6 + $0x888] sm:$0xff]
    %v2159 = vld [vmem:[#allocation6 + $0x890] sm:$0xff]
    %v2160 = vld [vmem:[#allocation6 + $0x898] sm:$0xff]
    %v2161 = vld [vmem:[#allocation6 + $0x8a0] sm:$0xff]
    %v2162 = vld [vmem:[#allocation6 + $0x8a8] sm:$0xff]
    %v2163 = vld [vmem:[#allocation6 + $0x8b0] sm:$0xff]
    %v2164 = vld [vmem:[#allocation6 + $0x8b8] sm:$0xff]
    %v2165 = vld [vmem:[#allocation6 + $0x8c0] sm:$0xff]
    %v2166 = vld [vmem:[#allocation6 + $0x8c8] sm:$0xff]
    %v2167 = vld [vmem:[#allocation6 + $0x8d0] sm:$0xff]
    %v2168 = vld [vmem:[#allocation6 + $0x8d8] sm:$0xff]
    %v2169 = vld [vmem:[#allocation6 + $0x8e0] sm:$0xff]
    %v2170 = vld [vmem:[#allocation6 + $0x8e8] sm:$0xff]
    %v2171 = vld [vmem:[#allocation6 + $0x8f0] sm:$0xff]
    %v2172 = vld [vmem:[#allocation6 + $0x8f8] sm:$0xff]
    %v2173 = vld [vmem:[#allocation6 + $0x900] sm:$0xff]
    %v2174 = vld [vmem:[#allocation6 + $0x908] sm:$0xff]
    %v2175 = vld [vmem:[#allocation6 + $0x910] sm:$0xff]
    %v2176 = vld [vmem:[#allocation6 + $0x918] sm:$0xff]
    %v2177 = vld [vmem:[#allocation6 + $0x920] sm:$0xff]
    %v2178 = vld [vmem:[#allocation6 + $0x928] sm:$0xff]
    %v2179 = vld [vmem:[#allocation6 + $0x930] sm:$0xff]
    %v2180 = vld [vmem:[#allocation6 + $0x938] sm:$0xff]
    %v2181 = vld [vmem:[#allocation6 + $0x940] sm:$0xff]
    %v2182 = vld [vmem:[#allocation6 + $0x948] sm:$0xff]
    %v2183 = vld [vmem:[#allocation6 + $0x950] sm:$0xff]
    %v2184 = vld [vmem:[#allocation6 + $0x958] sm:$0xff]
    %v2185 = vld [vmem:[#allocation6 + $0x960] sm:$0xff]
    %v2186 = vld [vmem:[#allocation6 + $0x968] sm:$0xff]
    %v2187 = vld [vmem:[#allocation6 + $0x970] sm:$0xff]
    %v2188 = vld [vmem:[#allocation6 + $0x978] sm:$0xff]
    %v2189 = vld [vmem:[#allocation6 + $0x980] sm:$0xff]
    %v2190 = vld [vmem:[#allocation6 + $0x988] sm:$0xff]
    %v2191 = vld [vmem:[#allocation6 + $0x990] sm:$0xff]
    %v2192 = vld [vmem:[#allocation6 + $0x998] sm:$0xff]
    %v2193 = vld [vmem:[#allocation6 + $0x9a0] sm:$0xff]
    %v2194 = vld [vmem:[#allocation6 + $0x9a8] sm:$0xff]
    %v2195 = vld [vmem:[#allocation6 + $0x9b0] sm:$0xff]
    %v2196 = vld [vmem:[#allocation6 + $0x9b8] sm:$0xff]
    %v2197 = vld [vmem:[#allocation6 + $0x9c0] sm:$0xff]
    %v2198 = vld [vmem:[#allocation6 + $0x9c8] sm:$0xff]
    %v2199 = vld [vmem:[#allocation6 + $0x9d0] sm:$0xff]
    %v2200 = vld [vmem:[#allocation6 + $0x9d8] sm:$0xff]
    %v2201 = vld [vmem:[#allocation6 + $0x9e0] sm:$0xff]
    %v2202 = vld [vmem:[#allocation6 + $0x9e8] sm:$0xff]
    %v2203 = vld [vmem:[#allocation6 + $0x9f0] sm:$0xff]
    %v2204 = vld [vmem:[#allocation6 + $0x9f8] sm:$0xff]
    %v2205 = vld [vmem:[#allocation6 + $0xa00] sm:$0xff]
    %v2206 = vld [vmem:[#allocation6 + $0xa08] sm:$0xff]
    %v2207 = vld [vmem:[#allocation6 + $0xa10] sm:$0xff]
    %v2208 = vld [vmem:[#allocation6 + $0xa18] sm:$0xff]
    %v2209 = vld [vmem:[#allocation6 + $0xa20] sm:$0xff]
    %v2210 = vld [vmem:[#allocation6 + $0xa28] sm:$0xff]
    %v2211 = vld [vmem:[#allocation6 + $0xa30] sm:$0xff]
    %v2212 = vld [vmem:[#allocation6 + $0xa38] sm:$0xff]
    %v2213 = vld [vmem:[#allocation6 + $0xa40] sm:$0xff]
    %v2214 = vld [vmem:[#allocation6 + $0xa48] sm:$0xff]
    %v2215 = vld [vmem:[#allocation6 + $0xa50] sm:$0xff]
    %v2216 = vld [vmem:[#allocation6 + $0xa58] sm:$0xff]
    %v2217 = vld [vmem:[#allocation6 + $0xa60] sm:$0xff]
    %v2218 = vld [vmem:[#allocation6 + $0xa68] sm:$0xff]
    %v2219 = vld [vmem:[#allocation6 + $0xa70] sm:$0xff]
    %v2220 = vld [vmem:[#allocation6 + $0xa78] sm:$0xff]
    %v2221 = vld [vmem:[#allocation6 + $0xa80] sm:$0xff]
    %v2222 = vld [vmem:[#allocation6 + $0xa88] sm:$0xff]
    %v2223 = vld [vmem:[#allocation6 + $0xa90] sm:$0xff]
    %v2224 = vld [vmem:[#allocation6 + $0xa98] sm:$0xff]
    %v2225 = vld [vmem:[#allocation6 + $0xaa0] sm:$0xff]
    %v2226 = vld [vmem:[#allocation6 + $0xaa8] sm:$0xff]
    %v2227 = vld [vmem:[#allocation6 + $0xab0] sm:$0xff]
    %v2228 = vld [vmem:[#allocation6 + $0xab8] sm:$0xff]
    %v2229 = vld [vmem:[#allocation6 + $0xac0] sm:$0xff]
    %v2230 = vld [vmem:[#allocation6 + $0xac8] sm:$0xff]
    %v2231 = vld [vmem:[#allocation6 + $0xad0] sm:$0xff]
    %v2232 = vld [vmem:[#allocation6 + $0xad8] sm:$0xff]
    %v2233 = vld [vmem:[#allocation6 + $0xae0] sm:$0xff]
    %v2234 = vld [vmem:[#allocation6 + $0xae8] sm:$0xff]
    %v2235 = vld [vmem:[#allocation6 + $0xaf0] sm:$0xff]
    %v2236 = vld [vmem:[#allocation6 + $0xaf8] sm:$0xff]
    %v2237 = vld [vmem:[#allocation6 + $0xb00] sm:$0xff]
    %v2238 = vld [vmem:[#allocation6 + $0xb08] sm:$0xff]
    %v2239 = vld [vmem:[#allocation6 + $0xb10] sm:$0xff]
    %v2240 = vld [vmem:[#allocation6 + $0xb18] sm:$0xff]
    %v2241 = vld [vmem:[#allocation6 + $0xb20] sm:$0xff]
    %v2242 = vld [vmem:[#allocation6 + $0xb28] sm:$0xff]
    %v2243 = vld [vmem:[#allocation6 + $0xb30] sm:$0xff]
    %v2244 = vld [vmem:[#allocation6 + $0xb38] sm:$0xff]
    %v2245 = vld [vmem:[#allocation6 + $0xb40] sm:$0xff]
    %v2246 = vld [vmem:[#allocation6 + $0xb48] sm:$0xff]
    %v2247 = vld [vmem:[#allocation6 + $0xb50] sm:$0xff]
    %v2248 = vld [vmem:[#allocation6 + $0xb58] sm:$0xff]
    %v2249 = vld [vmem:[#allocation6 + $0xb60] sm:$0xff]
    %v2250 = vld [vmem:[#allocation6 + $0xb68] sm:$0xff]
    %v2251 = vld [vmem:[#allocation6 + $0xb70] sm:$0xff]
    %v2252 = vld [vmem:[#allocation6 + $0xb78] sm:$0xff]
    %v2253 = vld [vmem:[#allocation6 + $0xb80] sm:$0xff]
    %v2254 = vld [vmem:[#allocation6 + $0xb88] sm:$0xff]
    %v2255 = vld [vmem:[#allocation6 + $0xb90] sm:$0xff]
    %v2256 = vld [vmem:[#allocation6 + $0xb98] sm:$0xff]
    %v2257 = vld [vmem:[#allocation6 + $0xba0] sm:$0xff]
    %v2258 = vld [vmem:[#allocation6 + $0xba8] sm:$0xff]
    %v2259 = vld [vmem:[#allocation6 + $0xbb0] sm:$0xff]
    %v2260 = vld [vmem:[#allocation6 + $0xbb8] sm:$0xff]
    %v2261 = vld [vmem:[#allocation6 + $0xbc0] sm:$0xff]
    %v2262 = vld [vmem:[#allocation6 + $0xbc8] sm:$0xff]
    %v2263 = vld [vmem:[#allocation6 + $0xbd0] sm:$0xff]
    %v2264 = vld [vmem:[#allocation6 + $0xbd8] sm:$0xff]
    %v2265 = vld [vmem:[#allocation6 + $0xbe0] sm:$0xff]
    %v2266 = vld [vmem:[#allocation6 + $0xbe8] sm:$0xff]
    %v2267 = vld [vmem:[#allocation6 + $0xbf0] sm:$0xff]
    %v2268 = vld [vmem:[#allocation6 + $0xbf8] sm:$0xff]
    %v2269 = vld [vmem:[#allocation6 + $0xc00] sm:$0xff]
    %v2270 = vld [vmem:[#allocation6 + $0xc08] sm:$0xff]
    %v2271 = vld [vmem:[#allocation6 + $0xc10] sm:$0xff]
    %v2272 = vld [vmem:[#allocation6 + $0xc18] sm:$0xff]
    %v2273 = vld [vmem:[#allocation6 + $0xc20] sm:$0xff]
    %v2274 = vld [vmem:[#allocation6 + $0xc28] sm:$0xff]
    %v2275 = vld [vmem:[#allocation6 + $0xc30] sm:$0xff]
    %v2276 = vld [vmem:[#allocation6 + $0xc38] sm:$0xff]
    %v2277 = vld [vmem:[#allocation6 + $0xc40] sm:$0xff]
    %v2278 = vld [vmem:[#allocation6 + $0xc48] sm:$0xff]
    %v2279 = vld [vmem:[#allocation6 + $0xc50] sm:$0xff]
    %v2280 = vld [vmem:[#allocation6 + $0xc58] sm:$0xff]
    %v2281 = vld [vmem:[#allocation6 + $0xc60] sm:$0xff]
    %v2282 = vld [vmem:[#allocation6 + $0xc68] sm:$0xff]
    %v2283 = vld [vmem:[#allocation6 + $0xc70] sm:$0xff]
    %v2284 = vld [vmem:[#allocation6 + $0xc78] sm:$0xff]
    %v2285 = vld [vmem:[#allocation6 + $0xc80] sm:$0xff]
    %v2286 = vld [vmem:[#allocation6 + $0xc88] sm:$0xff]
    %v2287 = vld [vmem:[#allocation6 + $0xc90] sm:$0xff]
    %v2288 = vld [vmem:[#allocation6 + $0xc98] sm:$0xff]
    %v2289 = vld [vmem:[#allocation6 + $0xca0] sm:$0xff]
    %v2290 = vld [vmem:[#allocation6 + $0xca8] sm:$0xff]
    %v2291 = vld [vmem:[#allocation6 + $0xcb0] sm:$0xff]
    %v2292 = vld [vmem:[#allocation6 + $0xcb8] sm:$0xff]
    %v2293 = vld [vmem:[#allocation6 + $0xcc0] sm:$0xff]
    %v2294 = vld [vmem:[#allocation6 + $0xcc8] sm:$0xff]
    %v2295 = vld [vmem:[#allocation6 + $0xcd0] sm:$0xff]
    %v2296 = vld [vmem:[#allocation6 + $0xcd8] sm:$0xff]
    %v2297 = vld [vmem:[#allocation6 + $0xce0] sm:$0xff]
    %v2298 = vld [vmem:[#allocation6 + $0xce8] sm:$0xff]
    %v2299 = vld [vmem:[#allocation6 + $0xcf0] sm:$0xff]
    %v2300 = vld [vmem:[#allocation6 + $0xcf8] sm:$0xff]
    %v2301 = vld [vmem:[#allocation6 + $0xd00] sm:$0xff]
    %v2302 = vld [vmem:[#allocation6 + $0xd08] sm:$0xff]
    %v2303 = vld [vmem:[#allocation6 + $0xd10] sm:$0xff]
    %v2304 = vld [vmem:[#allocation6 + $0xd18] sm:$0xff]
    %v2305 = vld [vmem:[#allocation6 + $0xd20] sm:$0xff]
    %v2306 = vld [vmem:[#allocation6 + $0xd28] sm:$0xff]
    %v2307 = vld [vmem:[#allocation6 + $0xd30] sm:$0xff]
    %v2308 = vld [vmem:[#allocation6 + $0xd38] sm:$0xff]
    %v2309 = vld [vmem:[#allocation6 + $0xd40] sm:$0xff]
    %v2310 = vld [vmem:[#allocation6 + $0xd48] sm:$0xff]
    %v2311 = vld [vmem:[#allocation6 + $0xd50] sm:$0xff]
    %v2312 = vld [vmem:[#allocation6 + $0xd58] sm:$0xff]
    %v2313 = vld [vmem:[#allocation6 + $0xd60] sm:$0xff]
    %v2314 = vld [vmem:[#allocation6 + $0xd68] sm:$0xff]
    %v2315 = vld [vmem:[#allocation6 + $0xd70] sm:$0xff]
    %v2316 = vld [vmem:[#allocation6 + $0xd78] sm:$0xff]
    %v2317 = vld [vmem:[#allocation6 + $0xd80] sm:$0xff]
    %v2318 = vld [vmem:[#allocation6 + $0xd88] sm:$0xff]
    %v2319 = vld [vmem:[#allocation6 + $0xd90] sm:$0xff]
    %v2320 = vld [vmem:[#allocation6 + $0xd98] sm:$0xff]
    %v2321 = vld [vmem:[#allocation6 + $0xda0] sm:$0xff]
    %v2322 = vld [vmem:[#allocation6 + $0xda8] sm:$0xff]
    %v2323 = vld [vmem:[#allocation6 + $0xdb0] sm:$0xff]
    %v2324 = vld [vmem:[#allocation6 + $0xdb8] sm:$0xff]
    %v2325 = vld [vmem:[#allocation6 + $0xdc0] sm:$0xff]
    %v2326 = vld [vmem:[#allocation6 + $0xdc8] sm:$0xff]
    %v2327 = vld [vmem:[#allocation6 + $0xdd0] sm:$0xff]
    %v2328 = vld [vmem:[#allocation6 + $0xdd8] sm:$0xff]
    %v2329 = vld [vmem:[#allocation6 + $0xde0] sm:$0xff]
    %v2330 = vld [vmem:[#allocation6 + $0xde8] sm:$0xff]
    %v2331 = vld [vmem:[#allocation6 + $0xdf0] sm:$0xff]
    %v2332 = vld [vmem:[#allocation6 + $0xdf8] sm:$0xff]
    %v2334 = vlaneseq
    %v2335 = vshrl.u32 %v2334, 7
    %v2336 = vsub.s32 0, %v2335
    %v2337 = vrot.slane %v211, %v2336
    %v2338 = vlaneseq
    %v2339 = vshrl.u32 %v2338, 7
    %v2340 = vsub.s32 1, %v2339
    %v2341 = vrot.slane %v211, %v2340
    %v2342 = vlaneseq
    %v2343 = vshrl.u32 %v2342, 7
    %v2344 = vsub.s32 2, %v2343
    %v2345 = vrot.slane %v211, %v2344
    %v2346 = vlaneseq
    %v2347 = vshrl.u32 %v2346, 7
    %v2348 = vsub.s32 3, %v2347
    %v2349 = vrot.slane %v211, %v2348
    %v2350 = vlaneseq
    %v2351 = vshrl.u32 %v2350, 7
    %v2352 = vsub.s32 4, %v2351
    %v2353 = vrot.slane %v211, %v2352
    %v2354 = vlaneseq
    %v2355 = vshrl.u32 %v2354, 7
    %v2356 = vsub.s32 5, %v2355
    %v2357 = vrot.slane %v211, %v2356
    %v2358 = vlaneseq
    %v2359 = vshrl.u32 %v2358, 7
    %v2360 = vsub.s32 6, %v2359
    %v2361 = vrot.slane %v211, %v2360
    %2369 = vmatprep.subr.bf16.mxu0 %v1886
    %2370 = vmatpush1.bf16.msra.mxu0 %v1885
    %2371 = vmatprep.subr.bf16.mxu0 %v1893
    %2372 = vmatpush1.bf16.msra.mxu0 %v1892
    %2373 = vmatprep.subr.bf16.mxu0 %v1900
    %2374 = vmatpush1.bf16.msra.mxu0 %v1899
    %2375 = vmatprep.subr.bf16.mxu0 %v1907
    %2376 = vmatpush1.bf16.msra.mxu0 %v1906
    %2377 = vmatprep.subr.bf16.mxu0 %v1914
    %2378 = vmatpush1.bf16.msra.mxu0 %v1913
    %2379 = vmatprep.subr.bf16.mxu0 %v1921
    %2380 = vmatpush1.bf16.msra.mxu0 %v1920
    %2381 = vmatprep.subr.bf16.mxu0 %v1928
    %2382 = vmatpush1.bf16.msra.mxu0 %v1927
    %2383 = vmatprep.subr.bf16.mxu0 %v1935
    %2384 = vmatpush1.bf16.msra.mxu0 %v1934
    %2385 = vmatprep.subr.bf16.mxu0 %v1942
    %2386 = vmatpush1.bf16.msra.mxu0 %v1941
    %2387 = vmatprep.subr.bf16.mxu0 %v1949
    %2388 = vmatpush1.bf16.msra.mxu0 %v1948
    %2389 = vmatprep.subr.bf16.mxu0 %v1956
    %2390 = vmatpush1.bf16.msra.mxu0 %v1955
    %2391 = vmatprep.subr.bf16.mxu0 %v1963
    %2392 = vmatpush1.bf16.msra.mxu0 %v1962
    %2393 = vmatprep.subr.bf16.mxu0 %v1970
    %2394 = vmatpush1.bf16.msra.mxu0 %v1969
    %2395 = vmatprep.subr.bf16.mxu0 %v1977
    %2396 = vmatpush1.bf16.msra.mxu0 %v1976
    %2397 = vmatprep.subr.bf16.mxu0 %v1984
    %2398 = vmatpush1.bf16.msra.mxu0 %v1983
    %2399 = vmatprep.subr.bf16.mxu0 %v1991
    %2400 = vmatpush1.bf16.msra.mxu0 %v1990
    %2401 = vmatprep.mubr.bf16.mxu0 %v1878
    %2402 = vmatmul.mubr.bf16.gmra.mrb[0].mxu0 %v1877
    %v2403 = vpop.f32.mrb[0].mxu0
    %v2404 = vadd.f32 %v2337, %v2403
    %v2405 = vpop.f32.mrb[0].mxu0
    %v2406 = vadd.f32 %v2341, %v2405
    %v2407 = vpop.f32.mrb[0].mxu0
    %v2408 = vpop.f32.mrb[0].mxu0
    %2409 = vdwg.mxu0
    %2410 = vmatprep.subr.bf16.mxu0 %v1998
    %2411 = vmatpush1.bf16.msra.mxu0 %v1997
    %2412 = vmatprep.subr.bf16.mxu0 %v2005
    %2413 = vmatpush1.bf16.msra.mxu0 %v2004
    %2414 = vmatprep.subr.bf16.mxu0 %v2012
    %2415 = vmatpush1.bf16.msra.mxu0 %v2011
    %2416 = vmatprep.subr.bf16.mxu0 %v2019
    %2417 = vmatpush1.bf16.msra.mxu0 %v2018
    %2418 = vmatprep.subr.bf16.mxu0 %v2026
    %2419 = vmatpush1.bf16.msra.mxu0 %v2025
    %2420 = vmatprep.subr.bf16.mxu0 %v2033
    %2421 = vmatpush1.bf16.msra.mxu0 %v2032
    %2422 = vmatprep.subr.bf16.mxu0 %v2040
    %2423 = vmatpush1.bf16.msra.mxu0 %v2039
    %2424 = vmatprep.subr.bf16.mxu0 %v2047
    %2425 = vmatpush1.bf16.msra.mxu0 %v2046
    %2426 = vmatprep.subr.bf16.mxu0 %v2054
    %2427 = vmatpush1.bf16.msra.mxu0 %v2053
    %2428 = vmatprep.subr.bf16.mxu0 %v2061
    %2429 = vmatpush1.bf16.msra.mxu0 %v2060
    %2430 = vmatprep.subr.bf16.mxu0 %v2068
    %2431 = vmatpush1.bf16.msra.mxu0 %v2067
    %2432 = vmatprep.subr.bf16.mxu0 %v2075
    %2433 = vmatpush1.bf16.msra.mxu0 %v2074
    %2434 = vmatprep.subr.bf16.mxu0 %v2082
    %2435 = vmatpush1.bf16.msra.mxu0 %v2081
    %2436 = vmatprep.subr.bf16.mxu0 %v2089
    %2437 = vmatpush1.bf16.msra.mxu0 %v2088
    %2438 = vmatprep.subr.bf16.mxu0 %v2096
    %2439 = vmatpush1.bf16.msra.mxu0 %v2095
    %2440 = vmatprep.subr.bf16.mxu0 %v2103
    %2441 = vmatpush1.bf16.msra.mxu0 %v2102
    %2442 = vmatprep.mubr.bf16.mxu0 %v1880
    %2443 = vmatmul.mubr.bf16.gmra.mrb[0].mxu0 %v1879
    %v2444 = vpop.f32.mrb[0].mxu0
    %v2445 = vadd.f32 %v2404, %v2444
    %v2446 = vpop.f32.mrb[0].mxu0
    %v2447 = vadd.f32 %v2406, %v2446
    %v2448 = vpop.f32.mrb[0].mxu0
    %v2449 = vpop.f32.mrb[0].mxu0
    %2450 = vdwg.mxu0
    %2451 = vmatprep.subr.bf16.mxu0 %v2110
    %2452 = vmatpush1.bf16.msra.mxu0 %v2109
    %2453 = vmatprep.subr.bf16.mxu0 %v2117
    %2454 = vmatpush1.bf16.msra.mxu0 %v2116
    %2455 = vmatprep.subr.bf16.mxu0 %v2124
    %2456 = vmatpush1.bf16.msra.mxu0 %v2123
    %2457 = vmatprep.subr.bf16.mxu0 %v2131
    %2458 = vmatpush1.bf16.msra.mxu0 %v2130
    %2459 = vmatprep.subr.bf16.mxu0 %v2138
    %2460 = vmatpush1.bf16.msra.mxu0 %v2137
    %2461 = vmatprep.subr.bf16.mxu0 %v2145
    %2462 = vmatpush1.bf16.msra.mxu0 %v2144
    %2463 = vmatprep.subr.bf16.mxu0 %v2152
    %2464 = vmatpush1.bf16.msra.mxu0 %v2151
    %2465 = vmatprep.subr.bf16.mxu0 %v2159
    %2466 = vmatpush1.bf16.msra.mxu0 %v2158
    %2467 = vmatprep.subr.bf16.mxu0 %v2166
    %2468 = vmatpush1.bf16.msra.mxu0 %v2165
    %2469 = vmatprep.subr.bf16.mxu0 %v2173
    %2470 = vmatpush1.bf16.msra.mxu0 %v2172
    %2471 = vmatprep.subr.bf16.mxu0 %v2180
    %2472 = vmatpush1.bf16.msra.mxu0 %v2179
    %2473 = vmatprep.subr.bf16.mxu0 %v2187
    %2474 = vmatpush1.bf16.msra.mxu0 %v2186
    %2475 = vmatprep.subr.bf16.mxu0 %v2194
    %2476 = vmatpush1.bf16.msra.mxu0 %v2193
    %2477 = vmatprep.subr.bf16.mxu0 %v2201
    %2478 = vmatpush1.bf16.msra.mxu0 %v2200
    %2479 = vmatprep.subr.bf16.mxu0 %v2208
    %2480 = vmatpush1.bf16.msra.mxu0 %v2207
    %2481 = vmatprep.subr.bf16.mxu0 %v2215
    %2482 = vmatpush1.bf16.msra.mxu0 %v2214
    %2483 = vmatprep.mubr.bf16.mxu0 %v1882
    %2484 = vmatmul.mubr.bf16.gmra.mrb[0].mxu0 %v1881
    %v2485 = vpop.f32.mrb[0].mxu0
    %v2486 = vadd.f32 %v2445, %v2485
    %v2487 = vpop.f32.mrb[0].mxu0
    %v2488 = vadd.f32 %v2447, %v2487
    %v2489 = vpop.f32.mrb[0].mxu0
    %v2490 = vpop.f32.mrb[0].mxu0
    %2491 = vdwg.mxu0
    %2492 = vmatprep.subr.bf16.mxu0 %v2222
    %2493 = vmatpush1.bf16.msra.mxu0 %v2221
    %2494 = vmatprep.subr.bf16.mxu0 %v2229
    %2495 = vmatpush1.bf16.msra.mxu0 %v2228
    %2496 = vmatprep.subr.bf16.mxu0 %v2236
    %2497 = vmatpush1.bf16.msra.mxu0 %v2235
    %2498 = vmatprep.subr.bf16.mxu0 %v2243
    %2499 = vmatpush1.bf16.msra.mxu0 %v2242
    %2500 = vmatprep.subr.bf16.mxu0 %v2250
    %2501 = vmatpush1.bf16.msra.mxu0 %v2249
    %2502 = vmatprep.subr.bf16.mxu0 %v2257
    %2503 = vmatpush1.bf16.msra.mxu0 %v2256
    %2504 = vmatprep.subr.bf16.mxu0 %v2264
    %2505 = vmatpush1.bf16.msra.mxu0 %v2263
    %2506 = vmatprep.subr.bf16.mxu0 %v2271
    %2507 = vmatpush1.bf16.msra.mxu0 %v2270
    %2508 = vmatprep.subr.bf16.mxu0 %v2278
    %2509 = vmatpush1.bf16.msra.mxu0 %v2277
    %2510 = vmatprep.subr.bf16.mxu0 %v2285
    %2511 = vmatpush1.bf16.msra.mxu0 %v2284
    %2512 = vmatprep.subr.bf16.mxu0 %v2292
    %2513 = vmatpush1.bf16.msra.mxu0 %v2291
    %2514 = vmatprep.subr.bf16.mxu0 %v2299
    %2515 = vmatpush1.bf16.msra.mxu0 %v2298
    %2516 = vmatprep.subr.bf16.mxu0 %v2306
    %2517 = vmatpush1.bf16.msra.mxu0 %v2305
    %2518 = vmatprep.subr.bf16.mxu0 %v2313
    %2519 = vmatpush1.bf16.msra.mxu0 %v2312
    %2520 = vmatprep.subr.bf16.mxu0 %v2320
    %2521 = vmatpush1.bf16.msra.mxu0 %v2319
    %2522 = vmatprep.subr.bf16.mxu0 %v2327
    %2523 = vmatpush1.bf16.msra.mxu0 %v2326
    %2524 = vmatprep.mubr.bf16.mxu0 %v1884
    %2525 = vmatmul.mubr.bf16.gmra.mrb[0].mxu0 %v1883
    %v2526 = vpop.f32.mrb[0].mxu0
    %v2527 = vadd.f32 %v2486, %v2526
    %v2528 = vpop.f32.mrb[0].mxu0
    %v2529 = vadd.f32 %v2488, %v2528
    %v2530 = vpop.f32.mrb[0].mxu0
    %v2531 = vpop.f32.mrb[0].mxu0
    %2532 = vdwg.mxu0
    %2533 = vmatprep.subr.bf16.mxu0 %v1888
    %2534 = vmatpush1.bf16.msra.mxu0 %v1887
    %2535 = vmatprep.subr.bf16.mxu0 %v1895
    %2536 = vmatpush1.bf16.msra.mxu0 %v1894
    %2537 = vmatprep.subr.bf16.mxu0 %v1902
    %2538 = vmatpush1.bf16.msra.mxu0 %v1901
    %2539 = vmatprep.subr.bf16.mxu0 %v1909
    %2540 = vmatpush1.bf16.msra.mxu0 %v1908
    %2541 = vmatprep.subr.bf16.mxu0 %v1916
    %2542 = vmatpush1.bf16.msra.mxu0 %v1915
    %2543 = vmatprep.subr.bf16.mxu0 %v1923
    %2544 = vmatpush1.bf16.msra.mxu0 %v1922
    %2545 = vmatprep.subr.bf16.mxu0 %v1930
    %2546 = vmatpush1.bf16.msra.mxu0 %v1929
    %2547 = vmatprep.subr.bf16.mxu0 %v1937
    %2548 = vmatpush1.bf16.msra.mxu0 %v1936
    %2549 = vmatprep.subr.bf16.mxu0 %v1944
    %2550 = vmatpush1.bf16.msra.mxu0 %v1943
    %2551 = vmatprep.subr.bf16.mxu0 %v1951
    %2552 = vmatpush1.bf16.msra.mxu0 %v1950
    %2553 = vmatprep.subr.bf16.mxu0 %v1958
    %2554 = vmatpush1.bf16.msra.mxu0 %v1957
    %2555 = vmatprep.subr.bf16.mxu0 %v1965
    %2556 = vmatpush1.bf16.msra.mxu0 %v1964
    %2557 = vmatprep.subr.bf16.mxu0 %v1972
    %2558 = vmatpush1.bf16.msra.mxu0 %v1971
    %2559 = vmatprep.subr.bf16.mxu0 %v1979
    %2560 = vmatpush1.bf16.msra.mxu0 %v1978
    %2561 = vmatprep.subr.bf16.mxu0 %v1986
    %2562 = vmatpush1.bf16.msra.mxu0 %v1985
    %2563 = vmatprep.subr.bf16.mxu0 %v1993
    %2564 = vmatpush1.bf16.msra.mxu0 %v1992
    %2565 = vmatprep.mubr.bf16.mxu0 %v1878
    %2566 = vmatmul.mubr.bf16.gmra.mrb[0].mxu0 %v1877
    %v2567 = vpop.f32.mrb[0].mxu0
    %v2568 = vadd.f32 %v2345, %v2567
    %v2569 = vpop.f32.mrb[0].mxu0
    %v2570 = vadd.f32 %v2349, %v2569
    %v2571 = vpop.f32.mrb[0].mxu0
    %v2572 = vpop.f32.mrb[0].mxu0
    %2573 = vdwg.mxu0
    %2574 = vmatprep.subr.bf16.mxu0 %v2000
    %2575 = vmatpush1.bf16.msra.mxu0 %v1999
    %2576 = vmatprep.subr.bf16.mxu0 %v2007
    %2577 = vmatpush1.bf16.msra.mxu0 %v2006
    %2578 = vmatprep.subr.bf16.mxu0 %v2014
    %2579 = vmatpush1.bf16.msra.mxu0 %v2013
    %2580 = vmatprep.subr.bf16.mxu0 %v2021
    %2581 = vmatpush1.bf16.msra.mxu0 %v2020
    %2582 = vmatprep.subr.bf16.mxu0 %v2028
    %2583 = vmatpush1.bf16.msra.mxu0 %v2027
    %2584 = vmatprep.subr.bf16.mxu0 %v2035
    %2585 = vmatpush1.bf16.msra.mxu0 %v2034
    %2586 = vmatprep.subr.bf16.mxu0 %v2042
    %2587 = vmatpush1.bf16.msra.mxu0 %v2041
    %2588 = vmatprep.subr.bf16.mxu0 %v2049
    %2589 = vmatpush1.bf16.msra.mxu0 %v2048
    %2590 = vmatprep.subr.bf16.mxu0 %v2056
    %2591 = vmatpush1.bf16.msra.mxu0 %v2055
    %2592 = vmatprep.subr.bf16.mxu0 %v2063
    %2593 = vmatpush1.bf16.msra.mxu0 %v2062
    %2594 = vmatprep.subr.bf16.mxu0 %v2070
    %2595 = vmatpush1.bf16.msra.mxu0 %v2069
    %2596 = vmatprep.subr.bf16.mxu0 %v2077
    %2597 = vmatpush1.bf16.msra.mxu0 %v2076
    %2598 = vmatprep.subr.bf16.mxu0 %v2084
    %2599 = vmatpush1.bf16.msra.mxu0 %v2083
    %2600 = vmatprep.subr.bf16.mxu0 %v2091
    %2601 = vmatpush1.bf16.msra.mxu0 %v2090
    %2602 = vmatprep.subr.bf16.mxu0 %v2098
    %2603 = vmatpush1.bf16.msra.mxu0 %v2097
    %2604 = vmatprep.subr.bf16.mxu0 %v2105
    %2605 = vmatpush1.bf16.msra.mxu0 %v2104
    %2606 = vmatprep.mubr.bf16.mxu0 %v1880
    %2607 = vmatmul.mubr.bf16.gmra.mrb[0].mxu0 %v1879
    %v2608 = vpop.f32.mrb[0].mxu0
    %v2609 = vadd.f32 %v2568, %v2608
    %v2610 = vpop.f32.mrb[0].mxu0
    %v2611 = vadd.f32 %v2570, %v2610
    %v2612 = vpop.f32.mrb[0].mxu0
    %v2613 = vpop.f32.mrb[0].mxu0
    %2614 = vdwg.mxu0
    %2615 = vmatprep.subr.bf16.mxu0 %v2112
    %2616 = vmatpush1.bf16.msra.mxu0 %v2111
    %2617 = vmatprep.subr.bf16.mxu0 %v2119
    %2618 = vmatpush1.bf16.msra.mxu0 %v2118
    %2619 = vmatprep.subr.bf16.mxu0 %v2126
    %2620 = vmatpush1.bf16.msra.mxu0 %v2125
    %2621 = vmatprep.subr.bf16.mxu0 %v2133
    %2622 = vmatpush1.bf16.msra.mxu0 %v2132
    %2623 = vmatprep.subr.bf16.mxu0 %v2140
    %2624 = vmatpush1.bf16.msra.mxu0 %v2139
    %2625 = vmatprep.subr.bf16.mxu0 %v2147
    %2626 = vmatpush1.bf16.msra.mxu0 %v2146
    %2627 = vmatprep.subr.bf16.mxu0 %v2154
    %2628 = vmatpush1.bf16.msra.mxu0 %v2153
    %2629 = vmatprep.subr.bf16.mxu0 %v2161
    %2630 = vmatpush1.bf16.msra.mxu0 %v2160
    %2631 = vmatprep.subr.bf16.mxu0 %v2168
    %2632 = vmatpush1.bf16.msra.mxu0 %v2167
    %2633 = vmatprep.subr.bf16.mxu0 %v2175
    %2634 = vmatpush1.bf16.msra.mxu0 %v2174
    %2635 = vmatprep.subr.bf16.mxu0 %v2182
    %2636 = vmatpush1.bf16.msra.mxu0 %v2181
    %2637 = vmatprep.subr.bf16.mxu0 %v2189
    %2638 = vmatpush1.bf16.msra.mxu0 %v2188
    %2639 = vmatprep.subr.bf16.mxu0 %v2196
    %2640 = vmatpush1.bf16.msra.mxu0 %v2195
    %2641 = vmatprep.subr.bf16.mxu0 %v2203
    %2642 = vmatpush1.bf16.msra.mxu0 %v2202
    %2643 = vmatprep.subr.bf16.mxu0 %v2210
    %2644 = vmatpush1.bf16.msra.mxu0 %v2209
    %2645 = vmatprep.subr.bf16.mxu0 %v2217
    %2646 = vmatpush1.bf16.msra.mxu0 %v2216
    %2647 = vmatprep.mubr.bf16.mxu0 %v1882
    %2648 = vmatmul.mubr.bf16.gmra.mrb[0].mxu0 %v1881
    %v2649 = vpop.f32.mrb[0].mxu0
    %v2650 = vadd.f32 %v2609, %v2649
    %v2651 = vpop.f32.mrb[0].mxu0
    %v2652 = vadd.f32 %v2611, %v2651
    %v2653 = vpop.f32.mrb[0].mxu0
    %v2654 = vpop.f32.mrb[0].mxu0
    %2655 = vdwg.mxu0
    %2656 = vmatprep.subr.bf16.mxu0 %v2224
    %2657 = vmatpush1.bf16.msra.mxu0 %v2223
    %2658 = vmatprep.subr.bf16.mxu0 %v2231
    %2659 = vmatpush1.bf16.msra.mxu0 %v2230
    %2660 = vmatprep.subr.bf16.mxu0 %v2238
    %2661 = vmatpush1.bf16.msra.mxu0 %v2237
    %2662 = vmatprep.subr.bf16.mxu0 %v2245
    %2663 = vmatpush1.bf16.msra.mxu0 %v2244
    %2664 = vmatprep.subr.bf16.mxu0 %v2252
    %2665 = vmatpush1.bf16.msra.mxu0 %v2251
    %2666 = vmatprep.subr.bf16.mxu0 %v2259
    %2667 = vmatpush1.bf16.msra.mxu0 %v2258
    %2668 = vmatprep.subr.bf16.mxu0 %v2266
    %2669 = vmatpush1.bf16.msra.mxu0 %v2265
    %2670 = vmatprep.subr.bf16.mxu0 %v2273
    %2671 = vmatpush1.bf16.msra.mxu0 %v2272
    %2672 = vmatprep.subr.bf16.mxu0 %v2280
    %2673 = vmatpush1.bf16.msra.mxu0 %v2279
    %2674 = vmatprep.subr.bf16.mxu0 %v2287
    %2675 = vmatpush1.bf16.msra.mxu0 %v2286
    %2676 = vmatprep.subr.bf16.mxu0 %v2294
    %2677 = vmatpush1.bf16.msra.mxu0 %v2293
    %2678 = vmatprep.subr.bf16.mxu0 %v2301
    %2679 = vmatpush1.bf16.msra.mxu0 %v2300
    %2680 = vmatprep.subr.bf16.mxu0 %v2308
    %2681 = vmatpush1.bf16.msra.mxu0 %v2307
    %2682 = vmatprep.subr.bf16.mxu0 %v2315
    %2683 = vmatpush1.bf16.msra.mxu0 %v2314
    %2684 = vmatprep.subr.bf16.mxu0 %v2322
    %2685 = vmatpush1.bf16.msra.mxu0 %v2321
    %2686 = vmatprep.subr.bf16.mxu0 %v2329
    %2687 = vmatpush1.bf16.msra.mxu0 %v2328
    %2688 = vmatprep.mubr.bf16.mxu0 %v1884
    %2689 = vmatmul.mubr.bf16.gmra.mrb[0].mxu0 %v1883
    %v2690 = vpop.f32.mrb[0].mxu0
    %v2691 = vadd.f32 %v2650, %v2690
    %v2692 = vpop.f32.mrb[0].mxu0
    %v2693 = vadd.f32 %v2652, %v2692
    %v2694 = vpop.f32.mrb[0].mxu0
    %v2695 = vpop.f32.mrb[0].mxu0
    %2696 = vdwg.mxu0
    %2697 = vmatprep.subr.bf16.mxu0 %v1890
    %2698 = vmatpush1.bf16.msra.mxu0 %v1889
    %2699 = vmatprep.subr.bf16.mxu0 %v1897
    %2700 = vmatpush1.bf16.msra.mxu0 %v1896
    %2701 = vmatprep.subr.bf16.mxu0 %v1904
    %2702 = vmatpush1.bf16.msra.mxu0 %v1903
    %2703 = vmatprep.subr.bf16.mxu0 %v1911
    %2704 = vmatpush1.bf16.msra.mxu0 %v1910
    %2705 = vmatprep.subr.bf16.mxu0 %v1918
    %2706 = vmatpush1.bf16.msra.mxu0 %v1917
    %2707 = vmatprep.subr.bf16.mxu0 %v1925
    %2708 = vmatpush1.bf16.msra.mxu0 %v1924
    %2709 = vmatprep.subr.bf16.mxu0 %v1932
    %2710 = vmatpush1.bf16.msra.mxu0 %v1931
    %2711 = vmatprep.subr.bf16.mxu0 %v1939
    %2712 = vmatpush1.bf16.msra.mxu0 %v1938
    %2713 = vmatprep.subr.bf16.mxu0 %v1946
    %2714 = vmatpush1.bf16.msra.mxu0 %v1945
    %2715 = vmatprep.subr.bf16.mxu0 %v1953
    %2716 = vmatpush1.bf16.msra.mxu0 %v1952
    %2717 = vmatprep.subr.bf16.mxu0 %v1960
    %2718 = vmatpush1.bf16.msra.mxu0 %v1959
    %2719 = vmatprep.subr.bf16.mxu0 %v1967
    %2720 = vmatpush1.bf16.msra.mxu0 %v1966
    %2721 = vmatprep.subr.bf16.mxu0 %v1974
    %2722 = vmatpush1.bf16.msra.mxu0 %v1973
    %2723 = vmatprep.subr.bf16.mxu0 %v1981
    %2724 = vmatpush1.bf16.msra.mxu0 %v1980
    %2725 = vmatprep.subr.bf16.mxu0 %v1988
    %2726 = vmatpush1.bf16.msra.mxu0 %v1987
    %2727 = vmatprep.subr.bf16.mxu0 %v1995
    %2728 = vmatpush1.bf16.msra.mxu0 %v1994
    %2729 = vmatprep.mubr.bf16.mxu0 %v1878
    %2730 = vmatmul.mubr.bf16.gmra.mrb[0].mxu0 %v1877
    %v2731 = vpop.f32.mrb[0].mxu0
    %v2732 = vadd.f32 %v2353, %v2731
    %v2733 = vpop.f32.mrb[0].mxu0
    %v2734 = vadd.f32 %v2357, %v2733
    %v2735 = vpop.f32.mrb[0].mxu0
    %v2736 = vpop.f32.mrb[0].mxu0
    %2737 = vdwg.mxu0
    %2738 = vmatprep.subr.bf16.mxu0 %v2002
    %2739 = vmatpush1.bf16.msra.mxu0 %v2001
    %2740 = vmatprep.subr.bf16.mxu0 %v2009
    %2741 = vmatpush1.bf16.msra.mxu0 %v2008
    %2742 = vmatprep.subr.bf16.mxu0 %v2016
    %2743 = vmatpush1.bf16.msra.mxu0 %v2015
    %2744 = vmatprep.subr.bf16.mxu0 %v2023
    %2745 = vmatpush1.bf16.msra.mxu0 %v2022
    %2746 = vmatprep.subr.bf16.mxu0 %v2030
    %2747 = vmatpush1.bf16.msra.mxu0 %v2029
    %2748 = vmatprep.subr.bf16.mxu0 %v2037
    %2749 = vmatpush1.bf16.msra.mxu0 %v2036
    %2750 = vmatprep.subr.bf16.mxu0 %v2044
    %2751 = vmatpush1.bf16.msra.mxu0 %v2043
    %2752 = vmatprep.subr.bf16.mxu0 %v2051
    %2753 = vmatpush1.bf16.msra.mxu0 %v2050
    %2754 = vmatprep.subr.bf16.mxu0 %v2058
    %2755 = vmatpush1.bf16.msra.mxu0 %v2057
    %2756 = vmatprep.subr.bf16.mxu0 %v2065
    %2757 = vmatpush1.bf16.msra.mxu0 %v2064
    %2758 = vmatprep.subr.bf16.mxu0 %v2072
    %2759 = vmatpush1.bf16.msra.mxu0 %v2071
    %2760 = vmatprep.subr.bf16.mxu0 %v2079
    %2761 = vmatpush1.bf16.msra.mxu0 %v2078
    %2762 = vmatprep.subr.bf16.mxu0 %v2086
    %2763 = vmatpush1.bf16.msra.mxu0 %v2085
    %2764 = vmatprep.subr.bf16.mxu0 %v2093
    %2765 = vmatpush1.bf16.msra.mxu0 %v2092
    %2766 = vmatprep.subr.bf16.mxu0 %v2100
    %2767 = vmatpush1.bf16.msra.mxu0 %v2099
    %2768 = vmatprep.subr.bf16.mxu0 %v2107
    %2769 = vmatpush1.bf16.msra.mxu0 %v2106
    %2770 = vmatprep.mubr.bf16.mxu0 %v1880
    %2771 = vmatmul.mubr.bf16.gmra.mrb[0].mxu0 %v1879
    %v2772 = vpop.f32.mrb[0].mxu0
    %v2773 = vadd.f32 %v2732, %v2772
    %v2774 = vpop.f32.mrb[0].mxu0
    %v2775 = vadd.f32 %v2734, %v2774
    %v2776 = vpop.f32.mrb[0].mxu0
    %v2777 = vpop.f32.mrb[0].mxu0
    %2778 = vdwg.mxu0
    %2779 = vmatprep.subr.bf16.mxu0 %v2114
    %2780 = vmatpush1.bf16.msra.mxu0 %v2113
    %2781 = vmatprep.subr.bf16.mxu0 %v2121
    %2782 = vmatpush1.bf16.msra.mxu0 %v2120
    %2783 = vmatprep.subr.bf16.mxu0 %v2128
    %2784 = vmatpush1.bf16.msra.mxu0 %v2127
    %2785 = vmatprep.subr.bf16.mxu0 %v2135
    %2786 = vmatpush1.bf16.msra.mxu0 %v2134
    %2787 = vmatprep.subr.bf16.mxu0 %v2142
    %2788 = vmatpush1.bf16.msra.mxu0 %v2141
    %2789 = vmatprep.subr.bf16.mxu0 %v2149
    %2790 = vmatpush1.bf16.msra.mxu0 %v2148
    %2791 = vmatprep.subr.bf16.mxu0 %v2156
    %2792 = vmatpush1.bf16.msra.mxu0 %v2155
    %2793 = vmatprep.subr.bf16.mxu0 %v2163
    %2794 = vmatpush1.bf16.msra.mxu0 %v2162
    %2795 = vmatprep.subr.bf16.mxu0 %v2170
    %2796 = vmatpush1.bf16.msra.mxu0 %v2169
    %2797 = vmatprep.subr.bf16.mxu0 %v2177
    %2798 = vmatpush1.bf16.msra.mxu0 %v2176
    %2799 = vmatprep.subr.bf16.mxu0 %v2184
    %2800 = vmatpush1.bf16.msra.mxu0 %v2183
    %2801 = vmatprep.subr.bf16.mxu0 %v2191
    %2802 = vmatpush1.bf16.msra.mxu0 %v2190
    %2803 = vmatprep.subr.bf16.mxu0 %v2198
    %2804 = vmatpush1.bf16.msra.mxu0 %v2197
    %2805 = vmatprep.subr.bf16.mxu0 %v2205
    %2806 = vmatpush1.bf16.msra.mxu0 %v2204
    %2807 = vmatprep.subr.bf16.mxu0 %v2212
    %2808 = vmatpush1.bf16.msra.mxu0 %v2211
    %2809 = vmatprep.subr.bf16.mxu0 %v2219
    %2810 = vmatpush1.bf16.msra.mxu0 %v2218
    %2811 = vmatprep.mubr.bf16.mxu0 %v1882
    %2812 = vmatmul.mubr.bf16.gmra.mrb[0].mxu0 %v1881
    %v2813 = vpop.f32.mrb[0].mxu0
    %v2814 = vadd.f32 %v2773, %v2813
    %v2815 = vpop.f32.mrb[0].mxu0
    %v2816 = vadd.f32 %v2775, %v2815
    %v2817 = vpop.f32.mrb[0].mxu0
    %v2818 = vpop.f32.mrb[0].mxu0
    %2819 = vdwg.mxu0
    %2820 = vmatprep.subr.bf16.mxu0 %v2226
    %2821 = vmatpush1.bf16.msra.mxu0 %v2225
    %2822 = vmatprep.subr.bf16.mxu0 %v2233
    %2823 = vmatpush1.bf16.msra.mxu0 %v2232
    %2824 = vmatprep.subr.bf16.mxu0 %v2240
    %2825 = vmatpush1.bf16.msra.mxu0 %v2239
    %2826 = vmatprep.subr.bf16.mxu0 %v2247
    %2827 = vmatpush1.bf16.msra.mxu0 %v2246
    %2828 = vmatprep.subr.bf16.mxu0 %v2254
    %2829 = vmatpush1.bf16.msra.mxu0 %v2253
    %2830 = vmatprep.subr.bf16.mxu0 %v2261
    %2831 = vmatpush1.bf16.msra.mxu0 %v2260
    %2832 = vmatprep.subr.bf16.mxu0 %v2268
    %2833 = vmatpush1.bf16.msra.mxu0 %v2267
    %2834 = vmatprep.subr.bf16.mxu0 %v2275
    %2835 = vmatpush1.bf16.msra.mxu0 %v2274
    %2836 = vmatprep.subr.bf16.mxu0 %v2282
    %2837 = vmatpush1.bf16.msra.mxu0 %v2281
    %2838 = vmatprep.subr.bf16.mxu0 %v2289
    %2839 = vmatpush1.bf16.msra.mxu0 %v2288
    %2840 = vmatprep.subr.bf16.mxu0 %v2296
    %2841 = vmatpush1.bf16.msra.mxu0 %v2295
    %2842 = vmatprep.subr.bf16.mxu0 %v2303
    %2843 = vmatpush1.bf16.msra.mxu0 %v2302
    %2844 = vmatprep.subr.bf16.mxu0 %v2310
    %2845 = vmatpush1.bf16.msra.mxu0 %v2309
    %2846 = vmatprep.subr.bf16.mxu0 %v2317
    %2847 = vmatpush1.bf16.msra.mxu0 %v2316
    %2848 = vmatprep.subr.bf16.mxu0 %v2324
    %2849 = vmatpush1.bf16.msra.mxu0 %v2323
    %2850 = vmatprep.subr.bf16.mxu0 %v2331
    %2851 = vmatpush1.bf16.msra.mxu0 %v2330
    %2852 = vmatprep.mubr.bf16.mxu0 %v1884
    %2853 = vmatmul.mubr.bf16.gmra.mrb[0].mxu0 %v1883
    %v2854 = vpop.f32.mrb[0].mxu0
    %v2855 = vadd.f32 %v2814, %v2854
    %v2856 = vpop.f32.mrb[0].mxu0
    %v2857 = vadd.f32 %v2816, %v2856
    %v2858 = vpop.f32.mrb[0].mxu0
    %v2859 = vpop.f32.mrb[0].mxu0
    %2860 = vdwg.mxu0
    %2861 = vmatprep.subr.bf16.mxu0 0
    %2862 = vmatpush1.bf16.msra.mxu0 %v1891
    %2863 = vmatprep.subr.bf16.mxu0 0
    %2864 = vmatpush1.bf16.msra.mxu0 %v1898
    %2865 = vmatprep.subr.bf16.mxu0 0
    %2866 = vmatpush1.bf16.msra.mxu0 %v1905
    %2867 = vmatprep.subr.bf16.mxu0 0
    %2868 = vmatpush1.bf16.msra.mxu0 %v1912
    %2869 = vmatprep.subr.bf16.mxu0 0
    %2870 = vmatpush1.bf16.msra.mxu0 %v1919
    %2871 = vmatprep.subr.bf16.mxu0 0
    %2872 = vmatpush1.bf16.msra.mxu0 %v1926
    %2873 = vmatprep.subr.bf16.mxu0 0
    %2874 = vmatpush1.bf16.msra.mxu0 %v1933
    %2875 = vmatprep.subr.bf16.mxu0 0
    %2876 = vmatpush1.bf16.msra.mxu0 %v1940
    %2877 = vmatprep.subr.bf16.mxu0 0
    %2878 = vmatpush1.bf16.msra.mxu0 %v1947
    %2879 = vmatprep.subr.bf16.mxu0 0
    %2880 = vmatpush1.bf16.msra.mxu0 %v1954
    %2881 = vmatprep.subr.bf16.mxu0 0
    %2882 = vmatpush1.bf16.msra.mxu0 %v1961
    %2883 = vmatprep.subr.bf16.mxu0 0
    %2884 = vmatpush1.bf16.msra.mxu0 %v1968
    %2885 = vmatprep.subr.bf16.mxu0 0
    %2886 = vmatpush1.bf16.msra.mxu0 %v1975
    %2887 = vmatprep.subr.bf16.mxu0 0
    %2888 = vmatpush1.bf16.msra.mxu0 %v1982
    %2889 = vmatprep.subr.bf16.mxu0 0
    %2890 = vmatpush1.bf16.msra.mxu0 %v1989
    %2891 = vmatprep.subr.bf16.mxu0 0
    %2892 = vmatpush1.bf16.msra.mxu0 %v1996
    %2893 = vmatprep.mubr.bf16.mxu0 %v1878
    %2894 = vmatmul.mubr.bf16.gmra.mrb[0].mxu0 %v1877
    %v2895 = vpop.f32.mrb[0].mxu0
    %v2896 = vadd.f32 %v2361, %v2895
    %v2897 = vpop.f32.mrb[0].mxu0
    %v2898 = vpop.f32.mrb[0].mxu0
    %v2899 = vpop.f32.mrb[0].mxu0
    %2900 = vdwg.mxu0
    %2901 = vmatprep.subr.bf16.mxu0 0
    %2902 = vmatpush1.bf16.msra.mxu0 %v2003
    %2903 = vmatprep.subr.bf16.mxu0 0
    %2904 = vmatpush1.bf16.msra.mxu0 %v2010
    %2905 = vmatprep.subr.bf16.mxu0 0
    %2906 = vmatpush1.bf16.msra.mxu0 %v2017
    %2907 = vmatprep.subr.bf16.mxu0 0
    %2908 = vmatpush1.bf16.msra.mxu0 %v2024
    %2909 = vmatprep.subr.bf16.mxu0 0
    %2910 = vmatpush1.bf16.msra.mxu0 %v2031
    %2911 = vmatprep.subr.bf16.mxu0 0
    %2912 = vmatpush1.bf16.msra.mxu0 %v2038
    %2913 = vmatprep.subr.bf16.mxu0 0
    %2914 = vmatpush1.bf16.msra.mxu0 %v2045
    %2915 = vmatprep.subr.bf16.mxu0 0
    %2916 = vmatpush1.bf16.msra.mxu0 %v2052
    %2917 = vmatprep.subr.bf16.mxu0 0
    %2918 = vmatpush1.bf16.msra.mxu0 %v2059
    %2919 = vmatprep.subr.bf16.mxu0 0
    %2920 = vmatpush1.bf16.msra.mxu0 %v2066
    %2921 = vmatprep.subr.bf16.mxu0 0
    %2922 = vmatpush1.bf16.msra.mxu0 %v2073
    %2923 = vmatprep.subr.bf16.mxu0 0
    %2924 = vmatpush1.bf16.msra.mxu0 %v2080
    %2925 = vmatprep.subr.bf16.mxu0 0
    %2926 = vmatpush1.bf16.msra.mxu0 %v2087
    %2927 = vmatprep.subr.bf16.mxu0 0
    %2928 = vmatpush1.bf16.msra.mxu0 %v2094
    %2929 = vmatprep.subr.bf16.mxu0 0
    %2930 = vmatpush1.bf16.msra.mxu0 %v2101
    %2931 = vmatprep.subr.bf16.mxu0 0
    %2932 = vmatpush1.bf16.msra.mxu0 %v2108
    %2933 = vmatprep.mubr.bf16.mxu0 %v1880
    %2934 = vmatmul.mubr.bf16.gmra.mrb[0].mxu0 %v1879
    %v2935 = vpop.f32.mrb[0].mxu0
    %v2936 = vadd.f32 %v2896, %v2935
    %v2937 = vpop.f32.mrb[0].mxu0
    %v2938 = vpop.f32.mrb[0].mxu0
    %v2939 = vpop.f32.mrb[0].mxu0
    %2940 = vdwg.mxu0
    %2941 = vmatprep.subr.bf16.mxu0 0
    %2942 = vmatpush1.bf16.msra.mxu0 %v2115
    %2943 = vmatprep.subr.bf16.mxu0 0
    %2944 = vmatpush1.bf16.msra.mxu0 %v2122
    %2945 = vmatprep.subr.bf16.mxu0 0
    %2946 = vmatpush1.bf16.msra.mxu0 %v2129
    %2947 = vmatprep.subr.bf16.mxu0 0
    %2948 = vmatpush1.bf16.msra.mxu0 %v2136
    %2949 = vmatprep.subr.bf16.mxu0 0
    %2950 = vmatpush1.bf16.msra.mxu0 %v2143
    %2951 = vmatprep.subr.bf16.mxu0 0
    %2952 = vmatpush1.bf16.msra.mxu0 %v2150
    %2953 = vmatprep.subr.bf16.mxu0 0
    %2954 = vmatpush1.bf16.msra.mxu0 %v2157
    %2955 = vmatprep.subr.bf16.mxu0 0
    %2956 = vmatpush1.bf16.msra.mxu0 %v2164
    %2957 = vmatprep.subr.bf16.mxu0 0
    %2958 = vmatpush1.bf16.msra.mxu0 %v2171
    %2959 = vmatprep.subr.bf16.mxu0 0
    %2960 = vmatpush1.bf16.msra.mxu0 %v2178
    %2961 = vmatprep.subr.bf16.mxu0 0
    %2962 = vmatpush1.bf16.msra.mxu0 %v2185
    %2963 = vmatprep.subr.bf16.mxu0 0
    %2964 = vmatpush1.bf16.msra.mxu0 %v2192
    %2965 = vmatprep.subr.bf16.mxu0 0
    %2966 = vmatpush1.bf16.msra.mxu0 %v2199
    %2967 = vmatprep.subr.bf16.mxu0 0
    %2968 = vmatpush1.bf16.msra.mxu0 %v2206
    %2969 = vmatprep.subr.bf16.mxu0 0
    %2970 = vmatpush1.bf16.msra.mxu0 %v2213
    %2971 = vmatprep.subr.bf16.mxu0 0
    %2972 = vmatpush1.bf16.msra.mxu0 %v2220
    %2973 = vmatprep.mubr.bf16.mxu0 %v1882
    %2974 = vmatmul.mubr.bf16.gmra.mrb[0].mxu0 %v1881
    %v2975 = vpop.f32.mrb[0].mxu0
    %v2976 = vadd.f32 %v2936, %v2975
    %v2977 = vpop.f32.mrb[0].mxu0
    %v2978 = vpop.f32.mrb[0].mxu0
    %v2979 = vpop.f32.mrb[0].mxu0
    %2980 = vdwg.mxu0
    %2981 = vmatprep.subr.bf16.mxu0 0
    %2982 = vmatpush1.bf16.msra.mxu0 %v2227
    %2983 = vmatprep.subr.bf16.mxu0 0
    %2984 = vmatpush1.bf16.msra.mxu0 %v2234
    %2985 = vmatprep.subr.bf16.mxu0 0
    %2986 = vmatpush1.bf16.msra.mxu0 %v2241
    %2987 = vmatprep.subr.bf16.mxu0 0
    %2988 = vmatpush1.bf16.msra.mxu0 %v2248
    %2989 = vmatprep.subr.bf16.mxu0 0
    %2990 = vmatpush1.bf16.msra.mxu0 %v2255
    %2991 = vmatprep.subr.bf16.mxu0 0
    %2992 = vmatpush1.bf16.msra.mxu0 %v2262
    %2993 = vmatprep.subr.bf16.mxu0 0
    %2994 = vmatpush1.bf16.msra.mxu0 %v2269
    %2995 = vmatprep.subr.bf16.mxu0 0
    %2996 = vmatpush1.bf16.msra.mxu0 %v2276
    %2997 = vmatprep.subr.bf16.mxu0 0
    %2998 = vmatpush1.bf16.msra.mxu0 %v2283
    %2999 = vmatprep.subr.bf16.mxu0 0
    %3000 = vmatpush1.bf16.msra.mxu0 %v2290
    %3001 = vmatprep.subr.bf16.mxu0 0
    %3002 = vmatpush1.bf16.msra.mxu0 %v2297
    %3003 = vmatprep.subr.bf16.mxu0 0
    %3004 = vmatpush1.bf16.msra.mxu0 %v2304
    %3005 = vmatprep.subr.bf16.mxu0 0
    %3006 = vmatpush1.bf16.msra.mxu0 %v2311
    %3007 = vmatprep.subr.bf16.mxu0 0
    %3008 = vmatpush1.bf16.msra.mxu0 %v2318
    %3009 = vmatprep.subr.bf16.mxu0 0
    %3010 = vmatpush1.bf16.msra.mxu0 %v2325
    %3011 = vmatprep.subr.bf16.mxu0 0
    %3012 = vmatpush1.bf16.msra.mxu0 %v2332
    %3013 = vmatprep.mubr.bf16.mxu0 %v1884
    %3014 = vmatmul.mubr.bf16.gmra.mrb[0].mxu0 %v1883
    %v3015 = vpop.f32.mrb[0].mxu0
    %v3016 = vadd.f32 %v2976, %v3015
    %v3017 = vpop.f32.mrb[0].mxu0
    %v3018 = vpop.f32.mrb[0].mxu0
    %v3019 = vpop.f32.mrb[0].mxu0
    %3020 = vdwg.mxu0
    %v3021 = vtanh.pop %v2527
    %v3022 = vtanh.pop %v2529
    %v3023 = vtanh.pop %v2691
    %v3024 = vtanh.pop %v2693
    %v3025 = vtanh.pop %v2855
    %v3026 = vtanh.pop %v2857
    %v3027 = vtanh.pop %v3016
    %3028 = vst [vmem:[%s7] sm:$0xff] %v3021
    %3029 = vst [vmem:[%s7 + $0x8] sm:$0xff] %v3022
    %3030 = vst [vmem:[%s7 + $0x10] sm:$0xff] %v3023
    %3031 = vst [vmem:[%s7 + $0x18] sm:$0xff] %v3024
    %3032 = vst [vmem:[%s7 + $0x20] sm:$0xff] %v3025
    %3033 = vst [vmem:[%s7 + $0x28] sm:$0xff] %v3026
    %3034 = vst [vmem:[%s7 + $0x30] sm:$0xff] %v3027
    // Predicated region
    $region18: #{generator_forward.1} parent=1 // pred_check
      _
    $region19: #{generator_forward.1} parent=1 // pred_check_branch
      %3036 = sbr.rel (0) target = $region21
    $region20: #{generator_forward.1} parent=1 // pred_region
      _
    $region21: #{generator_forward.1} parent=1 // pred_fallthru
      _
    // Predicated region
    $region22: #{generator_forward.1} parent=1 // pred_check
      _
    $region23: #{generator_forward.1} parent=1 // pred_check_branch
      %3038 = sbr.rel (0) target = $region25
    $region24: #{generator_forward.1} parent=1 // pred_region
      _
    $region25: #{generator_forward.1} parent=1 // pred_fallthru
      _
    %3039 = vsyncpa [#allocation9], 1
  %3040 = vsyncmov [#allocation7]
  %s3041 = vpop.sfrf %3040
  %p3042 = scmp.eq.s32.totalorder %s3041, 0
  %p3043 = pneg %p3042
  %3045 = shalt.err (%p3043)
  %s3046 = scalar_lea.sflag [#allocation7], 1
  %3047 = vsyncmov %s3046
  %s3048 = vpop.sfrf %3047
  %p3049 = scmp.eq.s32.totalorder %s3048, 0
  %p3050 = pneg %p3049
  %3052 = shalt.err (%p3050)
  %s3053 = scalar_lea.sflag [#allocation7], 2
  %3054 = vsyncmov %s3053
  %s3055 = vpop.sfrf %3054
  %p3056 = scmp.eq.s32.totalorder %s3055, 0
  %p3057 = pneg %p3056
  %3059 = shalt.err (%p3057)
  %s3060 = scalar_lea.sflag [#allocation7], 3
  %3061 = vsyncmov %s3060
  %s3062 = vpop.sfrf %3061
  %p3063 = scmp.eq.s32.totalorder %s3062, 0
  %p3064 = pneg %p3063
  %3066 = shalt.err (%p3064)
  %s3067 = scalar_lea.sflag [#allocation7], 4
  %3068 = vsyncmov %s3067
  %s3069 = vpop.sfrf %3068
  %p3070 = scmp.eq.s32.totalorder %s3069, 0
  %p3071 = pneg %p3070
  %3073 = shalt.err (%p3071)

</llo_original>
